<compile_context>
chip_gen: v7x
topology: tpu7x:2x2x1
jax: 0.10.0
libtpu: 0.0.40
codegen_flags: <defaults>
</compile_context>

<pallas_src>
import math

import jax
import jax.numpy as jnp
from jax.experimental import pallas as pl
from jax.experimental.pallas import tpu as pltpu  # noqa: F401  (TPU backend)

# ----- small model config consistent with TransformerExpert __init__ -----
VOCAB = 100
VOCAB_PAD = 128            # embedding rows / one-hot width padded to a full lane width
D_MODEL = 32
N_HEADS = 4
HEAD_DIM = D_MODEL // N_HEADS
N_BLOCKS = 2
FF_DIM = 64
MAX_SEQ = 16
N_CLASSES = 2
N_CLASSES_PAD = 128        # classifier output padded to a lane-dense width
BATCH = 2
SEQ = 8
N_ROWS = BATCH * SEQ
LN_EPS = 1e-5

# Row layout of the coalesced small-parameter tensor (per block), plus fc_b.
R_BQKV, R_BO, R_G1, R_BE1, R_B1, R_B2, R_G2, R_BE2 = range(8)
VEC_ROWS_PER_BLOCK = 8
R_FCB = N_BLOCKS * VEC_ROWS_PER_BLOCK
VEC_ROWS = R_FCB + 1


def _layernorm(x, g, b, eps=LN_EPS):
    mu = jnp.mean(x, axis=-1, keepdims=True)
    var = jnp.mean((x - mu) ** 2, axis=-1, keepdims=True)
    return (x - mu) * jax.lax.rsqrt(var + eps) * g + b


# -------------------- fused Pallas kernel (single invocation, no grid) --------------------

def fused_forward_kernel(tok_ref, emb_ref, pe_ref, wqkv_ref, wo_ref,
                         w1_ref, w2_ref, vec_ref, fcw_ref, o_ref):
    D = D_MODEL
    vp = vec_ref[...]                                         # (VEC_ROWS, 128) f32

    # ---- embedding lookup as an exact one-hot f32 MXU matmul + positional encoding ----
    tok = tok_ref[...]                                        # (N_ROWS, 1) int32
    vocab_iota = jax.lax.broadcasted_iota(jnp.int32, (N_ROWS, VOCAB_PAD), 1)
    onehot = (vocab_iota == tok).astype(jnp.float32)          # (N_ROWS, 128)
    # emb_ref is pre-scaled by sqrt(d_model) and zero-padded to 128 rows;
    # pe_ref is the positional encoding pre-tiled over the batch.
    x = jnp.dot(onehot, emb_ref[...],
                preferred_element_type=jnp.float32) + pe_ref[...]      # (N_ROWS, D) f32

    # ---- both post-norm encoder blocks, fully unrolled ----
    for blk_i in range(N_BLOCKS):
        base = blk_i * VEC_ROWS_PER_BLOCK

        # Fused lane-dense QKV projection: one (N,32)@(32,96) bf16 MXU matmul.
        # 1/sqrt(head_dim) is already folded into the Q columns and Q bias.
        qkv = (jnp.dot(x.astype(jnp.bfloat16), wqkv_ref[blk_i],
                       preferred_element_type=jnp.float32)
               + vp[base + R_BQKV, :3 * D])                   # (N_ROWS, 96) f32
        q3 = qkv[:, 0:D].reshape(BATCH, SEQ, D)
        k3 = qkv[:, D:2 * D].reshape(BATCH, SEQ, D)
        v3 = qkv[:, 2 * D:3 * D].reshape(BATCH, SEQ, D)

        # Per-head attention (S = head_dim = 8: inherently tiny); softmax in f32.
        ctx_heads = []
        for h in range(N_HEADS):
            sl = slice(h * HEAD_DIM, (h + 1) * HEAD_DIM)
            s = jnp.einsum('bqd,bkd->bqk', q3[:, :, sl], k3[:, :, sl],
                           preferred_element_type=jnp.float32)
            s = s - jnp.max(s, axis=-1, keepdims=True)
            p = jnp.exp(s)
            p = p * pl.reciprocal(jnp.sum(p, axis=-1, keepdims=True), approx=False)
            ctx_heads.append(jnp.einsum('bqk,bkd->bqd', p, v3[:, :, sl],
                                        preferred_element_type=jnp.float32))
        ctx = jnp.concatenate(ctx_heads, axis=-1).reshape(N_ROWS, D)   # concat-of-heads

        # Lane-dense output projection: single (N,32)@(32,32) matmul.
        attn = (jnp.dot(ctx.astype(jnp.bfloat16), wo_ref[blk_i],
                        preferred_element_type=jnp.float32) + vp[base + R_BO, :D])
        h1 = _layernorm(x + attn, vp[base + R_G1, :D], vp[base + R_BE1, :D])

        # Feed-forward: (N,32)@(32,64) -> ReLU -> (N,64)@(64,32).
        ff = (jnp.dot(h1.astype(jnp.bfloat16), w1_ref[blk_i],
                      preferred_element_type=jnp.float32) + vp[base + R_B1, :FF_DIM])
        ff = jnp.maximum(ff, 0.0)
        ff = (jnp.dot(ff.astype(jnp.bfloat16), w2_ref[blk_i],
                      preferred_element_type=jnp.float32) + vp[base + R_B2, :D])
        x = _layernorm(h1 + ff, vp[base + R_G2, :D], vp[base + R_BE2, :D])

    # ---- mean pool over sequence + classifier (lane-dense padded output) ----
    pooled = jnp.mean(x.reshape(BATCH, SEQ, D), axis=1)                # (B, D)
    o_ref[...] = (jnp.dot(pooled.astype(jnp.bfloat16), fcw_ref[...],
                          preferred_element_type=jnp.float32) + vp[R_FCB, :])


# -------------------- wrapper --------------------

@jax.jit
def transformer_expert_forward(tokens, packed):
    tok2d = tokens.reshape(N_ROWS, 1).astype(jnp.int32)
    logits_pad = pl.pallas_call(
        fused_forward_kernel,
        out_shape=jax.ShapeDtypeStruct((BATCH, N_CLASSES_PAD), jnp.float32),
    )(tok2d, packed['emb'], packed['pe'], packed['wqkv'], packed['wo'],
      packed['w1'], packed['w2'], packed['vec'], packed['fcw'])
    return logits_pad[:, :N_CLASSES]


# -------------------- deterministic parameter init + packing --------------------

def _sinusoidal_pe(max_len, d_model):
    pos = jnp.arange(max_len, dtype=jnp.float32)[:, None]
    div = jnp.exp(jnp.arange(0, d_model, 2, dtype=jnp.float32)
                  * (-math.log(10000.0) / d_model))
    pe = jnp.zeros((max_len, d_model), jnp.float32)
    pe = pe.at[:, 0::2].set(jnp.sin(pos * div))
    pe = pe.at[:, 1::2].set(jnp.cos(pos * div))
    return pe


def init_params(key):
    """Standard (in_features, out_features) layout, matching the PyTorch module."""
    keys = iter(jax.random.split(key, 64))
    lin = lambda k, i, o: jax.random.normal(k, (i, o), jnp.float32) * 0.02
    vec = lambda k, n: jax.random.normal(k, (n,), jnp.float32) * 0.02
    params = {
        'embedding': jax.random.normal(next(keys), (VOCAB, D_MODEL), jnp.float32) * 0.02,
        'pos_enc': _sinusoidal_pe(MAX_SEQ, D_MODEL),
        'fc_w': lin(next(keys), D_MODEL, N_CLASSES),
        'fc_b': vec(next(keys), N_CLASSES),
        'blocks': [],
    }
    for _ in range(N_BLOCKS):
        params['blocks'].append(dict(
            wq=lin(next(keys), D_MODEL, D_MODEL), bq=vec(next(keys), D_MODEL),
            wk=lin(next(keys), D_MODEL, D_MODEL), bk=vec(next(keys), D_MODEL),
            wv=lin(next(keys), D_MODEL, D_MODEL), bv=vec(next(keys), D_MODEL),
            wo=lin(next(keys), D_MODEL, D_MODEL), bo=vec(next(keys), D_MODEL),
            g1=jnp.ones((D_MODEL,), jnp.float32), be1=jnp.zeros((D_MODEL,), jnp.float32),
            w1=lin(next(keys), D_MODEL, FF_DIM), b1=vec(next(keys), FF_DIM),
            w2=lin(next(keys), FF_DIM, D_MODEL), b2=vec(next(keys), D_MODEL),
            g2=jnp.ones((D_MODEL,), jnp.float32), be2=jnp.zeros((D_MODEL,), jnp.float32),
        ))
    return params


def _pad_lanes(v, width=128):
    v = jnp.asarray(v, jnp.float32).reshape(-1)
    return jnp.pad(v, (0, width - v.shape[0]))


def pack_params(raw):
    """Lane-dense, per-block-stacked, bf16 weight layout consumed by the fused kernel.
    Semantically identical to concat-of-heads MHA with post-norm blocks."""
    qscale = 1.0 / math.sqrt(HEAD_DIM)           # folded into Q weight + bias
    wqkv, wo, w1, w2, vec_rows = [], [], [], [], []
    for blk in raw['blocks']:
        wqkv.append(jnp.concatenate([blk['wq'] * qscale, blk['wk'], blk['wv']], axis=1))
        wo.append(blk['wo'])
        w1.append(blk['w1'])
        w2.append(blk['w2'])
        bqkv = jnp.concatenate([blk['bq'] * qscale, blk['bk'], blk['bv']])
        for row in (bqkv, blk['bo'], blk['g1'], blk['be1'],
                    blk['b1'], blk['b2'], blk['g2'], blk['be2']):
            vec_rows.append(_pad_lanes(row))
    vec_rows.append(_pad_lanes(raw['fc_b'], N_CLASSES_PAD))

    return {
        'wqkv': jnp.stack(wqkv).astype(jnp.bfloat16),        # (N_BLOCKS, D, 3D)
        'wo':   jnp.stack(wo).astype(jnp.bfloat16),          # (N_BLOCKS, D, D)
        'w1':   jnp.stack(w1).astype(jnp.bfloat16),          # (N_BLOCKS, D, FF)
        'w2':   jnp.stack(w2).astype(jnp.bfloat16),          # (N_BLOCKS, FF, D)
        'vec':  jnp.stack(vec_rows),                         # (VEC_ROWS, 128) f32
        'fcw':  jnp.pad(raw['fc_w'],
                        ((0, 0), (0, N_CLASSES_PAD - N_CLASSES))).astype(jnp.bfloat16),
        'emb':  jnp.pad(raw['embedding'] * math.sqrt(D_MODEL),
                        ((0, VOCAB_PAD - VOCAB), (0, 0))),   # (128, D) f32, pre-scaled
        'pe':   jnp.tile(raw['pos_enc'][:SEQ], (BATCH, 1)),  # (N_ROWS, D) f32
    }


# -------------------- pure-JAX reference (f32, mirrors the PyTorch module) --------------------

def reference_forward(tokens, params):
    x = params['embedding'][tokens] * math.sqrt(D_MODEL) + params['pos_enc'][:SEQ][None]
    B, S, D = x.shape
    for blk in params['blocks']:
        q = x @ blk['wq'] + blk['bq']
        k = x @ blk['wk'] + blk['bk']
        v = x @ blk['wv'] + blk['bv']
        split = lambda t: t.reshape(B, S, N_HEADS, HEAD_DIM).transpose(0, 2, 1, 3)
        qh, kh, vh = split(q), split(k), split(v)
        s = jnp.einsum('bhqd,bhkd->bhqk', qh, kh) / math.sqrt(HEAD_DIM)
        p = jax.nn.softmax(s, axis=-1)
        ctx = jnp.einsum('bhqk,bhkd->bhqd', p, vh).transpose(0, 2, 1, 3).reshape(B, S, D)
        attn = ctx @ blk['wo'] + blk['bo']
        h1 = _layernorm(x + attn, blk['g1'], blk['be1'])
        ff = jnp.maximum(h1 @ blk['w1'] + blk['b1'], 0.0) @ blk['w2'] + blk['b2']
        x = _layernorm(h1 + ff, blk['g2'], blk['be2'])
    pooled = x.mean(axis=1)
    return pooled @ params['fc_w'] + params['fc_b']


if __name__ == "__main__":
    key = jax.random.PRNGKey(0)
    k_tok, k_param = jax.random.split(key)
    tokens = jax.random.randint(k_tok, (BATCH, SEQ), 0, VOCAB, dtype=jnp.int32)
    params = init_params(k_param)
    packed = pack_params(params)

    logits = transformer_expert_forward(tokens, packed)
    jax.block_until_ready(logits)

    assert logits.shape == (BATCH, N_CLASSES)
    assert bool(jnp.all(jnp.isfinite(logits)))
    ref = reference_forward(tokens, params)
    # bf16 matmul weights vs f32 reference -> loose tolerance (per review notes).
    assert float(jnp.max(jnp.abs(logits - ref))) < 5e-2
    print("KERNEL_OK")
</pallas_src>

<mosaic_0001>
module attributes {stable_mosaic.version = 11 : i64} {
  func.func @fused_forward_kernel(%arg0: memref<16x1xi32, #tpu.memory_space<vmem>>, %arg1: memref<128x32xf32, #tpu.memory_space<vmem>>, %arg2: memref<16x32xf32, #tpu.memory_space<vmem>>, %arg3: memref<2x32x96xbf16, #tpu.memory_space<vmem>>, %arg4: memref<2x32x32xbf16, #tpu.memory_space<vmem>>, %arg5: memref<2x32x64xbf16, #tpu.memory_space<vmem>>, %arg6: memref<2x64x32xbf16, #tpu.memory_space<vmem>>, %arg7: memref<17x128xf32, #tpu.memory_space<vmem>>, %arg8: memref<32x128xbf16, #tpu.memory_space<vmem>>, %arg9: memref<2x128xf32, #tpu.memory_space<vmem>>) attributes {dimension_semantics = [], scalar_prefetch = 0 : i64, scratch_operands = 0 : i64, tpu.core_type = #tpu.core_type<tc>} {
    %c0 = arith.constant 0 : index
    %c0_0 = arith.constant 0 : index
    %0 = vector.load %arg7[%c0, %c0_0] : memref<17x128xf32, #tpu.memory_space<vmem>>, vector<17x128xf32>
    %c0_1 = arith.constant 0 : index
    %c0_2 = arith.constant 0 : index
    %1 = vector.load %arg0[%c0_1, %c0_2] : memref<16x1xi32, #tpu.memory_space<vmem>>, vector<16x1xi32>
    %2 = tpu.iota {dimensions = array<i32: 1>} : vector<16x128xi32>
    %3 = vector.broadcast %1 : vector<16x1xi32> to vector<16x128xi32>
    %4 = arith.cmpi eq, %2, %3 : vector<16x128xi32>
    %5 = arith.extui %4 : vector<16x128xi1> to vector<16x128xi32>
    %6 = arith.sitofp %5 : vector<16x128xi32> to vector<16x128xf32>
    %c0_3 = arith.constant 0 : index
    %c0_4 = arith.constant 0 : index
    %7 = vector.load %arg1[%c0_3, %c0_4] : memref<128x32xf32, #tpu.memory_space<vmem>>, vector<128x32xf32>
    %cst = arith.constant dense<0.000000e+00> : vector<16x32xf32>
    %8 = tpu.matmul %6, %7, %cst {dimension_numbers = #tpu.dot_dimension_numbers<[1], [0], [0], [1], [0, 0, 1, 1], [], []>} : vector<16x128xf32>, vector<128x32xf32>, vector<16x32xf32> -> vector<16x32xf32>
    %c0_5 = arith.constant 0 : index
    %c0_6 = arith.constant 0 : index
    %9 = vector.load %arg2[%c0_5, %c0_6] : memref<16x32xf32, #tpu.memory_space<vmem>>, vector<16x32xf32>
    %10 = arith.addf %8, %9 : vector<16x32xf32>
    %11 = arith.truncf %10 : vector<16x32xf32> to vector<16x32xbf16>
    %c0_7 = arith.constant 0 : index
    %c0_8 = arith.constant 0 : index
    %c0_9 = arith.constant 0 : index
    %12 = vector.load %arg3[%c0_7, %c0_8, %c0_9] : memref<2x32x96xbf16, #tpu.memory_space<vmem>>, vector<1x32x96xbf16>
    %13 = vector.shape_cast %12 : vector<1x32x96xbf16> to vector<32x96xbf16>
    %cst_10 = arith.constant dense<0.000000e+00> : vector<16x96xf32>
    %14 = tpu.matmul %11, %13, %cst_10 {dimension_numbers = #tpu.dot_dimension_numbers<[1], [0], [0], [1], [0, 0, 1, 1], [], []>} : vector<16x32xbf16>, vector<32x96xbf16>, vector<16x96xf32> -> vector<16x96xf32>
    %15 = vector.extract_strided_slice %0 {offsets = [0, 0], sizes = [1, 96], strides = [1, 1]} : vector<17x128xf32> to vector<1x96xf32>
    %16 = vector.shape_cast %15 : vector<1x96xf32> to vector<96xf32>
    %17 = vector.shape_cast %16 : vector<96xf32> to vector<1x96xf32>
    %18 = vector.broadcast %17 : vector<1x96xf32> to vector<16x96xf32>
    %19 = arith.addf %14, %18 : vector<16x96xf32>
    %20 = vector.extract_strided_slice %19 {offsets = [0, 0], sizes = [16, 32], strides = [1, 1]} : vector<16x96xf32> to vector<16x32xf32>
    %21 = vector.shape_cast %20 : vector<16x32xf32> to vector<2x8x32xf32>
    %22 = vector.extract_strided_slice %19 {offsets = [0, 32], sizes = [16, 32], strides = [1, 1]} : vector<16x96xf32> to vector<16x32xf32>
    %23 = vector.shape_cast %22 : vector<16x32xf32> to vector<2x8x32xf32>
    %24 = vector.extract_strided_slice %19 {offsets = [0, 64], sizes = [16, 32], strides = [1, 1]} : vector<16x96xf32> to vector<16x32xf32>
    %25 = vector.shape_cast %24 : vector<16x32xf32> to vector<2x8x32xf32>
    %26 = vector.extract_strided_slice %21 {offsets = [0, 0, 0], sizes = [2, 8, 8], strides = [1, 1, 1]} : vector<2x8x32xf32> to vector<2x8x8xf32>
    %27 = vector.extract_strided_slice %23 {offsets = [0, 0, 0], sizes = [2, 8, 8], strides = [1, 1, 1]} : vector<2x8x32xf32> to vector<2x8x8xf32>
    "tpu.trace_start"() <{level = 10 : i32, message = "bqd,bkd->bqk"}> : () -> ()
    %cst_11 = arith.constant dense<0.000000e+00> : vector<2x8x8xf32>
    %28 = tpu.matmul %26, %27, %cst_11 {dimension_numbers = #tpu.dot_dimension_numbers<[2], [2], [1], [1], [0, 0, 0, 1, 1, 1], [0], [0]>} : vector<2x8x8xf32>, vector<2x8x8xf32>, vector<2x8x8xf32> -> vector<2x8x8xf32>
    "tpu.trace_stop"() : () -> ()
    %cst_12 = arith.constant dense<0xFF800000> : vector<2x8xf32>
    %29 = vector.multi_reduction <maximumf>, %28, %cst_12 [2] : vector<2x8x8xf32> to vector<2x8xf32>
    %30 = vector.shape_cast %29 : vector<2x8xf32> to vector<2x8x1xf32>
    %31 = vector.broadcast %30 : vector<2x8x1xf32> to vector<2x8x8xf32>
    %32 = arith.subf %28, %31 : vector<2x8x8xf32>
    %33 = math.exp %32 : vector<2x8x8xf32>
    %cst_13 = arith.constant dense<0.000000e+00> : vector<2x8xf32>
    %34 = vector.multi_reduction <add>, %33, %cst_13 [2] : vector<2x8x8xf32> to vector<2x8xf32>
    %35 = vector.shape_cast %34 : vector<2x8xf32> to vector<2x8x1xf32>
    %36 = tpu.reciprocal %35 : vector<2x8x1xf32> -> vector<2x8x1xf32>
    %37 = vector.broadcast %36 : vector<2x8x1xf32> to vector<2x8x8xf32>
    %38 = arith.mulf %33, %37 : vector<2x8x8xf32>
    %39 = vector.extract_strided_slice %25 {offsets = [0, 0, 0], sizes = [2, 8, 8], strides = [1, 1, 1]} : vector<2x8x32xf32> to vector<2x8x8xf32>
    "tpu.trace_start"() <{level = 10 : i32, message = "bqk,bkd->bqd"}> : () -> ()
    %cst_14 = arith.constant dense<0.000000e+00> : vector<2x8x8xf32>
    %40 = tpu.matmul %38, %39, %cst_14 {dimension_numbers = #tpu.dot_dimension_numbers<[2], [1], [1], [2], [0, 0, 0, 1, 1, 2], [0], [0]>} : vector<2x8x8xf32>, vector<2x8x8xf32>, vector<2x8x8xf32> -> vector<2x8x8xf32>
    "tpu.trace_stop"() : () -> ()
    %41 = vector.extract_strided_slice %21 {offsets = [0, 0, 8], sizes = [2, 8, 8], strides = [1, 1, 1]} : vector<2x8x32xf32> to vector<2x8x8xf32>
    %42 = vector.extract_strided_slice %23 {offsets = [0, 0, 8], sizes = [2, 8, 8], strides = [1, 1, 1]} : vector<2x8x32xf32> to vector<2x8x8xf32>
    "tpu.trace_start"() <{level = 10 : i32, message = "bqd,bkd->bqk"}> : () -> ()
    %cst_15 = arith.constant dense<0.000000e+00> : vector<2x8x8xf32>
    %43 = tpu.matmul %41, %42, %cst_15 {dimension_numbers = #tpu.dot_dimension_numbers<[2], [2], [1], [1], [0, 0, 0, 1, 1, 1], [0], [0]>} : vector<2x8x8xf32>, vector<2x8x8xf32>, vector<2x8x8xf32> -> vector<2x8x8xf32>
    "tpu.trace_stop"() : () -> ()
    %cst_16 = arith.constant dense<0xFF800000> : vector<2x8xf32>
    %44 = vector.multi_reduction <maximumf>, %43, %cst_16 [2] : vector<2x8x8xf32> to vector<2x8xf32>
    %45 = vector.shape_cast %44 : vector<2x8xf32> to vector<2x8x1xf32>
    %46 = vector.broadcast %45 : vector<2x8x1xf32> to vector<2x8x8xf32>
    %47 = arith.subf %43, %46 : vector<2x8x8xf32>
    %48 = math.exp %47 : vector<2x8x8xf32>
    %cst_17 = arith.constant dense<0.000000e+00> : vector<2x8xf32>
    %49 = vector.multi_reduction <add>, %48, %cst_17 [2] : vector<2x8x8xf32> to vector<2x8xf32>
    %50 = vector.shape_cast %49 : vector<2x8xf32> to vector<2x8x1xf32>
    %51 = tpu.reciprocal %50 : vector<2x8x1xf32> -> vector<2x8x1xf32>
    %52 = vector.broadcast %51 : vector<2x8x1xf32> to vector<2x8x8xf32>
    %53 = arith.mulf %48, %52 : vector<2x8x8xf32>
    %54 = vector.extract_strided_slice %25 {offsets = [0, 0, 8], sizes = [2, 8, 8], strides = [1, 1, 1]} : vector<2x8x32xf32> to vector<2x8x8xf32>
    "tpu.trace_start"() <{level = 10 : i32, message = "bqk,bkd->bqd"}> : () -> ()
    %cst_18 = arith.constant dense<0.000000e+00> : vector<2x8x8xf32>
    %55 = tpu.matmul %53, %54, %cst_18 {dimension_numbers = #tpu.dot_dimension_numbers<[2], [1], [1], [2], [0, 0, 0, 1, 1, 2], [0], [0]>} : vector<2x8x8xf32>, vector<2x8x8xf32>, vector<2x8x8xf32> -> vector<2x8x8xf32>
    "tpu.trace_stop"() : () -> ()
    %56 = vector.extract_strided_slice %21 {offsets = [0, 0, 16], sizes = [2, 8, 8], strides = [1, 1, 1]} : vector<2x8x32xf32> to vector<2x8x8xf32>
    %57 = vector.extract_strided_slice %23 {offsets = [0, 0, 16], sizes = [2, 8, 8], strides = [1, 1, 1]} : vector<2x8x32xf32> to vector<2x8x8xf32>
    "tpu.trace_start"() <{level = 10 : i32, message = "bqd,bkd->bqk"}> : () -> ()
    %cst_19 = arith.constant dense<0.000000e+00> : vector<2x8x8xf32>
    %58 = tpu.matmul %56, %57, %cst_19 {dimension_numbers = #tpu.dot_dimension_numbers<[2], [2], [1], [1], [0, 0, 0, 1, 1, 1], [0], [0]>} : vector<2x8x8xf32>, vector<2x8x8xf32>, vector<2x8x8xf32> -> vector<2x8x8xf32>
    "tpu.trace_stop"() : () -> ()
    %cst_20 = arith.constant dense<0xFF800000> : vector<2x8xf32>
    %59 = vector.multi_reduction <maximumf>, %58, %cst_20 [2] : vector<2x8x8xf32> to vector<2x8xf32>
    %60 = vector.shape_cast %59 : vector<2x8xf32> to vector<2x8x1xf32>
    %61 = vector.broadcast %60 : vector<2x8x1xf32> to vector<2x8x8xf32>
    %62 = arith.subf %58, %61 : vector<2x8x8xf32>
    %63 = math.exp %62 : vector<2x8x8xf32>
    %cst_21 = arith.constant dense<0.000000e+00> : vector<2x8xf32>
    %64 = vector.multi_reduction <add>, %63, %cst_21 [2] : vector<2x8x8xf32> to vector<2x8xf32>
    %65 = vector.shape_cast %64 : vector<2x8xf32> to vector<2x8x1xf32>
    %66 = tpu.reciprocal %65 : vector<2x8x1xf32> -> vector<2x8x1xf32>
    %67 = vector.broadcast %66 : vector<2x8x1xf32> to vector<2x8x8xf32>
    %68 = arith.mulf %63, %67 : vector<2x8x8xf32>
    %69 = vector.extract_strided_slice %25 {offsets = [0, 0, 16], sizes = [2, 8, 8], strides = [1, 1, 1]} : vector<2x8x32xf32> to vector<2x8x8xf32>
    "tpu.trace_start"() <{level = 10 : i32, message = "bqk,bkd->bqd"}> : () -> ()
    %cst_22 = arith.constant dense<0.000000e+00> : vector<2x8x8xf32>
    %70 = tpu.matmul %68, %69, %cst_22 {dimension_numbers = #tpu.dot_dimension_numbers<[2], [1], [1], [2], [0, 0, 0, 1, 1, 2], [0], [0]>} : vector<2x8x8xf32>, vector<2x8x8xf32>, vector<2x8x8xf32> -> vector<2x8x8xf32>
    "tpu.trace_stop"() : () -> ()
    %71 = vector.extract_strided_slice %21 {offsets = [0, 0, 24], sizes = [2, 8, 8], strides = [1, 1, 1]} : vector<2x8x32xf32> to vector<2x8x8xf32>
    %72 = vector.extract_strided_slice %23 {offsets = [0, 0, 24], sizes = [2, 8, 8], strides = [1, 1, 1]} : vector<2x8x32xf32> to vector<2x8x8xf32>
    "tpu.trace_start"() <{level = 10 : i32, message = "bqd,bkd->bqk"}> : () -> ()
    %cst_23 = arith.constant dense<0.000000e+00> : vector<2x8x8xf32>
    %73 = tpu.matmul %71, %72, %cst_23 {dimension_numbers = #tpu.dot_dimension_numbers<[2], [2], [1], [1], [0, 0, 0, 1, 1, 1], [0], [0]>} : vector<2x8x8xf32>, vector<2x8x8xf32>, vector<2x8x8xf32> -> vector<2x8x8xf32>
    "tpu.trace_stop"() : () -> ()
    %cst_24 = arith.constant dense<0xFF800000> : vector<2x8xf32>
    %74 = vector.multi_reduction <maximumf>, %73, %cst_24 [2] : vector<2x8x8xf32> to vector<2x8xf32>
    %75 = vector.shape_cast %74 : vector<2x8xf32> to vector<2x8x1xf32>
    %76 = vector.broadcast %75 : vector<2x8x1xf32> to vector<2x8x8xf32>
    %77 = arith.subf %73, %76 : vector<2x8x8xf32>
    %78 = math.exp %77 : vector<2x8x8xf32>
    %cst_25 = arith.constant dense<0.000000e+00> : vector<2x8xf32>
    %79 = vector.multi_reduction <add>, %78, %cst_25 [2] : vector<2x8x8xf32> to vector<2x8xf32>
    %80 = vector.shape_cast %79 : vector<2x8xf32> to vector<2x8x1xf32>
    %81 = tpu.reciprocal %80 : vector<2x8x1xf32> -> vector<2x8x1xf32>
    %82 = vector.broadcast %81 : vector<2x8x1xf32> to vector<2x8x8xf32>
    %83 = arith.mulf %78, %82 : vector<2x8x8xf32>
    %84 = vector.extract_strided_slice %25 {offsets = [0, 0, 24], sizes = [2, 8, 8], strides = [1, 1, 1]} : vector<2x8x32xf32> to vector<2x8x8xf32>
    "tpu.trace_start"() <{level = 10 : i32, message = "bqk,bkd->bqd"}> : () -> ()
    %cst_26 = arith.constant dense<0.000000e+00> : vector<2x8x8xf32>
    %85 = tpu.matmul %83, %84, %cst_26 {dimension_numbers = #tpu.dot_dimension_numbers<[2], [1], [1], [2], [0, 0, 0, 1, 1, 2], [0], [0]>} : vector<2x8x8xf32>, vector<2x8x8xf32>, vector<2x8x8xf32> -> vector<2x8x8xf32>
    "tpu.trace_stop"() : () -> ()
    %86 = tpu.concatenate %40, %55, %70, %85 in 2 : vector<2x8x8xf32>, vector<2x8x8xf32>, vector<2x8x8xf32>, vector<2x8x8xf32> -> vector<2x8x32xf32>
    %87 = vector.shape_cast %86 : vector<2x8x32xf32> to vector<16x32xf32>
    %88 = arith.truncf %87 : vector<16x32xf32> to vector<16x32xbf16>
    %c0_27 = arith.constant 0 : index
    %c0_28 = arith.constant 0 : index
    %c0_29 = arith.constant 0 : index
    %89 = vector.load %arg4[%c0_27, %c0_28, %c0_29] : memref<2x32x32xbf16, #tpu.memory_space<vmem>>, vector<1x32x32xbf16>
    %90 = vector.shape_cast %89 : vector<1x32x32xbf16> to vector<32x32xbf16>
    %cst_30 = arith.constant dense<0.000000e+00> : vector<16x32xf32>
    %91 = tpu.matmul %88, %90, %cst_30 {dimension_numbers = #tpu.dot_dimension_numbers<[1], [0], [0], [1], [0, 0, 1, 1], [], []>} : vector<16x32xbf16>, vector<32x32xbf16>, vector<16x32xf32> -> vector<16x32xf32>
    %92 = vector.extract_strided_slice %0 {offsets = [1, 0], sizes = [1, 32], strides = [1, 1]} : vector<17x128xf32> to vector<1x32xf32>
    %93 = vector.shape_cast %92 : vector<1x32xf32> to vector<32xf32>
    %94 = vector.shape_cast %93 : vector<32xf32> to vector<1x32xf32>
    %95 = vector.broadcast %94 : vector<1x32xf32> to vector<16x32xf32>
    %96 = arith.addf %91, %95 : vector<16x32xf32>
    %97 = arith.addf %10, %96 : vector<16x32xf32>
    %98 = vector.extract_strided_slice %0 {offsets = [2, 0], sizes = [1, 32], strides = [1, 1]} : vector<17x128xf32> to vector<1x32xf32>
    %99 = vector.shape_cast %98 : vector<1x32xf32> to vector<32xf32>
    %100 = vector.extract_strided_slice %0 {offsets = [3, 0], sizes = [1, 32], strides = [1, 1]} : vector<17x128xf32> to vector<1x32xf32>
    %101 = vector.shape_cast %100 : vector<1x32xf32> to vector<32xf32>
    %cst_31 = arith.constant dense<0.000000e+00> : vector<16xf32>
    %102 = vector.multi_reduction <add>, %97, %cst_31 [1] : vector<16x32xf32> to vector<16xf32>
    %103 = vector.shape_cast %102 : vector<16xf32> to vector<16x1xf32>
    %cst_32 = arith.constant 3.200000e+01 : f32
    %104 = vector.broadcast %cst_32 : f32 to vector<16x1xf32>
    %105 = arith.divf %103, %104 : vector<16x1xf32>
    %106 = vector.broadcast %105 : vector<16x1xf32> to vector<16x32xf32>
    %107 = arith.subf %97, %106 : vector<16x32xf32>
    %108 = arith.mulf %107, %107 : vector<16x32xf32>
    %cst_33 = arith.constant dense<0.000000e+00> : vector<16xf32>
    %109 = vector.multi_reduction <add>, %108, %cst_33 [1] : vector<16x32xf32> to vector<16xf32>
    %110 = vector.shape_cast %109 : vector<16xf32> to vector<16x1xf32>
    %cst_34 = arith.constant 3.200000e+01 : f32
    %111 = vector.broadcast %cst_34 : f32 to vector<16x1xf32>
    %112 = arith.divf %110, %111 : vector<16x1xf32>
    %113 = vector.broadcast %105 : vector<16x1xf32> to vector<16x32xf32>
    %114 = arith.subf %97, %113 : vector<16x32xf32>
    %cst_35 = arith.constant 9.99999974E-6 : f32
    %115 = vector.broadcast %cst_35 : f32 to vector<16x1xf32>
    %116 = arith.addf %112, %115 : vector<16x1xf32>
    %117 = math.rsqrt %116 : vector<16x1xf32>
    %118 = vector.broadcast %117 : vector<16x1xf32> to vector<16x32xf32>
    %119 = arith.mulf %114, %118 : vector<16x32xf32>
    %120 = vector.shape_cast %99 : vector<32xf32> to vector<1x32xf32>
    %121 = vector.broadcast %120 : vector<1x32xf32> to vector<16x32xf32>
    %122 = arith.mulf %119, %121 : vector<16x32xf32>
    %123 = vector.shape_cast %101 : vector<32xf32> to vector<1x32xf32>
    %124 = vector.broadcast %123 : vector<1x32xf32> to vector<16x32xf32>
    %125 = arith.addf %122, %124 : vector<16x32xf32>
    %126 = arith.truncf %125 : vector<16x32xf32> to vector<16x32xbf16>
    %c0_36 = arith.constant 0 : index
    %c0_37 = arith.constant 0 : index
    %c0_38 = arith.constant 0 : index
    %127 = vector.load %arg5[%c0_36, %c0_37, %c0_38] : memref<2x32x64xbf16, #tpu.memory_space<vmem>>, vector<1x32x64xbf16>
    %128 = vector.shape_cast %127 : vector<1x32x64xbf16> to vector<32x64xbf16>
    %cst_39 = arith.constant dense<0.000000e+00> : vector<16x64xf32>
    %129 = tpu.matmul %126, %128, %cst_39 {dimension_numbers = #tpu.dot_dimension_numbers<[1], [0], [0], [1], [0, 0, 1, 1], [], []>} : vector<16x32xbf16>, vector<32x64xbf16>, vector<16x64xf32> -> vector<16x64xf32>
    %130 = vector.extract_strided_slice %0 {offsets = [4, 0], sizes = [1, 64], strides = [1, 1]} : vector<17x128xf32> to vector<1x64xf32>
    %131 = vector.shape_cast %130 : vector<1x64xf32> to vector<64xf32>
    %132 = vector.shape_cast %131 : vector<64xf32> to vector<1x64xf32>
    %133 = vector.broadcast %132 : vector<1x64xf32> to vector<16x64xf32>
    %134 = arith.addf %129, %133 : vector<16x64xf32>
    %cst_40 = arith.constant 0.000000e+00 : f32
    %135 = vector.broadcast %cst_40 : f32 to vector<16x64xf32>
    %136 = arith.maximumf %134, %135 : vector<16x64xf32>
    %137 = arith.truncf %136 : vector<16x64xf32> to vector<16x64xbf16>
    %c0_41 = arith.constant 0 : index
    %c0_42 = arith.constant 0 : index
    %c0_43 = arith.constant 0 : index
    %138 = vector.load %arg6[%c0_41, %c0_42, %c0_43] : memref<2x64x32xbf16, #tpu.memory_space<vmem>>, vector<1x64x32xbf16>
    %139 = vector.shape_cast %138 : vector<1x64x32xbf16> to vector<64x32xbf16>
    %cst_44 = arith.constant dense<0.000000e+00> : vector<16x32xf32>
    %140 = tpu.matmul %137, %139, %cst_44 {dimension_numbers = #tpu.dot_dimension_numbers<[1], [0], [0], [1], [0, 0, 1, 1], [], []>} : vector<16x64xbf16>, vector<64x32xbf16>, vector<16x32xf32> -> vector<16x32xf32>
    %141 = vector.extract_strided_slice %0 {offsets = [5, 0], sizes = [1, 32], strides = [1, 1]} : vector<17x128xf32> to vector<1x32xf32>
    %142 = vector.shape_cast %141 : vector<1x32xf32> to vector<32xf32>
    %143 = vector.shape_cast %142 : vector<32xf32> to vector<1x32xf32>
    %144 = vector.broadcast %143 : vector<1x32xf32> to vector<16x32xf32>
    %145 = arith.addf %140, %144 : vector<16x32xf32>
    %146 = arith.addf %125, %145 : vector<16x32xf32>
    %147 = vector.extract_strided_slice %0 {offsets = [6, 0], sizes = [1, 32], strides = [1, 1]} : vector<17x128xf32> to vector<1x32xf32>
    %148 = vector.shape_cast %147 : vector<1x32xf32> to vector<32xf32>
    %149 = vector.extract_strided_slice %0 {offsets = [7, 0], sizes = [1, 32], strides = [1, 1]} : vector<17x128xf32> to vector<1x32xf32>
    %150 = vector.shape_cast %149 : vector<1x32xf32> to vector<32xf32>
    %cst_45 = arith.constant dense<0.000000e+00> : vector<16xf32>
    %151 = vector.multi_reduction <add>, %146, %cst_45 [1] : vector<16x32xf32> to vector<16xf32>
    %152 = vector.shape_cast %151 : vector<16xf32> to vector<16x1xf32>
    %cst_46 = arith.constant 3.200000e+01 : f32
    %153 = vector.broadcast %cst_46 : f32 to vector<16x1xf32>
    %154 = arith.divf %152, %153 : vector<16x1xf32>
    %155 = vector.broadcast %154 : vector<16x1xf32> to vector<16x32xf32>
    %156 = arith.subf %146, %155 : vector<16x32xf32>
    %157 = arith.mulf %156, %156 : vector<16x32xf32>
    %cst_47 = arith.constant dense<0.000000e+00> : vector<16xf32>
    %158 = vector.multi_reduction <add>, %157, %cst_47 [1] : vector<16x32xf32> to vector<16xf32>
    %159 = vector.shape_cast %158 : vector<16xf32> to vector<16x1xf32>
    %cst_48 = arith.constant 3.200000e+01 : f32
    %160 = vector.broadcast %cst_48 : f32 to vector<16x1xf32>
    %161 = arith.divf %159, %160 : vector<16x1xf32>
    %162 = vector.broadcast %154 : vector<16x1xf32> to vector<16x32xf32>
    %163 = arith.subf %146, %162 : vector<16x32xf32>
    %cst_49 = arith.constant 9.99999974E-6 : f32
    %164 = vector.broadcast %cst_49 : f32 to vector<16x1xf32>
    %165 = arith.addf %161, %164 : vector<16x1xf32>
    %166 = math.rsqrt %165 : vector<16x1xf32>
    %167 = vector.broadcast %166 : vector<16x1xf32> to vector<16x32xf32>
    %168 = arith.mulf %163, %167 : vector<16x32xf32>
    %169 = vector.shape_cast %148 : vector<32xf32> to vector<1x32xf32>
    %170 = vector.broadcast %169 : vector<1x32xf32> to vector<16x32xf32>
    %171 = arith.mulf %168, %170 : vector<16x32xf32>
    %172 = vector.shape_cast %150 : vector<32xf32> to vector<1x32xf32>
    %173 = vector.broadcast %172 : vector<1x32xf32> to vector<16x32xf32>
    %174 = arith.addf %171, %173 : vector<16x32xf32>
    %175 = arith.truncf %174 : vector<16x32xf32> to vector<16x32xbf16>
    %c1 = arith.constant 1 : index
    %c0_50 = arith.constant 0 : index
    %c0_51 = arith.constant 0 : index
    %176 = vector.load %arg3[%c1, %c0_50, %c0_51] : memref<2x32x96xbf16, #tpu.memory_space<vmem>>, vector<1x32x96xbf16>
    %177 = vector.shape_cast %176 : vector<1x32x96xbf16> to vector<32x96xbf16>
    %cst_52 = arith.constant dense<0.000000e+00> : vector<16x96xf32>
    %178 = tpu.matmul %175, %177, %cst_52 {dimension_numbers = #tpu.dot_dimension_numbers<[1], [0], [0], [1], [0, 0, 1, 1], [], []>} : vector<16x32xbf16>, vector<32x96xbf16>, vector<16x96xf32> -> vector<16x96xf32>
    %179 = vector.extract_strided_slice %0 {offsets = [8, 0], sizes = [1, 96], strides = [1, 1]} : vector<17x128xf32> to vector<1x96xf32>
    %180 = vector.shape_cast %179 : vector<1x96xf32> to vector<96xf32>
    %181 = vector.shape_cast %180 : vector<96xf32> to vector<1x96xf32>
    %182 = vector.broadcast %181 : vector<1x96xf32> to vector<16x96xf32>
    %183 = arith.addf %178, %182 : vector<16x96xf32>
    %184 = vector.extract_strided_slice %183 {offsets = [0, 0], sizes = [16, 32], strides = [1, 1]} : vector<16x96xf32> to vector<16x32xf32>
    %185 = vector.shape_cast %184 : vector<16x32xf32> to vector<2x8x32xf32>
    %186 = vector.extract_strided_slice %183 {offsets = [0, 32], sizes = [16, 32], strides = [1, 1]} : vector<16x96xf32> to vector<16x32xf32>
    %187 = vector.shape_cast %186 : vector<16x32xf32> to vector<2x8x32xf32>
    %188 = vector.extract_strided_slice %183 {offsets = [0, 64], sizes = [16, 32], strides = [1, 1]} : vector<16x96xf32> to vector<16x32xf32>
    %189 = vector.shape_cast %188 : vector<16x32xf32> to vector<2x8x32xf32>
    %190 = vector.extract_strided_slice %185 {offsets = [0, 0, 0], sizes = [2, 8, 8], strides = [1, 1, 1]} : vector<2x8x32xf32> to vector<2x8x8xf32>
    %191 = vector.extract_strided_slice %187 {offsets = [0, 0, 0], sizes = [2, 8, 8], strides = [1, 1, 1]} : vector<2x8x32xf32> to vector<2x8x8xf32>
    "tpu.trace_start"() <{level = 10 : i32, message = "bqd,bkd->bqk"}> : () -> ()
    %cst_53 = arith.constant dense<0.000000e+00> : vector<2x8x8xf32>
    %192 = tpu.matmul %190, %191, %cst_53 {dimension_numbers = #tpu.dot_dimension_numbers<[2], [2], [1], [1], [0, 0, 0, 1, 1, 1], [0], [0]>} : vector<2x8x8xf32>, vector<2x8x8xf32>, vector<2x8x8xf32> -> vector<2x8x8xf32>
    "tpu.trace_stop"() : () -> ()
    %cst_54 = arith.constant dense<0xFF800000> : vector<2x8xf32>
    %193 = vector.multi_reduction <maximumf>, %192, %cst_54 [2] : vector<2x8x8xf32> to vector<2x8xf32>
    %194 = vector.shape_cast %193 : vector<2x8xf32> to vector<2x8x1xf32>
    %195 = vector.broadcast %194 : vector<2x8x1xf32> to vector<2x8x8xf32>
    %196 = arith.subf %192, %195 : vector<2x8x8xf32>
    %197 = math.exp %196 : vector<2x8x8xf32>
    %cst_55 = arith.constant dense<0.000000e+00> : vector<2x8xf32>
    %198 = vector.multi_reduction <add>, %197, %cst_55 [2] : vector<2x8x8xf32> to vector<2x8xf32>
    %199 = vector.shape_cast %198 : vector<2x8xf32> to vector<2x8x1xf32>
    %200 = tpu.reciprocal %199 : vector<2x8x1xf32> -> vector<2x8x1xf32>
    %201 = vector.broadcast %200 : vector<2x8x1xf32> to vector<2x8x8xf32>
    %202 = arith.mulf %197, %201 : vector<2x8x8xf32>
    %203 = vector.extract_strided_slice %189 {offsets = [0, 0, 0], sizes = [2, 8, 8], strides = [1, 1, 1]} : vector<2x8x32xf32> to vector<2x8x8xf32>
    "tpu.trace_start"() <{level = 10 : i32, message = "bqk,bkd->bqd"}> : () -> ()
    %cst_56 = arith.constant dense<0.000000e+00> : vector<2x8x8xf32>
    %204 = tpu.matmul %202, %203, %cst_56 {dimension_numbers = #tpu.dot_dimension_numbers<[2], [1], [1], [2], [0, 0, 0, 1, 1, 2], [0], [0]>} : vector<2x8x8xf32>, vector<2x8x8xf32>, vector<2x8x8xf32> -> vector<2x8x8xf32>
    "tpu.trace_stop"() : () -> ()
    %205 = vector.extract_strided_slice %185 {offsets = [0, 0, 8], sizes = [2, 8, 8], strides = [1, 1, 1]} : vector<2x8x32xf32> to vector<2x8x8xf32>
    %206 = vector.extract_strided_slice %187 {offsets = [0, 0, 8], sizes = [2, 8, 8], strides = [1, 1, 1]} : vector<2x8x32xf32> to vector<2x8x8xf32>
    "tpu.trace_start"() <{level = 10 : i32, message = "bqd,bkd->bqk"}> : () -> ()
    %cst_57 = arith.constant dense<0.000000e+00> : vector<2x8x8xf32>
    %207 = tpu.matmul %205, %206, %cst_57 {dimension_numbers = #tpu.dot_dimension_numbers<[2], [2], [1], [1], [0, 0, 0, 1, 1, 1], [0], [0]>} : vector<2x8x8xf32>, vector<2x8x8xf32>, vector<2x8x8xf32> -> vector<2x8x8xf32>
    "tpu.trace_stop"() : () -> ()
    %cst_58 = arith.constant dense<0xFF800000> : vector<2x8xf32>
    %208 = vector.multi_reduction <maximumf>, %207, %cst_58 [2] : vector<2x8x8xf32> to vector<2x8xf32>
    %209 = vector.shape_cast %208 : vector<2x8xf32> to vector<2x8x1xf32>
    %210 = vector.broadcast %209 : vector<2x8x1xf32> to vector<2x8x8xf32>
    %211 = arith.subf %207, %210 : vector<2x8x8xf32>
    %212 = math.exp %211 : vector<2x8x8xf32>
    %cst_59 = arith.constant dense<0.000000e+00> : vector<2x8xf32>
    %213 = vector.multi_reduction <add>, %212, %cst_59 [2] : vector<2x8x8xf32> to vector<2x8xf32>
    %214 = vector.shape_cast %213 : vector<2x8xf32> to vector<2x8x1xf32>
    %215 = tpu.reciprocal %214 : vector<2x8x1xf32> -> vector<2x8x1xf32>
    %216 = vector.broadcast %215 : vector<2x8x1xf32> to vector<2x8x8xf32>
    %217 = arith.mulf %212, %216 : vector<2x8x8xf32>
    %218 = vector.extract_strided_slice %189 {offsets = [0, 0, 8], sizes = [2, 8, 8], strides = [1, 1, 1]} : vector<2x8x32xf32> to vector<2x8x8xf32>
    "tpu.trace_start"() <{level = 10 : i32, message = "bqk,bkd->bqd"}> : () -> ()
    %cst_60 = arith.constant dense<0.000000e+00> : vector<2x8x8xf32>
    %219 = tpu.matmul %217, %218, %cst_60 {dimension_numbers = #tpu.dot_dimension_numbers<[2], [1], [1], [2], [0, 0, 0, 1, 1, 2], [0], [0]>} : vector<2x8x8xf32>, vector<2x8x8xf32>, vector<2x8x8xf32> -> vector<2x8x8xf32>
    "tpu.trace_stop"() : () -> ()
    %220 = vector.extract_strided_slice %185 {offsets = [0, 0, 16], sizes = [2, 8, 8], strides = [1, 1, 1]} : vector<2x8x32xf32> to vector<2x8x8xf32>
    %221 = vector.extract_strided_slice %187 {offsets = [0, 0, 16], sizes = [2, 8, 8], strides = [1, 1, 1]} : vector<2x8x32xf32> to vector<2x8x8xf32>
    "tpu.trace_start"() <{level = 10 : i32, message = "bqd,bkd->bqk"}> : () -> ()
    %cst_61 = arith.constant dense<0.000000e+00> : vector<2x8x8xf32>
    %222 = tpu.matmul %220, %221, %cst_61 {dimension_numbers = #tpu.dot_dimension_numbers<[2], [2], [1], [1], [0, 0, 0, 1, 1, 1], [0], [0]>} : vector<2x8x8xf32>, vector<2x8x8xf32>, vector<2x8x8xf32> -> vector<2x8x8xf32>
    "tpu.trace_stop"() : () -> ()
    %cst_62 = arith.constant dense<0xFF800000> : vector<2x8xf32>
    %223 = vector.multi_reduction <maximumf>, %222, %cst_62 [2] : vector<2x8x8xf32> to vector<2x8xf32>
    %224 = vector.shape_cast %223 : vector<2x8xf32> to vector<2x8x1xf32>
    %225 = vector.broadcast %224 : vector<2x8x1xf32> to vector<2x8x8xf32>
    %226 = arith.subf %222, %225 : vector<2x8x8xf32>
    %227 = math.exp %226 : vector<2x8x8xf32>
    %cst_63 = arith.constant dense<0.000000e+00> : vector<2x8xf32>
    %228 = vector.multi_reduction <add>, %227, %cst_63 [2] : vector<2x8x8xf32> to vector<2x8xf32>
    %229 = vector.shape_cast %228 : vector<2x8xf32> to vector<2x8x1xf32>
    %230 = tpu.reciprocal %229 : vector<2x8x1xf32> -> vector<2x8x1xf32>
    %231 = vector.broadcast %230 : vector<2x8x1xf32> to vector<2x8x8xf32>
    %232 = arith.mulf %227, %231 : vector<2x8x8xf32>
    %233 = vector.extract_strided_slice %189 {offsets = [0, 0, 16], sizes = [2, 8, 8], strides = [1, 1, 1]} : vector<2x8x32xf32> to vector<2x8x8xf32>
    "tpu.trace_start"() <{level = 10 : i32, message = "bqk,bkd->bqd"}> : () -> ()
    %cst_64 = arith.constant dense<0.000000e+00> : vector<2x8x8xf32>
    %234 = tpu.matmul %232, %233, %cst_64 {dimension_numbers = #tpu.dot_dimension_numbers<[2], [1], [1], [2], [0, 0, 0, 1, 1, 2], [0], [0]>} : vector<2x8x8xf32>, vector<2x8x8xf32>, vector<2x8x8xf32> -> vector<2x8x8xf32>
    "tpu.trace_stop"() : () -> ()
    %235 = vector.extract_strided_slice %185 {offsets = [0, 0, 24], sizes = [2, 8, 8], strides = [1, 1, 1]} : vector<2x8x32xf32> to vector<2x8x8xf32>
    %236 = vector.extract_strided_slice %187 {offsets = [0, 0, 24], sizes = [2, 8, 8], strides = [1, 1, 1]} : vector<2x8x32xf32> to vector<2x8x8xf32>
    "tpu.trace_start"() <{level = 10 : i32, message = "bqd,bkd->bqk"}> : () -> ()
    %cst_65 = arith.constant dense<0.000000e+00> : vector<2x8x8xf32>
    %237 = tpu.matmul %235, %236, %cst_65 {dimension_numbers = #tpu.dot_dimension_numbers<[2], [2], [1], [1], [0, 0, 0, 1, 1, 1], [0], [0]>} : vector<2x8x8xf32>, vector<2x8x8xf32>, vector<2x8x8xf32> -> vector<2x8x8xf32>
    "tpu.trace_stop"() : () -> ()
    %cst_66 = arith.constant dense<0xFF800000> : vector<2x8xf32>
    %238 = vector.multi_reduction <maximumf>, %237, %cst_66 [2] : vector<2x8x8xf32> to vector<2x8xf32>
    %239 = vector.shape_cast %238 : vector<2x8xf32> to vector<2x8x1xf32>
    %240 = vector.broadcast %239 : vector<2x8x1xf32> to vector<2x8x8xf32>
    %241 = arith.subf %237, %240 : vector<2x8x8xf32>
    %242 = math.exp %241 : vector<2x8x8xf32>
    %cst_67 = arith.constant dense<0.000000e+00> : vector<2x8xf32>
    %243 = vector.multi_reduction <add>, %242, %cst_67 [2] : vector<2x8x8xf32> to vector<2x8xf32>
    %244 = vector.shape_cast %243 : vector<2x8xf32> to vector<2x8x1xf32>
    %245 = tpu.reciprocal %244 : vector<2x8x1xf32> -> vector<2x8x1xf32>
    %246 = vector.broadcast %245 : vector<2x8x1xf32> to vector<2x8x8xf32>
    %247 = arith.mulf %242, %246 : vector<2x8x8xf32>
    %248 = vector.extract_strided_slice %189 {offsets = [0, 0, 24], sizes = [2, 8, 8], strides = [1, 1, 1]} : vector<2x8x32xf32> to vector<2x8x8xf32>
    "tpu.trace_start"() <{level = 10 : i32, message = "bqk,bkd->bqd"}> : () -> ()
    %cst_68 = arith.constant dense<0.000000e+00> : vector<2x8x8xf32>
    %249 = tpu.matmul %247, %248, %cst_68 {dimension_numbers = #tpu.dot_dimension_numbers<[2], [1], [1], [2], [0, 0, 0, 1, 1, 2], [0], [0]>} : vector<2x8x8xf32>, vector<2x8x8xf32>, vector<2x8x8xf32> -> vector<2x8x8xf32>
    "tpu.trace_stop"() : () -> ()
    %250 = tpu.concatenate %204, %219, %234, %249 in 2 : vector<2x8x8xf32>, vector<2x8x8xf32>, vector<2x8x8xf32>, vector<2x8x8xf32> -> vector<2x8x32xf32>
    %251 = vector.shape_cast %250 : vector<2x8x32xf32> to vector<16x32xf32>
    %252 = arith.truncf %251 : vector<16x32xf32> to vector<16x32xbf16>
    %c1_69 = arith.constant 1 : index
    %c0_70 = arith.constant 0 : index
    %c0_71 = arith.constant 0 : index
    %253 = vector.load %arg4[%c1_69, %c0_70, %c0_71] : memref<2x32x32xbf16, #tpu.memory_space<vmem>>, vector<1x32x32xbf16>
    %254 = vector.shape_cast %253 : vector<1x32x32xbf16> to vector<32x32xbf16>
    %cst_72 = arith.constant dense<0.000000e+00> : vector<16x32xf32>
    %255 = tpu.matmul %252, %254, %cst_72 {dimension_numbers = #tpu.dot_dimension_numbers<[1], [0], [0], [1], [0, 0, 1, 1], [], []>} : vector<16x32xbf16>, vector<32x32xbf16>, vector<16x32xf32> -> vector<16x32xf32>
    %256 = vector.extract_strided_slice %0 {offsets = [9, 0], sizes = [1, 32], strides = [1, 1]} : vector<17x128xf32> to vector<1x32xf32>
    %257 = vector.shape_cast %256 : vector<1x32xf32> to vector<32xf32>
    %258 = vector.shape_cast %257 : vector<32xf32> to vector<1x32xf32>
    %259 = vector.broadcast %258 : vector<1x32xf32> to vector<16x32xf32>
    %260 = arith.addf %255, %259 : vector<16x32xf32>
    %261 = arith.addf %174, %260 : vector<16x32xf32>
    %262 = vector.extract_strided_slice %0 {offsets = [10, 0], sizes = [1, 32], strides = [1, 1]} : vector<17x128xf32> to vector<1x32xf32>
    %263 = vector.shape_cast %262 : vector<1x32xf32> to vector<32xf32>
    %264 = vector.extract_strided_slice %0 {offsets = [11, 0], sizes = [1, 32], strides = [1, 1]} : vector<17x128xf32> to vector<1x32xf32>
    %265 = vector.shape_cast %264 : vector<1x32xf32> to vector<32xf32>
    %cst_73 = arith.constant dense<0.000000e+00> : vector<16xf32>
    %266 = vector.multi_reduction <add>, %261, %cst_73 [1] : vector<16x32xf32> to vector<16xf32>
    %267 = vector.shape_cast %266 : vector<16xf32> to vector<16x1xf32>
    %cst_74 = arith.constant 3.200000e+01 : f32
    %268 = vector.broadcast %cst_74 : f32 to vector<16x1xf32>
    %269 = arith.divf %267, %268 : vector<16x1xf32>
    %270 = vector.broadcast %269 : vector<16x1xf32> to vector<16x32xf32>
    %271 = arith.subf %261, %270 : vector<16x32xf32>
    %272 = arith.mulf %271, %271 : vector<16x32xf32>
    %cst_75 = arith.constant dense<0.000000e+00> : vector<16xf32>
    %273 = vector.multi_reduction <add>, %272, %cst_75 [1] : vector<16x32xf32> to vector<16xf32>
    %274 = vector.shape_cast %273 : vector<16xf32> to vector<16x1xf32>
    %cst_76 = arith.constant 3.200000e+01 : f32
    %275 = vector.broadcast %cst_76 : f32 to vector<16x1xf32>
    %276 = arith.divf %274, %275 : vector<16x1xf32>
    %277 = vector.broadcast %269 : vector<16x1xf32> to vector<16x32xf32>
    %278 = arith.subf %261, %277 : vector<16x32xf32>
    %cst_77 = arith.constant 9.99999974E-6 : f32
    %279 = vector.broadcast %cst_77 : f32 to vector<16x1xf32>
    %280 = arith.addf %276, %279 : vector<16x1xf32>
    %281 = math.rsqrt %280 : vector<16x1xf32>
    %282 = vector.broadcast %281 : vector<16x1xf32> to vector<16x32xf32>
    %283 = arith.mulf %278, %282 : vector<16x32xf32>
    %284 = vector.shape_cast %263 : vector<32xf32> to vector<1x32xf32>
    %285 = vector.broadcast %284 : vector<1x32xf32> to vector<16x32xf32>
    %286 = arith.mulf %283, %285 : vector<16x32xf32>
    %287 = vector.shape_cast %265 : vector<32xf32> to vector<1x32xf32>
    %288 = vector.broadcast %287 : vector<1x32xf32> to vector<16x32xf32>
    %289 = arith.addf %286, %288 : vector<16x32xf32>
    %290 = arith.truncf %289 : vector<16x32xf32> to vector<16x32xbf16>
    %c1_78 = arith.constant 1 : index
    %c0_79 = arith.constant 0 : index
    %c0_80 = arith.constant 0 : index
    %291 = vector.load %arg5[%c1_78, %c0_79, %c0_80] : memref<2x32x64xbf16, #tpu.memory_space<vmem>>, vector<1x32x64xbf16>
    %292 = vector.shape_cast %291 : vector<1x32x64xbf16> to vector<32x64xbf16>
    %cst_81 = arith.constant dense<0.000000e+00> : vector<16x64xf32>
    %293 = tpu.matmul %290, %292, %cst_81 {dimension_numbers = #tpu.dot_dimension_numbers<[1], [0], [0], [1], [0, 0, 1, 1], [], []>} : vector<16x32xbf16>, vector<32x64xbf16>, vector<16x64xf32> -> vector<16x64xf32>
    %294 = vector.extract_strided_slice %0 {offsets = [12, 0], sizes = [1, 64], strides = [1, 1]} : vector<17x128xf32> to vector<1x64xf32>
    %295 = vector.shape_cast %294 : vector<1x64xf32> to vector<64xf32>
    %296 = vector.shape_cast %295 : vector<64xf32> to vector<1x64xf32>
    %297 = vector.broadcast %296 : vector<1x64xf32> to vector<16x64xf32>
    %298 = arith.addf %293, %297 : vector<16x64xf32>
    %cst_82 = arith.constant 0.000000e+00 : f32
    %299 = vector.broadcast %cst_82 : f32 to vector<16x64xf32>
    %300 = arith.maximumf %298, %299 : vector<16x64xf32>
    %301 = arith.truncf %300 : vector<16x64xf32> to vector<16x64xbf16>
    %c1_83 = arith.constant 1 : index
    %c0_84 = arith.constant 0 : index
    %c0_85 = arith.constant 0 : index
    %302 = vector.load %arg6[%c1_83, %c0_84, %c0_85] : memref<2x64x32xbf16, #tpu.memory_space<vmem>>, vector<1x64x32xbf16>
    %303 = vector.shape_cast %302 : vector<1x64x32xbf16> to vector<64x32xbf16>
    %cst_86 = arith.constant dense<0.000000e+00> : vector<16x32xf32>
    %304 = tpu.matmul %301, %303, %cst_86 {dimension_numbers = #tpu.dot_dimension_numbers<[1], [0], [0], [1], [0, 0, 1, 1], [], []>} : vector<16x64xbf16>, vector<64x32xbf16>, vector<16x32xf32> -> vector<16x32xf32>
    %305 = vector.extract_strided_slice %0 {offsets = [13, 0], sizes = [1, 32], strides = [1, 1]} : vector<17x128xf32> to vector<1x32xf32>
    %306 = vector.shape_cast %305 : vector<1x32xf32> to vector<32xf32>
    %307 = vector.shape_cast %306 : vector<32xf32> to vector<1x32xf32>
    %308 = vector.broadcast %307 : vector<1x32xf32> to vector<16x32xf32>
    %309 = arith.addf %304, %308 : vector<16x32xf32>
    %310 = arith.addf %289, %309 : vector<16x32xf32>
    %311 = vector.extract_strided_slice %0 {offsets = [14, 0], sizes = [1, 32], strides = [1, 1]} : vector<17x128xf32> to vector<1x32xf32>
    %312 = vector.shape_cast %311 : vector<1x32xf32> to vector<32xf32>
    %313 = vector.extract_strided_slice %0 {offsets = [15, 0], sizes = [1, 32], strides = [1, 1]} : vector<17x128xf32> to vector<1x32xf32>
    %314 = vector.shape_cast %313 : vector<1x32xf32> to vector<32xf32>
    %cst_87 = arith.constant dense<0.000000e+00> : vector<16xf32>
    %315 = vector.multi_reduction <add>, %310, %cst_87 [1] : vector<16x32xf32> to vector<16xf32>
    %316 = vector.shape_cast %315 : vector<16xf32> to vector<16x1xf32>
    %cst_88 = arith.constant 3.200000e+01 : f32
    %317 = vector.broadcast %cst_88 : f32 to vector<16x1xf32>
    %318 = arith.divf %316, %317 : vector<16x1xf32>
    %319 = vector.broadcast %318 : vector<16x1xf32> to vector<16x32xf32>
    %320 = arith.subf %310, %319 : vector<16x32xf32>
    %321 = arith.mulf %320, %320 : vector<16x32xf32>
    %cst_89 = arith.constant dense<0.000000e+00> : vector<16xf32>
    %322 = vector.multi_reduction <add>, %321, %cst_89 [1] : vector<16x32xf32> to vector<16xf32>
    %323 = vector.shape_cast %322 : vector<16xf32> to vector<16x1xf32>
    %cst_90 = arith.constant 3.200000e+01 : f32
    %324 = vector.broadcast %cst_90 : f32 to vector<16x1xf32>
    %325 = arith.divf %323, %324 : vector<16x1xf32>
    %326 = vector.broadcast %318 : vector<16x1xf32> to vector<16x32xf32>
    %327 = arith.subf %310, %326 : vector<16x32xf32>
    %cst_91 = arith.constant 9.99999974E-6 : f32
    %328 = vector.broadcast %cst_91 : f32 to vector<16x1xf32>
    %329 = arith.addf %325, %328 : vector<16x1xf32>
    %330 = math.rsqrt %329 : vector<16x1xf32>
    %331 = vector.broadcast %330 : vector<16x1xf32> to vector<16x32xf32>
    %332 = arith.mulf %327, %331 : vector<16x32xf32>
    %333 = vector.shape_cast %312 : vector<32xf32> to vector<1x32xf32>
    %334 = vector.broadcast %333 : vector<1x32xf32> to vector<16x32xf32>
    %335 = arith.mulf %332, %334 : vector<16x32xf32>
    %336 = vector.shape_cast %314 : vector<32xf32> to vector<1x32xf32>
    %337 = vector.broadcast %336 : vector<1x32xf32> to vector<16x32xf32>
    %338 = arith.addf %335, %337 : vector<16x32xf32>
    %339 = vector.shape_cast %338 : vector<16x32xf32> to vector<2x8x32xf32>
    %cst_92 = arith.constant dense<0.000000e+00> : vector<2x32xf32>
    %340 = vector.multi_reduction <add>, %339, %cst_92 [1] : vector<2x8x32xf32> to vector<2x32xf32>
    %cst_93 = arith.constant 8.000000e+00 : f32
    %341 = vector.broadcast %cst_93 : f32 to vector<2x32xf32>
    %342 = arith.divf %340, %341 : vector<2x32xf32>
    %343 = arith.truncf %342 : vector<2x32xf32> to vector<2x32xbf16>
    %c0_94 = arith.constant 0 : index
    %c0_95 = arith.constant 0 : index
    %344 = vector.load %arg8[%c0_94, %c0_95] : memref<32x128xbf16, #tpu.memory_space<vmem>>, vector<32x128xbf16>
    %cst_96 = arith.constant dense<0.000000e+00> : vector<2x128xf32>
    %345 = tpu.matmul %343, %344, %cst_96 {dimension_numbers = #tpu.dot_dimension_numbers<[1], [0], [0], [1], [0, 0, 1, 1], [], []>} : vector<2x32xbf16>, vector<32x128xbf16>, vector<2x128xf32> -> vector<2x128xf32>
    %346 = vector.extract_strided_slice %0 {offsets = [16, 0], sizes = [1, 128], strides = [1, 1]} : vector<17x128xf32> to vector<1x128xf32>
    %347 = vector.shape_cast %346 : vector<1x128xf32> to vector<128xf32>
    %348 = vector.shape_cast %347 : vector<128xf32> to vector<1x128xf32>
    %349 = vector.broadcast %348 : vector<1x128xf32> to vector<2x128xf32>
    %350 = arith.addf %345, %349 : vector<2x128xf32>
    %c0_97 = arith.constant 0 : index
    %c0_98 = arith.constant 0 : index
    %351 = vector.load %arg9[%c0_97, %c0_98] : memref<2x128xf32, #tpu.memory_space<vmem>>, vector<2x128xf32>
    tpu.vector_store %arg9[%c0_97, %c0_98], %350 {strides = array<i32>} : memref<2x128xf32, #tpu.memory_space<vmem>>, vector<2x128xf32>,
    return
  }
}

</mosaic_0001>

<llo_original>
// kernel: transformer_expert_forward.1
$region0: #{transformer_expert_forward.1}
  #allocation0 [shape = 'u32[]', space=smem, size = 0x4, offset = 0x4, fixed_abs, tag = 'smem constant byte address 0x4 - core index']
  #allocation1 [shape = 'u32[144,128]{1,0:T(1,128)}', space=vmem, size = 0x12000, scoped, tag = 'internal scratch']
  %s0 = inlined_call_operand.vmem [shape: s32[16,1], index: 0, kind: input, shape index: {}]
  %s1 = inlined_call_operand.vmem [shape: f32[128,32], index: 1, kind: input, shape index: {}]
  %s2 = inlined_call_operand.vmem [shape: f32[16,32], index: 2, kind: input, shape index: {}]
  %s3 = inlined_call_operand.vmem [shape: bf16[2,32,96], index: 3, kind: input, shape index: {}]
  %s4 = inlined_call_operand.vmem [shape: bf16[2,32,32], index: 4, kind: input, shape index: {}]
  %s5 = inlined_call_operand.vmem [shape: bf16[2,32,64], index: 5, kind: input, shape index: {}]
  %s6 = inlined_call_operand.vmem [shape: bf16[2,64,32], index: 6, kind: input, shape index: {}]
  %s7 = inlined_call_operand.vmem [shape: f32[17,128], index: 7, kind: input, shape index: {}]
  %s8 = inlined_call_operand.vmem [shape: bf16[32,128], index: 8, kind: input, shape index: {}]
  %s9 = inlined_call_operand.hbm [shape: f32[2,128], index: 9, kind: output, shape index: {}]
  %s10 = sld [smem:[#allocation0]]
  $region46: #{transformer_expert_forward.1} parent=0
    _
  %s12 = ssub.s32 1, %s10
  %s13 = scalar_select 0, %s12, %s10
  $region1: #{transformer_expert_forward.1} parent=0
    #allocation2 [shape = 'u8[1024]{0}', space=vmem, size = 0x400, scoped, tag = 'output window, operand 0, single buffered']
    #allocation3 [shape = 's32[1]{0}', space=sflag, size = 0x4, scoped, tag = 'scoped memory for transformer_expert_forward.1']
    %14 = vsyncpa [#allocation3], 0
    // Predicated region
    $region2: #{transformer_expert_forward.1} parent=1 // pred_check
      _
    $region3: #{transformer_expert_forward.1} parent=1 // pred_check_branch
      %16 = sbr.rel (0) target = $region5
    $region4: #{transformer_expert_forward.1} parent=1 // pred_region
      _
    $region5: #{transformer_expert_forward.1} parent=1 // pred_fallthru
      _
    // Predicated region
    $region6: #{transformer_expert_forward.1} parent=1 // pred_check
      _
    $region7: #{transformer_expert_forward.1} parent=1 // pred_check_branch
      %18 = sbr.rel (0) target = $region9
    $region8: #{transformer_expert_forward.1} parent=1 // pred_region
      _
    $region9: #{transformer_expert_forward.1} parent=1 // pred_fallthru
      _
    // Predicated region
    $region10: #{transformer_expert_forward.1} parent=1 // pred_check
      _
    $region11: #{transformer_expert_forward.1} parent=1 // pred_check_branch
      %20 = sbr.rel (0) target = $region13
    $region12: #{transformer_expert_forward.1} parent=1 // pred_region
      _
    $region13: #{transformer_expert_forward.1} parent=1 // pred_fallthru
      _
    // Predicated region
    $region14: #{transformer_expert_forward.1} parent=1 // pred_check
      _
    $region15: #{transformer_expert_forward.1} parent=1 // pred_check_branch
      %22 = sbr.rel (0) target = $region17
    $region16: #{transformer_expert_forward.1} parent=1 // pred_region
      _
    $region17: #{transformer_expert_forward.1} parent=1 // pred_fallthru
      _
    // Predicated region
    $region18: #{transformer_expert_forward.1} parent=1 // pred_check
      _
    $region19: #{transformer_expert_forward.1} parent=1 // pred_check_branch
      %24 = sbr.rel (0) target = $region21
    $region20: #{transformer_expert_forward.1} parent=1 // pred_region
      _
    $region21: #{transformer_expert_forward.1} parent=1 // pred_fallthru
      _
    // Predicated region
    $region22: #{transformer_expert_forward.1} parent=1 // pred_check
      _
    $region23: #{transformer_expert_forward.1} parent=1 // pred_check_branch
      %26 = sbr.rel (0) target = $region25
    $region24: #{transformer_expert_forward.1} parent=1 // pred_region
      _
    $region25: #{transformer_expert_forward.1} parent=1 // pred_fallthru
      _
    // Predicated region
    $region26: #{transformer_expert_forward.1} parent=1 // pred_check
      _
    $region27: #{transformer_expert_forward.1} parent=1 // pred_check_branch
      %28 = sbr.rel (0) target = $region29
    $region28: #{transformer_expert_forward.1} parent=1 // pred_region
      _
    $region29: #{transformer_expert_forward.1} parent=1 // pred_fallthru
      _
    // Predicated region
    $region30: #{transformer_expert_forward.1} parent=1 // pred_check
      _
    $region31: #{transformer_expert_forward.1} parent=1 // pred_check_branch
      %30 = sbr.rel (0) target = $region33
    $region32: #{transformer_expert_forward.1} parent=1 // pred_region
      _
    $region33: #{transformer_expert_forward.1} parent=1 // pred_fallthru
      _
    // Predicated region
    $region34: #{transformer_expert_forward.1} parent=1 // pred_check
      _
    $region35: #{transformer_expert_forward.1} parent=1 // pred_check_branch
      %32 = sbr.rel (0) target = $region37
    $region36: #{transformer_expert_forward.1} parent=1 // pred_region
      _
    $region37: #{transformer_expert_forward.1} parent=1 // pred_fallthru
      _
    %v34 = vld [vmem:[%s7] sm:$0xff]
    %v35 = vld [vmem:[%s7 + $0x8] sm:$0xff]
    %v36 = vld [vmem:[%s7 + $0x10] sm:$0x1]
    %v37 = vld [vmem:[%s0] sm:$0xff]
    %v38 = vld [vmem:[%s0 + $0x8] sm:$0xff]
    %v39 = vlaneseq
    %v40 = vand.u32 %v39, 127
    %41 = vset.pattern.permute.xlu0 0
    %42 = vperm.xlu0 %41, %v37
    %v43 = vpop.permute.xlu0 %42
    %44 = vset.pattern.permute.xlu0 0
    %45 = vperm.xlu0 %44, %v38
    %v46 = vpop.permute.xlu0 %45
    %vm47 = vcmp.eq.s32.totalorder %v40, %v43
    %vm48 = vcmp.eq.s32.totalorder %v40, %v46
    %v49 = vsel %vm47, 1, 0
    %v50 = vsel %vm48, 1, 0
    %v51 = vcvt.s32.f32 %v49
    %v52 = vcvt.s32.f32 %v50
    %v53 = vld [vmem:[%s1] sm:$0xff]
    %v54 = vld [vmem:[%s1 + $0x8] sm:$0xff]
    %v55 = vld [vmem:[%s1 + $0x10] sm:$0xff]
    %v56 = vld [vmem:[%s1 + $0x18] sm:$0xff]
    %v57 = vld [vmem:[%s1 + $0x20] sm:$0xff]
    %v58 = vld [vmem:[%s1 + $0x28] sm:$0xff]
    %v59 = vld [vmem:[%s1 + $0x30] sm:$0xff]
    %v60 = vld [vmem:[%s1 + $0x38] sm:$0xff]
    %v61 = vld [vmem:[%s1 + $0x40] sm:$0xff]
    %v62 = vld [vmem:[%s1 + $0x48] sm:$0xff]
    %v63 = vld [vmem:[%s1 + $0x50] sm:$0xff]
    %v64 = vld [vmem:[%s1 + $0x58] sm:$0xff]
    %v65 = vld [vmem:[%s1 + $0x60] sm:$0xff]
    %v66 = vld [vmem:[%s1 + $0x68] sm:$0xff]
    %v67 = vld [vmem:[%s1 + $0x70] sm:$0xff]
    %v68 = vld [vmem:[%s1 + $0x78] sm:$0xff]
    %v69 = vld [vmem:[%s2] sm:$0xff]
    %v70 = vld [vmem:[%s2 + $0x8] sm:$0xff]
    %71 = vmatprep.subr.mxu0 0.0
    %72 = vmatpush1.msra.mxu0 %v53
    %73 = vmatprep.subr.mxu0 0.0
    %74 = vmatpush1.msra.mxu0 %v54
    %75 = vmatprep.subr.mxu0 0.0
    %76 = vmatpush1.msra.mxu0 %v55
    %77 = vmatprep.subr.mxu0 0.0
    %78 = vmatpush1.msra.mxu0 %v56
    %79 = vmatprep.subr.mxu0 0.0
    %80 = vmatpush1.msra.mxu0 %v57
    %81 = vmatprep.subr.mxu0 0.0
    %82 = vmatpush1.msra.mxu0 %v58
    %83 = vmatprep.subr.mxu0 0.0
    %84 = vmatpush1.msra.mxu0 %v59
    %85 = vmatprep.subr.mxu0 0.0
    %86 = vmatpush1.msra.mxu0 %v60
    %87 = vmatprep.subr.mxu0 0.0
    %88 = vmatpush1.msra.mxu0 %v61
    %89 = vmatprep.subr.mxu0 0.0
    %90 = vmatpush1.msra.mxu0 %v62
    %91 = vmatprep.subr.mxu0 0.0
    %92 = vmatpush1.msra.mxu0 %v63
    %93 = vmatprep.subr.mxu0 0.0
    %94 = vmatpush1.msra.mxu0 %v64
    %95 = vmatprep.subr.mxu0 0.0
    %96 = vmatpush1.msra.mxu0 %v65
    %97 = vmatprep.subr.mxu0 0.0
    %98 = vmatpush1.msra.mxu0 %v66
    %99 = vmatprep.subr.mxu0 0.0
    %100 = vmatpush1.msra.mxu0 %v67
    %101 = vmatprep.subr.mxu0 0.0
    %102 = vmatpush1.msra.mxu0 %v68
    %103 = vmatprep.subr.mxu0 0.0
    %104 = vmatpush1.msra.mxu0 0.0
    %105 = vmatprep.subr.mxu0 0.0
    %106 = vmatpush1.msra.mxu0 0.0
    %107 = vmatprep.subr.mxu0 0.0
    %108 = vmatpush1.msra.mxu0 0.0
    %109 = vmatprep.subr.mxu0 0.0
    %110 = vmatpush1.msra.mxu0 0.0
    %111 = vmatprep.subr.mxu0 0.0
    %112 = vmatpush1.msra.mxu0 0.0
    %113 = vmatprep.subr.mxu0 0.0
    %114 = vmatpush1.msra.mxu0 0.0
    %115 = vmatprep.subr.mxu0 0.0
    %116 = vmatpush1.msra.mxu0 0.0
    %117 = vmatprep.subr.mxu0 0.0
    %118 = vmatpush1.msra.mxu0 0.0
    %119 = vmatprep.subr.mxu0 0.0
    %120 = vmatpush1.msra.mxu0 0.0
    %121 = vmatprep.subr.mxu0 0.0
    %122 = vmatpush1.msra.mxu0 0.0
    %123 = vmatprep.subr.mxu0 0.0
    %124 = vmatpush1.msra.mxu0 0.0
    %125 = vmatprep.subr.mxu0 0.0
    %126 = vmatpush1.msra.mxu0 0.0
    %127 = vmatprep.subr.mxu0 0.0
    %128 = vmatpush1.msra.mxu0 0.0
    %129 = vmatprep.subr.mxu0 0.0
    %130 = vmatpush1.msra.mxu0 0.0
    %131 = vmatprep.subr.mxu0 0.0
    %132 = vmatpush1.msra.mxu0 0.0
    %133 = vmatprep.subr.mxu0 0.0
    %134 = vmatpush1.msra.mxu0 0.0
    %135 = vmatprep.mubr.f32.mxu0 0.0
    %136 = vmatmul.mubr.f32.gmra.mrb[0].mxu0 %v51
    %v137 = vpop.f32.mrb[0].mxu0
    %v138 = vadd.f32 %v69, %v137
    %v139 = vpop.f32.mrb[0].mxu0
    %140 = vmatprep.mubr.f32.mxu0 0.0
    %141 = vmatmul.mubr.f32.gmra.mrb[0].mxu0 %v52
    %v142 = vpop.f32.mrb[0].mxu0
    %v143 = vadd.f32 %v70, %v142
    %v144 = vpop.f32.mrb[0].mxu0
    %145 = vdwg.mxu0
    %v146 = vpack.c.bf16 %v143, %v138
    %v147 = vld [vmem:[%s3] sm:$0xf]
    %v148 = vld [vmem:[%s3 + $0x4] sm:$0xf]
    %v149 = vld [vmem:[%s3 + $0x8] sm:$0xf]
    %v150 = vld [vmem:[%s3 + $0xc] sm:$0xf]
    %v151 = vlaneseq
    %v152 = vshrl.u32 %v151, 7
    %v153 = vsub.s32 0, %v152
    %v154 = vrot.slane %v34, %v153
    %v159 = vunpack.c.l.b16 %v147
    %v160 = vunpack.c.l.b16 %v148
    %v161 = vunpack.c.l.b16 %v149
    %v162 = vunpack.c.l.b16 %v150
    %v163 = vpack.c.b16 %v160, %v159
    %v164 = vpack.c.b16 %v162, %v161
    %vm167 = vcmask 261120
    %v169 = vsel %vm167, %v146, 0
    %171 = vmatprep.subr.bf16.mxu0 0
    %172 = vmatpush1.bf16.msra.mxu0 %v163
    %173 = vmatprep.subr.bf16.mxu0 0
    %174 = vmatpush1.bf16.msra.mxu0 %v164
    %175 = vmatprep.subr.bf16.mxu0 0
    %176 = vmatpush1.bf16.msra.mxu0 0
    %177 = vmatprep.subr.bf16.mxu0 0
    %178 = vmatpush1.bf16.msra.mxu0 0
    %179 = vmatprep.subr.bf16.mxu0 0
    %180 = vmatpush1.bf16.msra.mxu0 0
    %181 = vmatprep.subr.bf16.mxu0 0
    %182 = vmatpush1.bf16.msra.mxu0 0
    %183 = vmatprep.subr.bf16.mxu0 0
    %184 = vmatpush1.bf16.msra.mxu0 0
    %185 = vmatprep.subr.bf16.mxu0 0
    %186 = vmatpush1.bf16.msra.mxu0 0
    %187 = vmatprep.subr.bf16.mxu0 0
    %188 = vmatpush1.bf16.msra.mxu0 0
    %189 = vmatprep.subr.bf16.mxu0 0
    %190 = vmatpush1.bf16.msra.mxu0 0
    %191 = vmatprep.subr.bf16.mxu0 0
    %192 = vmatpush1.bf16.msra.mxu0 0
    %193 = vmatprep.subr.bf16.mxu0 0
    %194 = vmatpush1.bf16.msra.mxu0 0
    %195 = vmatprep.subr.bf16.mxu0 0
    %196 = vmatpush1.bf16.msra.mxu0 0
    %197 = vmatprep.subr.bf16.mxu0 0
    %198 = vmatpush1.bf16.msra.mxu0 0
    %199 = vmatprep.subr.bf16.mxu0 0
    %200 = vmatpush1.bf16.msra.mxu0 0
    %201 = vmatprep.subr.bf16.mxu0 0
    %202 = vmatpush1.bf16.msra.mxu0 0
    %203 = vmatprep.mubr.bf16.mxu0 0
    %204 = vmatmul.mubr.bf16.gmra.mrb[0].mxu0 %v169
    %v205 = vpop.f32.mrb[0].mxu0
    %v206 = vadd.f32 %v154, %v205
    %v207 = vpop.f32.mrb[0].mxu0
    %v208 = vpop.f32.mrb[0].mxu0
    %v209 = vadd.f32 %v154, %v208
    %v210 = vpop.f32.mrb[0].mxu0
    %211 = vdwg.mxu0
    %213 = vrot.lane.b32.xlu0 %v206, 96
    %v214 = vpop.permute.xlu0 %213
    %vm215 = vcmask 64512
    %v216 = vsel %vm215, %v206, 0
    %v218 = vsel %vm215, %v214, 0
    %220 = vmatprep.subr.mxu0 0.0
    %221 = vmatpush1.xpose.msra.mxu0 %v218
    %222 = vmatprep.subr.mxu0 0.0
    %223 = vmatpush1.xpose.msra.mxu0 0.0
    %224 = vmatprep.subr.mxu0 0.0
    %225 = vmatpush1.xpose.msra.mxu0 0.0
    %226 = vmatprep.subr.mxu0 0.0
    %227 = vmatpush1.xpose.msra.mxu0 0.0
    %228 = vmatprep.subr.mxu0 0.0
    %229 = vmatpush1.xpose.msra.mxu0 0.0
    %230 = vmatprep.subr.mxu0 0.0
    %231 = vmatpush1.xpose.msra.mxu0 0.0
    %232 = vmatprep.subr.mxu0 0.0
    %233 = vmatpush1.xpose.msra.mxu0 0.0
    %234 = vmatprep.subr.mxu0 0.0
    %235 = vmatpush1.xpose.msra.mxu0 0.0
    %236 = vmatprep.subr.mxu0 0.0
    %237 = vmatpush1.xpose.msra.mxu0 0.0
    %238 = vmatprep.subr.mxu0 0.0
    %239 = vmatpush1.xpose.msra.mxu0 0.0
    %240 = vmatprep.subr.mxu0 0.0
    %241 = vmatpush1.xpose.msra.mxu0 0.0
    %242 = vmatprep.subr.mxu0 0.0
    %243 = vmatpush1.xpose.msra.mxu0 0.0
    %244 = vmatprep.subr.mxu0 0.0
    %245 = vmatpush1.xpose.msra.mxu0 0.0
    %246 = vmatprep.subr.mxu0 0.0
    %247 = vmatpush1.xpose.msra.mxu0 0.0
    %248 = vmatprep.subr.mxu0 0.0
    %249 = vmatpush1.xpose.msra.mxu0 0.0
    %250 = vmatprep.subr.mxu0 0.0
    %251 = vmatpush1.xpose.msra.mxu0 0.0
    %252 = vmatprep.subr.mxu0 0.0
    %253 = vmatpush1.xpose.msra.mxu0 0.0
    %254 = vmatprep.subr.mxu0 0.0
    %255 = vmatpush1.xpose.msra.mxu0 0.0
    %256 = vmatprep.subr.mxu0 0.0
    %257 = vmatpush1.xpose.msra.mxu0 0.0
    %258 = vmatprep.subr.mxu0 0.0
    %259 = vmatpush1.xpose.msra.mxu0 0.0
    %260 = vmatprep.subr.mxu0 0.0
    %261 = vmatpush1.xpose.msra.mxu0 0.0
    %262 = vmatprep.subr.mxu0 0.0
    %263 = vmatpush1.xpose.msra.mxu0 0.0
    %264 = vmatprep.subr.mxu0 0.0
    %265 = vmatpush1.xpose.msra.mxu0 0.0
    %266 = vmatprep.subr.mxu0 0.0
    %267 = vmatpush1.xpose.msra.mxu0 0.0
    %268 = vmatprep.subr.mxu0 0.0
    %269 = vmatpush1.xpose.msra.mxu0 0.0
    %270 = vmatprep.subr.mxu0 0.0
    %271 = vmatpush1.xpose.msra.mxu0 0.0
    %272 = vmatprep.subr.mxu0 0.0
    %273 = vmatpush1.xpose.msra.mxu0 0.0
    %274 = vmatprep.subr.mxu0 0.0
    %275 = vmatpush1.xpose.msra.mxu0 0.0
    %276 = vmatprep.subr.mxu0 0.0
    %277 = vmatpush1.xpose.msra.mxu0 0.0
    %278 = vmatprep.subr.mxu0 0.0
    %279 = vmatpush1.xpose.msra.mxu0 0.0
    %280 = vmatprep.subr.mxu0 0.0
    %281 = vmatpush1.xpose.msra.mxu0 0.0
    %282 = vmatprep.subr.mxu0 0.0
    %283 = vmatpush1.xpose.msra.mxu0 0.0
    %284 = vmatprep.mubr.f32.mxu0 0.0
    %285 = vmatmul.mubr.f32.gmra.mrb[0].mxu0 %v216
    %v286 = vpop.f32.mrb[0].mxu0
    %v287 = vadd.f32 0.0, %v286
    %v288 = vpop.f32.mrb[0].mxu0
    %289 = vdwg.mxu0
    %291 = vrot.lane.b32.xlu0 %v209, 96
    %v292 = vpop.permute.xlu0 %291
    %v293 = vsel %vm215, %v209, 0
    %v295 = vsel %vm215, %v292, 0
    %297 = vmatprep.subr.mxu0 0.0
    %298 = vmatpush1.xpose.msra.mxu0 %v295
    %299 = vmatprep.subr.mxu0 0.0
    %300 = vmatpush1.xpose.msra.mxu0 0.0
    %301 = vmatprep.subr.mxu0 0.0
    %302 = vmatpush1.xpose.msra.mxu0 0.0
    %303 = vmatprep.subr.mxu0 0.0
    %304 = vmatpush1.xpose.msra.mxu0 0.0
    %305 = vmatprep.subr.mxu0 0.0
    %306 = vmatpush1.xpose.msra.mxu0 0.0
    %307 = vmatprep.subr.mxu0 0.0
    %308 = vmatpush1.xpose.msra.mxu0 0.0
    %309 = vmatprep.subr.mxu0 0.0
    %310 = vmatpush1.xpose.msra.mxu0 0.0
    %311 = vmatprep.subr.mxu0 0.0
    %312 = vmatpush1.xpose.msra.mxu0 0.0
    %313 = vmatprep.subr.mxu0 0.0
    %314 = vmatpush1.xpose.msra.mxu0 0.0
    %315 = vmatprep.subr.mxu0 0.0
    %316 = vmatpush1.xpose.msra.mxu0 0.0
    %317 = vmatprep.subr.mxu0 0.0
    %318 = vmatpush1.xpose.msra.mxu0 0.0
    %319 = vmatprep.subr.mxu0 0.0
    %320 = vmatpush1.xpose.msra.mxu0 0.0
    %321 = vmatprep.subr.mxu0 0.0
    %322 = vmatpush1.xpose.msra.mxu0 0.0
    %323 = vmatprep.subr.mxu0 0.0
    %324 = vmatpush1.xpose.msra.mxu0 0.0
    %325 = vmatprep.subr.mxu0 0.0
    %326 = vmatpush1.xpose.msra.mxu0 0.0
    %327 = vmatprep.subr.mxu0 0.0
    %328 = vmatpush1.xpose.msra.mxu0 0.0
    %329 = vmatprep.subr.mxu0 0.0
    %330 = vmatpush1.xpose.msra.mxu0 0.0
    %331 = vmatprep.subr.mxu0 0.0
    %332 = vmatpush1.xpose.msra.mxu0 0.0
    %333 = vmatprep.subr.mxu0 0.0
    %334 = vmatpush1.xpose.msra.mxu0 0.0
    %335 = vmatprep.subr.mxu0 0.0
    %336 = vmatpush1.xpose.msra.mxu0 0.0
    %337 = vmatprep.subr.mxu0 0.0
    %338 = vmatpush1.xpose.msra.mxu0 0.0
    %339 = vmatprep.subr.mxu0 0.0
    %340 = vmatpush1.xpose.msra.mxu0 0.0
    %341 = vmatprep.subr.mxu0 0.0
    %342 = vmatpush1.xpose.msra.mxu0 0.0
    %343 = vmatprep.subr.mxu0 0.0
    %344 = vmatpush1.xpose.msra.mxu0 0.0
    %345 = vmatprep.subr.mxu0 0.0
    %346 = vmatpush1.xpose.msra.mxu0 0.0
    %347 = vmatprep.subr.mxu0 0.0
    %348 = vmatpush1.xpose.msra.mxu0 0.0
    %349 = vmatprep.subr.mxu0 0.0
    %350 = vmatpush1.xpose.msra.mxu0 0.0
    %351 = vmatprep.subr.mxu0 0.0
    %352 = vmatpush1.xpose.msra.mxu0 0.0
    %353 = vmatprep.subr.mxu0 0.0
    %354 = vmatpush1.xpose.msra.mxu0 0.0
    %355 = vmatprep.subr.mxu0 0.0
    %356 = vmatpush1.xpose.msra.mxu0 0.0
    %357 = vmatprep.subr.mxu0 0.0
    %358 = vmatpush1.xpose.msra.mxu0 0.0
    %359 = vmatprep.subr.mxu0 0.0
    %360 = vmatpush1.xpose.msra.mxu0 0.0
    %361 = vmatprep.mubr.f32.mxu0 0.0
    %362 = vmatmul.mubr.f32.gmra.mrb[0].mxu0 %v293
    %v363 = vpop.f32.mrb[0].mxu0
    %v364 = vadd.f32 0.0, %v363
    %v365 = vpop.f32.mrb[0].mxu0
    %366 = vdwg.mxu0
    %v367 = vsel %vm215, %v287, -inf
    %368 = vmax.xlane.f32.xlu0 %v367
    %v369 = vpop.xlane.xlu0 %368
    %v370 = vsel %vm215, %v364, -inf
    %371 = vmax.xlane.f32.xlu0 %v370
    %v372 = vpop.xlane.xlu0 %371
    %v373 = vsub.f32 %v287, %v369
    %v374 = vsub.f32 %v364, %v372
    %v375 = vmul.f32 %v373, 1.442695
    %v376 = vpow.pop %v375
    %v377 = vmul.f32 %v374, 1.442695
    %v378 = vpow.pop %v377
    %v379 = vsel %vm215, %v376, 0.0
    %380 = vadd.xlane.f32.xlu0 %v379
    %v381 = vpop.xlane.xlu0 %380
    %v382 = vsel %vm215, %v378, 0.0
    %383 = vadd.xlane.f32.xlu0 %v382
    %v384 = vpop.xlane.xlu0 %383
    %v385 = vrcp.pop %v381
    %v386 = vrcp.pop %v384
    %v387 = vmul.f32 %v376, %v385
    %v388 = vmul.f32 %v378, %v386
    %389 = vrot.lane.b32.xlu0 %v206, 64
    %v390 = vpop.permute.xlu0 %389
    %v393 = vsel %vm215, %v387, 0
    %395 = vmatprep.subr.mxu0 0.0
    %396 = vmatpush1.msra.mxu0 %v390
    %397 = vmatprep.subr.mxu0 0.0
    %398 = vmatpush1.msra.mxu0 0.0
    %399 = vmatprep.subr.mxu0 0.0
    %400 = vmatpush1.msra.mxu0 0.0
    %401 = vmatprep.subr.mxu0 0.0
    %402 = vmatpush1.msra.mxu0 0.0
    %403 = vmatprep.subr.mxu0 0.0
    %404 = vmatpush1.msra.mxu0 0.0
    %405 = vmatprep.subr.mxu0 0.0
    %406 = vmatpush1.msra.mxu0 0.0
    %407 = vmatprep.subr.mxu0 0.0
    %408 = vmatpush1.msra.mxu0 0.0
    %409 = vmatprep.subr.mxu0 0.0
    %410 = vmatpush1.msra.mxu0 0.0
    %411 = vmatprep.subr.mxu0 0.0
    %412 = vmatpush1.msra.mxu0 0.0
    %413 = vmatprep.subr.mxu0 0.0
    %414 = vmatpush1.msra.mxu0 0.0
    %415 = vmatprep.subr.mxu0 0.0
    %416 = vmatpush1.msra.mxu0 0.0
    %417 = vmatprep.subr.mxu0 0.0
    %418 = vmatpush1.msra.mxu0 0.0
    %419 = vmatprep.subr.mxu0 0.0
    %420 = vmatpush1.msra.mxu0 0.0
    %421 = vmatprep.subr.mxu0 0.0
    %422 = vmatpush1.msra.mxu0 0.0
    %423 = vmatprep.subr.mxu0 0.0
    %424 = vmatpush1.msra.mxu0 0.0
    %425 = vmatprep.subr.mxu0 0.0
    %426 = vmatpush1.msra.mxu0 0.0
    %427 = vmatprep.subr.mxu0 0.0
    %428 = vmatpush1.msra.mxu0 0.0
    %429 = vmatprep.subr.mxu0 0.0
    %430 = vmatpush1.msra.mxu0 0.0
    %431 = vmatprep.subr.mxu0 0.0
    %432 = vmatpush1.msra.mxu0 0.0
    %433 = vmatprep.subr.mxu0 0.0
    %434 = vmatpush1.msra.mxu0 0.0
    %435 = vmatprep.subr.mxu0 0.0
    %436 = vmatpush1.msra.mxu0 0.0
    %437 = vmatprep.subr.mxu0 0.0
    %438 = vmatpush1.msra.mxu0 0.0
    %439 = vmatprep.subr.mxu0 0.0
    %440 = vmatpush1.msra.mxu0 0.0
    %441 = vmatprep.subr.mxu0 0.0
    %442 = vmatpush1.msra.mxu0 0.0
    %443 = vmatprep.subr.mxu0 0.0
    %444 = vmatpush1.msra.mxu0 0.0
    %445 = vmatprep.subr.mxu0 0.0
    %446 = vmatpush1.msra.mxu0 0.0
    %447 = vmatprep.subr.mxu0 0.0
    %448 = vmatpush1.msra.mxu0 0.0
    %449 = vmatprep.subr.mxu0 0.0
    %450 = vmatpush1.msra.mxu0 0.0
    %451 = vmatprep.subr.mxu0 0.0
    %452 = vmatpush1.msra.mxu0 0.0
    %453 = vmatprep.subr.mxu0 0.0
    %454 = vmatpush1.msra.mxu0 0.0
    %455 = vmatprep.subr.mxu0 0.0
    %456 = vmatpush1.msra.mxu0 0.0
    %457 = vmatprep.subr.mxu0 0.0
    %458 = vmatpush1.msra.mxu0 0.0
    %459 = vmatprep.mubr.f32.mxu0 0.0
    %460 = vmatmul.mubr.f32.gmra.mrb[0].mxu0 %v393
    %v461 = vpop.f32.mrb[0].mxu0
    %v462 = vadd.f32 0.0, %v461
    %v463 = vpop.f32.mrb[0].mxu0
    %464 = vdwg.mxu0
    %465 = vrot.lane.b32.xlu0 %v209, 64
    %v466 = vpop.permute.xlu0 %465
    %v469 = vsel %vm215, %v388, 0
    %471 = vmatprep.subr.mxu0 0.0
    %472 = vmatpush1.msra.mxu0 %v466
    %473 = vmatprep.subr.mxu0 0.0
    %474 = vmatpush1.msra.mxu0 0.0
    %475 = vmatprep.subr.mxu0 0.0
    %476 = vmatpush1.msra.mxu0 0.0
    %477 = vmatprep.subr.mxu0 0.0
    %478 = vmatpush1.msra.mxu0 0.0
    %479 = vmatprep.subr.mxu0 0.0
    %480 = vmatpush1.msra.mxu0 0.0
    %481 = vmatprep.subr.mxu0 0.0
    %482 = vmatpush1.msra.mxu0 0.0
    %483 = vmatprep.subr.mxu0 0.0
    %484 = vmatpush1.msra.mxu0 0.0
    %485 = vmatprep.subr.mxu0 0.0
    %486 = vmatpush1.msra.mxu0 0.0
    %487 = vmatprep.subr.mxu0 0.0
    %488 = vmatpush1.msra.mxu0 0.0
    %489 = vmatprep.subr.mxu0 0.0
    %490 = vmatpush1.msra.mxu0 0.0
    %491 = vmatprep.subr.mxu0 0.0
    %492 = vmatpush1.msra.mxu0 0.0
    %493 = vmatprep.subr.mxu0 0.0
    %494 = vmatpush1.msra.mxu0 0.0
    %495 = vmatprep.subr.mxu0 0.0
    %496 = vmatpush1.msra.mxu0 0.0
    %497 = vmatprep.subr.mxu0 0.0
    %498 = vmatpush1.msra.mxu0 0.0
    %499 = vmatprep.subr.mxu0 0.0
    %500 = vmatpush1.msra.mxu0 0.0
    %501 = vmatprep.subr.mxu0 0.0
    %502 = vmatpush1.msra.mxu0 0.0
    %503 = vmatprep.subr.mxu0 0.0
    %504 = vmatpush1.msra.mxu0 0.0
    %505 = vmatprep.subr.mxu0 0.0
    %506 = vmatpush1.msra.mxu0 0.0
    %507 = vmatprep.subr.mxu0 0.0
    %508 = vmatpush1.msra.mxu0 0.0
    %509 = vmatprep.subr.mxu0 0.0
    %510 = vmatpush1.msra.mxu0 0.0
    %511 = vmatprep.subr.mxu0 0.0
    %512 = vmatpush1.msra.mxu0 0.0
    %513 = vmatprep.subr.mxu0 0.0
    %514 = vmatpush1.msra.mxu0 0.0
    %515 = vmatprep.subr.mxu0 0.0
    %516 = vmatpush1.msra.mxu0 0.0
    %517 = vmatprep.subr.mxu0 0.0
    %518 = vmatpush1.msra.mxu0 0.0
    %519 = vmatprep.subr.mxu0 0.0
    %520 = vmatpush1.msra.mxu0 0.0
    %521 = vmatprep.subr.mxu0 0.0
    %522 = vmatpush1.msra.mxu0 0.0
    %523 = vmatprep.subr.mxu0 0.0
    %524 = vmatpush1.msra.mxu0 0.0
    %525 = vmatprep.subr.mxu0 0.0
    %526 = vmatpush1.msra.mxu0 0.0
    %527 = vmatprep.subr.mxu0 0.0
    %528 = vmatpush1.msra.mxu0 0.0
    %529 = vmatprep.subr.mxu0 0.0
    %530 = vmatpush1.msra.mxu0 0.0
    %531 = vmatprep.subr.mxu0 0.0
    %532 = vmatpush1.msra.mxu0 0.0
    %533 = vmatprep.subr.mxu0 0.0
    %534 = vmatpush1.msra.mxu0 0.0
    %535 = vmatprep.mubr.f32.mxu0 0.0
    %536 = vmatmul.mubr.f32.gmra.mrb[0].mxu0 %v469
    %v537 = vpop.f32.mrb[0].mxu0
    %v538 = vadd.f32 0.0, %v537
    %v539 = vpop.f32.mrb[0].mxu0
    %540 = vdwg.mxu0
    %541 = vrot.lane.b32.xlu0 %v206, 120
    %v542 = vpop.permute.xlu0 %541
    %543 = vrot.lane.b32.xlu0 %v206, 88
    %v544 = vpop.permute.xlu0 %543
    %v545 = vsel %vm215, %v542, 0
    %v547 = vsel %vm215, %v544, 0
    %549 = vmatprep.subr.mxu0 0.0
    %550 = vmatpush1.xpose.msra.mxu0 %v547
    %551 = vmatprep.subr.mxu0 0.0
    %552 = vmatpush1.xpose.msra.mxu0 0.0
    %553 = vmatprep.subr.mxu0 0.0
    %554 = vmatpush1.xpose.msra.mxu0 0.0
    %555 = vmatprep.subr.mxu0 0.0
    %556 = vmatpush1.xpose.msra.mxu0 0.0
    %557 = vmatprep.subr.mxu0 0.0
    %558 = vmatpush1.xpose.msra.mxu0 0.0
    %559 = vmatprep.subr.mxu0 0.0
    %560 = vmatpush1.xpose.msra.mxu0 0.0
    %561 = vmatprep.subr.mxu0 0.0
    %562 = vmatpush1.xpose.msra.mxu0 0.0
    %563 = vmatprep.subr.mxu0 0.0
    %564 = vmatpush1.xpose.msra.mxu0 0.0
    %565 = vmatprep.subr.mxu0 0.0
    %566 = vmatpush1.xpose.msra.mxu0 0.0
    %567 = vmatprep.subr.mxu0 0.0
    %568 = vmatpush1.xpose.msra.mxu0 0.0
    %569 = vmatprep.subr.mxu0 0.0
    %570 = vmatpush1.xpose.msra.mxu0 0.0
    %571 = vmatprep.subr.mxu0 0.0
    %572 = vmatpush1.xpose.msra.mxu0 0.0
    %573 = vmatprep.subr.mxu0 0.0
    %574 = vmatpush1.xpose.msra.mxu0 0.0
    %575 = vmatprep.subr.mxu0 0.0
    %576 = vmatpush1.xpose.msra.mxu0 0.0
    %577 = vmatprep.subr.mxu0 0.0
    %578 = vmatpush1.xpose.msra.mxu0 0.0
    %579 = vmatprep.subr.mxu0 0.0
    %580 = vmatpush1.xpose.msra.mxu0 0.0
    %581 = vmatprep.subr.mxu0 0.0
    %582 = vmatpush1.xpose.msra.mxu0 0.0
    %583 = vmatprep.subr.mxu0 0.0
    %584 = vmatpush1.xpose.msra.mxu0 0.0
    %585 = vmatprep.subr.mxu0 0.0
    %586 = vmatpush1.xpose.msra.mxu0 0.0
    %587 = vmatprep.subr.mxu0 0.0
    %588 = vmatpush1.xpose.msra.mxu0 0.0
    %589 = vmatprep.subr.mxu0 0.0
    %590 = vmatpush1.xpose.msra.mxu0 0.0
    %591 = vmatprep.subr.mxu0 0.0
    %592 = vmatpush1.xpose.msra.mxu0 0.0
    %593 = vmatprep.subr.mxu0 0.0
    %594 = vmatpush1.xpose.msra.mxu0 0.0
    %595 = vmatprep.subr.mxu0 0.0
    %596 = vmatpush1.xpose.msra.mxu0 0.0
    %597 = vmatprep.subr.mxu0 0.0
    %598 = vmatpush1.xpose.msra.mxu0 0.0
    %599 = vmatprep.subr.mxu0 0.0
    %600 = vmatpush1.xpose.msra.mxu0 0.0
    %601 = vmatprep.subr.mxu0 0.0
    %602 = vmatpush1.xpose.msra.mxu0 0.0
    %603 = vmatprep.subr.mxu0 0.0
    %604 = vmatpush1.xpose.msra.mxu0 0.0
    %605 = vmatprep.subr.mxu0 0.0
    %606 = vmatpush1.xpose.msra.mxu0 0.0
    %607 = vmatprep.subr.mxu0 0.0
    %608 = vmatpush1.xpose.msra.mxu0 0.0
    %609 = vmatprep.subr.mxu0 0.0
    %610 = vmatpush1.xpose.msra.mxu0 0.0
    %611 = vmatprep.subr.mxu0 0.0
    %612 = vmatpush1.xpose.msra.mxu0 0.0
    %613 = vmatprep.mubr.f32.mxu0 0.0
    %614 = vmatmul.mubr.f32.gmra.mrb[0].mxu0 %v545
    %v615 = vpop.f32.mrb[0].mxu0
    %v616 = vadd.f32 0.0, %v615
    %v617 = vpop.f32.mrb[0].mxu0
    %618 = vdwg.mxu0
    %619 = vrot.lane.b32.xlu0 %v209, 120
    %v620 = vpop.permute.xlu0 %619
    %621 = vrot.lane.b32.xlu0 %v209, 88
    %v622 = vpop.permute.xlu0 %621
    %v623 = vsel %vm215, %v620, 0
    %v625 = vsel %vm215, %v622, 0
    %627 = vmatprep.subr.mxu0 0.0
    %628 = vmatpush1.xpose.msra.mxu0 %v625
    %629 = vmatprep.subr.mxu0 0.0
    %630 = vmatpush1.xpose.msra.mxu0 0.0
    %631 = vmatprep.subr.mxu0 0.0
    %632 = vmatpush1.xpose.msra.mxu0 0.0
    %633 = vmatprep.subr.mxu0 0.0
    %634 = vmatpush1.xpose.msra.mxu0 0.0
    %635 = vmatprep.subr.mxu0 0.0
    %636 = vmatpush1.xpose.msra.mxu0 0.0
    %637 = vmatprep.subr.mxu0 0.0
    %638 = vmatpush1.xpose.msra.mxu0 0.0
    %639 = vmatprep.subr.mxu0 0.0
    %640 = vmatpush1.xpose.msra.mxu0 0.0
    %641 = vmatprep.subr.mxu0 0.0
    %642 = vmatpush1.xpose.msra.mxu0 0.0
    %643 = vmatprep.subr.mxu0 0.0
    %644 = vmatpush1.xpose.msra.mxu0 0.0
    %645 = vmatprep.subr.mxu0 0.0
    %646 = vmatpush1.xpose.msra.mxu0 0.0
    %647 = vmatprep.subr.mxu0 0.0
    %648 = vmatpush1.xpose.msra.mxu0 0.0
    %649 = vmatprep.subr.mxu0 0.0
    %650 = vmatpush1.xpose.msra.mxu0 0.0
    %651 = vmatprep.subr.mxu0 0.0
    %652 = vmatpush1.xpose.msra.mxu0 0.0
    %653 = vmatprep.subr.mxu0 0.0
    %654 = vmatpush1.xpose.msra.mxu0 0.0
    %655 = vmatprep.subr.mxu0 0.0
    %656 = vmatpush1.xpose.msra.mxu0 0.0
    %657 = vmatprep.subr.mxu0 0.0
    %658 = vmatpush1.xpose.msra.mxu0 0.0
    %659 = vmatprep.subr.mxu0 0.0
    %660 = vmatpush1.xpose.msra.mxu0 0.0
    %661 = vmatprep.subr.mxu0 0.0
    %662 = vmatpush1.xpose.msra.mxu0 0.0
    %663 = vmatprep.subr.mxu0 0.0
    %664 = vmatpush1.xpose.msra.mxu0 0.0
    %665 = vmatprep.subr.mxu0 0.0
    %666 = vmatpush1.xpose.msra.mxu0 0.0
    %667 = vmatprep.subr.mxu0 0.0
    %668 = vmatpush1.xpose.msra.mxu0 0.0
    %669 = vmatprep.subr.mxu0 0.0
    %670 = vmatpush1.xpose.msra.mxu0 0.0
    %671 = vmatprep.subr.mxu0 0.0
    %672 = vmatpush1.xpose.msra.mxu0 0.0
    %673 = vmatprep.subr.mxu0 0.0
    %674 = vmatpush1.xpose.msra.mxu0 0.0
    %675 = vmatprep.subr.mxu0 0.0
    %676 = vmatpush1.xpose.msra.mxu0 0.0
    %677 = vmatprep.subr.mxu0 0.0
    %678 = vmatpush1.xpose.msra.mxu0 0.0
    %679 = vmatprep.subr.mxu0 0.0
    %680 = vmatpush1.xpose.msra.mxu0 0.0
    %681 = vmatprep.subr.mxu0 0.0
    %682 = vmatpush1.xpose.msra.mxu0 0.0
    %683 = vmatprep.subr.mxu0 0.0
    %684 = vmatpush1.xpose.msra.mxu0 0.0
    %685 = vmatprep.subr.mxu0 0.0
    %686 = vmatpush1.xpose.msra.mxu0 0.0
    %687 = vmatprep.subr.mxu0 0.0
    %688 = vmatpush1.xpose.msra.mxu0 0.0
    %689 = vmatprep.subr.mxu0 0.0
    %690 = vmatpush1.xpose.msra.mxu0 0.0
    %691 = vmatprep.mubr.f32.mxu0 0.0
    %692 = vmatmul.mubr.f32.gmra.mrb[0].mxu0 %v623
    %v693 = vpop.f32.mrb[0].mxu0
    %v694 = vadd.f32 0.0, %v693
    %v695 = vpop.f32.mrb[0].mxu0
    %696 = vdwg.mxu0
    %v697 = vsel %vm215, %v616, -inf
    %698 = vmax.xlane.f32.xlu0 %v697
    %v699 = vpop.xlane.xlu0 %698
    %v700 = vsel %vm215, %v694, -inf
    %701 = vmax.xlane.f32.xlu0 %v700
    %v702 = vpop.xlane.xlu0 %701
    %v703 = vsub.f32 %v616, %v699
    %v704 = vsub.f32 %v694, %v702
    %v705 = vmul.f32 %v703, 1.442695
    %v706 = vpow.pop %v705
    %v707 = vmul.f32 %v704, 1.442695
    %v708 = vpow.pop %v707
    %v709 = vsel %vm215, %v706, 0.0
    %710 = vadd.xlane.f32.xlu0 %v709
    %v711 = vpop.xlane.xlu0 %710
    %v712 = vsel %vm215, %v708, 0.0
    %713 = vadd.xlane.f32.xlu0 %v712
    %v714 = vpop.xlane.xlu0 %713
    %v715 = vrcp.pop %v711
    %v716 = vrcp.pop %v714
    %v717 = vmul.f32 %v706, %v715
    %v718 = vmul.f32 %v708, %v716
    %719 = vrot.lane.b32.xlu0 %v206, 56
    %v720 = vpop.permute.xlu0 %719
    %v723 = vsel %vm215, %v717, 0
    %725 = vmatprep.subr.mxu0 0.0
    %726 = vmatpush1.msra.mxu0 %v720
    %727 = vmatprep.subr.mxu0 0.0
    %728 = vmatpush1.msra.mxu0 0.0
    %729 = vmatprep.subr.mxu0 0.0
    %730 = vmatpush1.msra.mxu0 0.0
    %731 = vmatprep.subr.mxu0 0.0
    %732 = vmatpush1.msra.mxu0 0.0
    %733 = vmatprep.subr.mxu0 0.0
    %734 = vmatpush1.msra.mxu0 0.0
    %735 = vmatprep.subr.mxu0 0.0
    %736 = vmatpush1.msra.mxu0 0.0
    %737 = vmatprep.subr.mxu0 0.0
    %738 = vmatpush1.msra.mxu0 0.0
    %739 = vmatprep.subr.mxu0 0.0
    %740 = vmatpush1.msra.mxu0 0.0
    %741 = vmatprep.subr.mxu0 0.0
    %742 = vmatpush1.msra.mxu0 0.0
    %743 = vmatprep.subr.mxu0 0.0
    %744 = vmatpush1.msra.mxu0 0.0
    %745 = vmatprep.subr.mxu0 0.0
    %746 = vmatpush1.msra.mxu0 0.0
    %747 = vmatprep.subr.mxu0 0.0
    %748 = vmatpush1.msra.mxu0 0.0
    %749 = vmatprep.subr.mxu0 0.0
    %750 = vmatpush1.msra.mxu0 0.0
    %751 = vmatprep.subr.mxu0 0.0
    %752 = vmatpush1.msra.mxu0 0.0
    %753 = vmatprep.subr.mxu0 0.0
    %754 = vmatpush1.msra.mxu0 0.0
    %755 = vmatprep.subr.mxu0 0.0
    %756 = vmatpush1.msra.mxu0 0.0
    %757 = vmatprep.subr.mxu0 0.0
    %758 = vmatpush1.msra.mxu0 0.0
    %759 = vmatprep.subr.mxu0 0.0
    %760 = vmatpush1.msra.mxu0 0.0
    %761 = vmatprep.subr.mxu0 0.0
    %762 = vmatpush1.msra.mxu0 0.0
    %763 = vmatprep.subr.mxu0 0.0
    %764 = vmatpush1.msra.mxu0 0.0
    %765 = vmatprep.subr.mxu0 0.0
    %766 = vmatpush1.msra.mxu0 0.0
    %767 = vmatprep.subr.mxu0 0.0
    %768 = vmatpush1.msra.mxu0 0.0
    %769 = vmatprep.subr.mxu0 0.0
    %770 = vmatpush1.msra.mxu0 0.0
    %771 = vmatprep.subr.mxu0 0.0
    %772 = vmatpush1.msra.mxu0 0.0
    %773 = vmatprep.subr.mxu0 0.0
    %774 = vmatpush1.msra.mxu0 0.0
    %775 = vmatprep.subr.mxu0 0.0
    %776 = vmatpush1.msra.mxu0 0.0
    %777 = vmatprep.subr.mxu0 0.0
    %778 = vmatpush1.msra.mxu0 0.0
    %779 = vmatprep.subr.mxu0 0.0
    %780 = vmatpush1.msra.mxu0 0.0
    %781 = vmatprep.subr.mxu0 0.0
    %782 = vmatpush1.msra.mxu0 0.0
    %783 = vmatprep.subr.mxu0 0.0
    %784 = vmatpush1.msra.mxu0 0.0
    %785 = vmatprep.subr.mxu0 0.0
    %786 = vmatpush1.msra.mxu0 0.0
    %787 = vmatprep.subr.mxu0 0.0
    %788 = vmatpush1.msra.mxu0 0.0
    %789 = vmatprep.mubr.f32.mxu0 0.0
    %790 = vmatmul.mubr.f32.gmra.mrb[0].mxu0 %v723
    %v791 = vpop.f32.mrb[0].mxu0
    %v792 = vadd.f32 0.0, %v791
    %v793 = vpop.f32.mrb[0].mxu0
    %794 = vdwg.mxu0
    %795 = vrot.lane.b32.xlu0 %v209, 56
    %v796 = vpop.permute.xlu0 %795
    %v799 = vsel %vm215, %v718, 0
    %801 = vmatprep.subr.mxu0 0.0
    %802 = vmatpush1.msra.mxu0 %v796
    %803 = vmatprep.subr.mxu0 0.0
    %804 = vmatpush1.msra.mxu0 0.0
    %805 = vmatprep.subr.mxu0 0.0
    %806 = vmatpush1.msra.mxu0 0.0
    %807 = vmatprep.subr.mxu0 0.0
    %808 = vmatpush1.msra.mxu0 0.0
    %809 = vmatprep.subr.mxu0 0.0
    %810 = vmatpush1.msra.mxu0 0.0
    %811 = vmatprep.subr.mxu0 0.0
    %812 = vmatpush1.msra.mxu0 0.0
    %813 = vmatprep.subr.mxu0 0.0
    %814 = vmatpush1.msra.mxu0 0.0
    %815 = vmatprep.subr.mxu0 0.0
    %816 = vmatpush1.msra.mxu0 0.0
    %817 = vmatprep.subr.mxu0 0.0
    %818 = vmatpush1.msra.mxu0 0.0
    %819 = vmatprep.subr.mxu0 0.0
    %820 = vmatpush1.msra.mxu0 0.0
    %821 = vmatprep.subr.mxu0 0.0
    %822 = vmatpush1.msra.mxu0 0.0
    %823 = vmatprep.subr.mxu0 0.0
    %824 = vmatpush1.msra.mxu0 0.0
    %825 = vmatprep.subr.mxu0 0.0
    %826 = vmatpush1.msra.mxu0 0.0
    %827 = vmatprep.subr.mxu0 0.0
    %828 = vmatpush1.msra.mxu0 0.0
    %829 = vmatprep.subr.mxu0 0.0
    %830 = vmatpush1.msra.mxu0 0.0
    %831 = vmatprep.subr.mxu0 0.0
    %832 = vmatpush1.msra.mxu0 0.0
    %833 = vmatprep.subr.mxu0 0.0
    %834 = vmatpush1.msra.mxu0 0.0
    %835 = vmatprep.subr.mxu0 0.0
    %836 = vmatpush1.msra.mxu0 0.0
    %837 = vmatprep.subr.mxu0 0.0
    %838 = vmatpush1.msra.mxu0 0.0
    %839 = vmatprep.subr.mxu0 0.0
    %840 = vmatpush1.msra.mxu0 0.0
    %841 = vmatprep.subr.mxu0 0.0
    %842 = vmatpush1.msra.mxu0 0.0
    %843 = vmatprep.subr.mxu0 0.0
    %844 = vmatpush1.msra.mxu0 0.0
    %845 = vmatprep.subr.mxu0 0.0
    %846 = vmatpush1.msra.mxu0 0.0
    %847 = vmatprep.subr.mxu0 0.0
    %848 = vmatpush1.msra.mxu0 0.0
    %849 = vmatprep.subr.mxu0 0.0
    %850 = vmatpush1.msra.mxu0 0.0
    %851 = vmatprep.subr.mxu0 0.0
    %852 = vmatpush1.msra.mxu0 0.0
    %853 = vmatprep.subr.mxu0 0.0
    %854 = vmatpush1.msra.mxu0 0.0
    %855 = vmatprep.subr.mxu0 0.0
    %856 = vmatpush1.msra.mxu0 0.0
    %857 = vmatprep.subr.mxu0 0.0
    %858 = vmatpush1.msra.mxu0 0.0
    %859 = vmatprep.subr.mxu0 0.0
    %860 = vmatpush1.msra.mxu0 0.0
    %861 = vmatprep.subr.mxu0 0.0
    %862 = vmatpush1.msra.mxu0 0.0
    %863 = vmatprep.subr.mxu0 0.0
    %864 = vmatpush1.msra.mxu0 0.0
    %865 = vmatprep.mubr.f32.mxu0 0.0
    %866 = vmatmul.mubr.f32.gmra.mrb[0].mxu0 %v799
    %v867 = vpop.f32.mrb[0].mxu0
    %v868 = vadd.f32 0.0, %v867
    %v869 = vpop.f32.mrb[0].mxu0
    %870 = vdwg.mxu0
    %871 = vrot.lane.b32.xlu0 %v206, 112
    %v872 = vpop.permute.xlu0 %871
    %873 = vrot.lane.b32.xlu0 %v206, 80
    %v874 = vpop.permute.xlu0 %873
    %v875 = vsel %vm215, %v872, 0
    %v877 = vsel %vm215, %v874, 0
    %879 = vmatprep.subr.mxu0 0.0
    %880 = vmatpush1.xpose.msra.mxu0 %v877
    %881 = vmatprep.subr.mxu0 0.0
    %882 = vmatpush1.xpose.msra.mxu0 0.0
    %883 = vmatprep.subr.mxu0 0.0
    %884 = vmatpush1.xpose.msra.mxu0 0.0
    %885 = vmatprep.subr.mxu0 0.0
    %886 = vmatpush1.xpose.msra.mxu0 0.0
    %887 = vmatprep.subr.mxu0 0.0
    %888 = vmatpush1.xpose.msra.mxu0 0.0
    %889 = vmatprep.subr.mxu0 0.0
    %890 = vmatpush1.xpose.msra.mxu0 0.0
    %891 = vmatprep.subr.mxu0 0.0
    %892 = vmatpush1.xpose.msra.mxu0 0.0
    %893 = vmatprep.subr.mxu0 0.0
    %894 = vmatpush1.xpose.msra.mxu0 0.0
    %895 = vmatprep.subr.mxu0 0.0
    %896 = vmatpush1.xpose.msra.mxu0 0.0
    %897 = vmatprep.subr.mxu0 0.0
    %898 = vmatpush1.xpose.msra.mxu0 0.0
    %899 = vmatprep.subr.mxu0 0.0
    %900 = vmatpush1.xpose.msra.mxu0 0.0
    %901 = vmatprep.subr.mxu0 0.0
    %902 = vmatpush1.xpose.msra.mxu0 0.0
    %903 = vmatprep.subr.mxu0 0.0
    %904 = vmatpush1.xpose.msra.mxu0 0.0
    %905 = vmatprep.subr.mxu0 0.0
    %906 = vmatpush1.xpose.msra.mxu0 0.0
    %907 = vmatprep.subr.mxu0 0.0
    %908 = vmatpush1.xpose.msra.mxu0 0.0
    %909 = vmatprep.subr.mxu0 0.0
    %910 = vmatpush1.xpose.msra.mxu0 0.0
    %911 = vmatprep.subr.mxu0 0.0
    %912 = vmatpush1.xpose.msra.mxu0 0.0
    %913 = vmatprep.subr.mxu0 0.0
    %914 = vmatpush1.xpose.msra.mxu0 0.0
    %915 = vmatprep.subr.mxu0 0.0
    %916 = vmatpush1.xpose.msra.mxu0 0.0
    %917 = vmatprep.subr.mxu0 0.0
    %918 = vmatpush1.xpose.msra.mxu0 0.0
    %919 = vmatprep.subr.mxu0 0.0
    %920 = vmatpush1.xpose.msra.mxu0 0.0
    %921 = vmatprep.subr.mxu0 0.0
    %922 = vmatpush1.xpose.msra.mxu0 0.0
    %923 = vmatprep.subr.mxu0 0.0
    %924 = vmatpush1.xpose.msra.mxu0 0.0
    %925 = vmatprep.subr.mxu0 0.0
    %926 = vmatpush1.xpose.msra.mxu0 0.0
    %927 = vmatprep.subr.mxu0 0.0
    %928 = vmatpush1.xpose.msra.mxu0 0.0
    %929 = vmatprep.subr.mxu0 0.0
    %930 = vmatpush1.xpose.msra.mxu0 0.0
    %931 = vmatprep.subr.mxu0 0.0
    %932 = vmatpush1.xpose.msra.mxu0 0.0
    %933 = vmatprep.subr.mxu0 0.0
    %934 = vmatpush1.xpose.msra.mxu0 0.0
    %935 = vmatprep.subr.mxu0 0.0
    %936 = vmatpush1.xpose.msra.mxu0 0.0
    %937 = vmatprep.subr.mxu0 0.0
    %938 = vmatpush1.xpose.msra.mxu0 0.0
    %939 = vmatprep.subr.mxu0 0.0
    %940 = vmatpush1.xpose.msra.mxu0 0.0
    %941 = vmatprep.subr.mxu0 0.0
    %942 = vmatpush1.xpose.msra.mxu0 0.0
    %943 = vmatprep.mubr.f32.mxu0 0.0
    %944 = vmatmul.mubr.f32.gmra.mrb[0].mxu0 %v875
    %v945 = vpop.f32.mrb[0].mxu0
    %v946 = vadd.f32 0.0, %v945
    %v947 = vpop.f32.mrb[0].mxu0
    %948 = vdwg.mxu0
    %949 = vrot.lane.b32.xlu0 %v209, 112
    %v950 = vpop.permute.xlu0 %949
    %951 = vrot.lane.b32.xlu0 %v209, 80
    %v952 = vpop.permute.xlu0 %951
    %v953 = vsel %vm215, %v950, 0
    %v955 = vsel %vm215, %v952, 0
    %957 = vmatprep.subr.mxu0 0.0
    %958 = vmatpush1.xpose.msra.mxu0 %v955
    %959 = vmatprep.subr.mxu0 0.0
    %960 = vmatpush1.xpose.msra.mxu0 0.0
    %961 = vmatprep.subr.mxu0 0.0
    %962 = vmatpush1.xpose.msra.mxu0 0.0
    %963 = vmatprep.subr.mxu0 0.0
    %964 = vmatpush1.xpose.msra.mxu0 0.0
    %965 = vmatprep.subr.mxu0 0.0
    %966 = vmatpush1.xpose.msra.mxu0 0.0
    %967 = vmatprep.subr.mxu0 0.0
    %968 = vmatpush1.xpose.msra.mxu0 0.0
    %969 = vmatprep.subr.mxu0 0.0
    %970 = vmatpush1.xpose.msra.mxu0 0.0
    %971 = vmatprep.subr.mxu0 0.0
    %972 = vmatpush1.xpose.msra.mxu0 0.0
    %973 = vmatprep.subr.mxu0 0.0
    %974 = vmatpush1.xpose.msra.mxu0 0.0
    %975 = vmatprep.subr.mxu0 0.0
    %976 = vmatpush1.xpose.msra.mxu0 0.0
    %977 = vmatprep.subr.mxu0 0.0
    %978 = vmatpush1.xpose.msra.mxu0 0.0
    %979 = vmatprep.subr.mxu0 0.0
    %980 = vmatpush1.xpose.msra.mxu0 0.0
    %981 = vmatprep.subr.mxu0 0.0
    %982 = vmatpush1.xpose.msra.mxu0 0.0
    %983 = vmatprep.subr.mxu0 0.0
    %984 = vmatpush1.xpose.msra.mxu0 0.0
    %985 = vmatprep.subr.mxu0 0.0
    %986 = vmatpush1.xpose.msra.mxu0 0.0
    %987 = vmatprep.subr.mxu0 0.0
    %988 = vmatpush1.xpose.msra.mxu0 0.0
    %989 = vmatprep.subr.mxu0 0.0
    %990 = vmatpush1.xpose.msra.mxu0 0.0
    %991 = vmatprep.subr.mxu0 0.0
    %992 = vmatpush1.xpose.msra.mxu0 0.0
    %993 = vmatprep.subr.mxu0 0.0
    %994 = vmatpush1.xpose.msra.mxu0 0.0
    %995 = vmatprep.subr.mxu0 0.0
    %996 = vmatpush1.xpose.msra.mxu0 0.0
    %997 = vmatprep.subr.mxu0 0.0
    %998 = vmatpush1.xpose.msra.mxu0 0.0
    %999 = vmatprep.subr.mxu0 0.0
    %1000 = vmatpush1.xpose.msra.mxu0 0.0
    %1001 = vmatprep.subr.mxu0 0.0
    %1002 = vmatpush1.xpose.msra.mxu0 0.0
    %1003 = vmatprep.subr.mxu0 0.0
    %1004 = vmatpush1.xpose.msra.mxu0 0.0
    %1005 = vmatprep.subr.mxu0 0.0
    %1006 = vmatpush1.xpose.msra.mxu0 0.0
    %1007 = vmatprep.subr.mxu0 0.0
    %1008 = vmatpush1.xpose.msra.mxu0 0.0
    %1009 = vmatprep.subr.mxu0 0.0
    %1010 = vmatpush1.xpose.msra.mxu0 0.0
    %1011 = vmatprep.subr.mxu0 0.0
    %1012 = vmatpush1.xpose.msra.mxu0 0.0
    %1013 = vmatprep.subr.mxu0 0.0
    %1014 = vmatpush1.xpose.msra.mxu0 0.0
    %1015 = vmatprep.subr.mxu0 0.0
    %1016 = vmatpush1.xpose.msra.mxu0 0.0
    %1017 = vmatprep.subr.mxu0 0.0
    %1018 = vmatpush1.xpose.msra.mxu0 0.0
    %1019 = vmatprep.subr.mxu0 0.0
    %1020 = vmatpush1.xpose.msra.mxu0 0.0
    %1021 = vmatprep.mubr.f32.mxu0 0.0
    %1022 = vmatmul.mubr.f32.gmra.mrb[0].mxu0 %v953
    %v1023 = vpop.f32.mrb[0].mxu0
    %v1024 = vadd.f32 0.0, %v1023
    %v1025 = vpop.f32.mrb[0].mxu0
    %1026 = vdwg.mxu0
    %v1027 = vsel %vm215, %v946, -inf
    %1028 = vmax.xlane.f32.xlu0 %v1027
    %v1029 = vpop.xlane.xlu0 %1028
    %v1030 = vsel %vm215, %v1024, -inf
    %1031 = vmax.xlane.f32.xlu0 %v1030
    %v1032 = vpop.xlane.xlu0 %1031
    %v1033 = vsub.f32 %v946, %v1029
    %v1034 = vsub.f32 %v1024, %v1032
    %v1035 = vmul.f32 %v1033, 1.442695
    %v1036 = vpow.pop %v1035
    %v1037 = vmul.f32 %v1034, 1.442695
    %v1038 = vpow.pop %v1037
    %v1039 = vsel %vm215, %v1036, 0.0
    %1040 = vadd.xlane.f32.xlu0 %v1039
    %v1041 = vpop.xlane.xlu0 %1040
    %v1042 = vsel %vm215, %v1038, 0.0
    %1043 = vadd.xlane.f32.xlu0 %v1042
    %v1044 = vpop.xlane.xlu0 %1043
    %v1045 = vrcp.pop %v1041
    %v1046 = vrcp.pop %v1044
    %v1047 = vmul.f32 %v1036, %v1045
    %v1048 = vmul.f32 %v1038, %v1046
    %1049 = vrot.lane.b32.xlu0 %v206, 48
    %v1050 = vpop.permute.xlu0 %1049
    %v1053 = vsel %vm215, %v1047, 0
    %1055 = vmatprep.subr.mxu0 0.0
    %1056 = vmatpush1.msra.mxu0 %v1050
    %1057 = vmatprep.subr.mxu0 0.0
    %1058 = vmatpush1.msra.mxu0 0.0
    %1059 = vmatprep.subr.mxu0 0.0
    %1060 = vmatpush1.msra.mxu0 0.0
    %1061 = vmatprep.subr.mxu0 0.0
    %1062 = vmatpush1.msra.mxu0 0.0
    %1063 = vmatprep.subr.mxu0 0.0
    %1064 = vmatpush1.msra.mxu0 0.0
    %1065 = vmatprep.subr.mxu0 0.0
    %1066 = vmatpush1.msra.mxu0 0.0
    %1067 = vmatprep.subr.mxu0 0.0
    %1068 = vmatpush1.msra.mxu0 0.0
    %1069 = vmatprep.subr.mxu0 0.0
    %1070 = vmatpush1.msra.mxu0 0.0
    %1071 = vmatprep.subr.mxu0 0.0
    %1072 = vmatpush1.msra.mxu0 0.0
    %1073 = vmatprep.subr.mxu0 0.0
    %1074 = vmatpush1.msra.mxu0 0.0
    %1075 = vmatprep.subr.mxu0 0.0
    %1076 = vmatpush1.msra.mxu0 0.0
    %1077 = vmatprep.subr.mxu0 0.0
    %1078 = vmatpush1.msra.mxu0 0.0
    %1079 = vmatprep.subr.mxu0 0.0
    %1080 = vmatpush1.msra.mxu0 0.0
    %1081 = vmatprep.subr.mxu0 0.0
    %1082 = vmatpush1.msra.mxu0 0.0
    %1083 = vmatprep.subr.mxu0 0.0
    %1084 = vmatpush1.msra.mxu0 0.0
    %1085 = vmatprep.subr.mxu0 0.0
    %1086 = vmatpush1.msra.mxu0 0.0
    %1087 = vmatprep.subr.mxu0 0.0
    %1088 = vmatpush1.msra.mxu0 0.0
    %1089 = vmatprep.subr.mxu0 0.0
    %1090 = vmatpush1.msra.mxu0 0.0
    %1091 = vmatprep.subr.mxu0 0.0
    %1092 = vmatpush1.msra.mxu0 0.0
    %1093 = vmatprep.subr.mxu0 0.0
    %1094 = vmatpush1.msra.mxu0 0.0
    %1095 = vmatprep.subr.mxu0 0.0
    %1096 = vmatpush1.msra.mxu0 0.0
    %1097 = vmatprep.subr.mxu0 0.0
    %1098 = vmatpush1.msra.mxu0 0.0
    %1099 = vmatprep.subr.mxu0 0.0
    %1100 = vmatpush1.msra.mxu0 0.0
    %1101 = vmatprep.subr.mxu0 0.0
    %1102 = vmatpush1.msra.mxu0 0.0
    %1103 = vmatprep.subr.mxu0 0.0
    %1104 = vmatpush1.msra.mxu0 0.0
    %1105 = vmatprep.subr.mxu0 0.0
    %1106 = vmatpush1.msra.mxu0 0.0
    %1107 = vmatprep.subr.mxu0 0.0
    %1108 = vmatpush1.msra.mxu0 0.0
    %1109 = vmatprep.subr.mxu0 0.0
    %1110 = vmatpush1.msra.mxu0 0.0
    %1111 = vmatprep.subr.mxu0 0.0
    %1112 = vmatpush1.msra.mxu0 0.0
    %1113 = vmatprep.subr.mxu0 0.0
    %1114 = vmatpush1.msra.mxu0 0.0
    %1115 = vmatprep.subr.mxu0 0.0
    %1116 = vmatpush1.msra.mxu0 0.0
    %1117 = vmatprep.subr.mxu0 0.0
    %1118 = vmatpush1.msra.mxu0 0.0
    %1119 = vmatprep.mubr.f32.mxu0 0.0
    %1120 = vmatmul.mubr.f32.gmra.mrb[0].mxu0 %v1053
    %v1121 = vpop.f32.mrb[0].mxu0
    %v1122 = vadd.f32 0.0, %v1121
    %v1123 = vpop.f32.mrb[0].mxu0
    %1124 = vdwg.mxu0
    %1125 = vrot.lane.b32.xlu0 %v209, 48
    %v1126 = vpop.permute.xlu0 %1125
    %v1129 = vsel %vm215, %v1048, 0
    %1131 = vmatprep.subr.mxu0 0.0
    %1132 = vmatpush1.msra.mxu0 %v1126
    %1133 = vmatprep.subr.mxu0 0.0
    %1134 = vmatpush1.msra.mxu0 0.0
    %1135 = vmatprep.subr.mxu0 0.0
    %1136 = vmatpush1.msra.mxu0 0.0
    %1137 = vmatprep.subr.mxu0 0.0
    %1138 = vmatpush1.msra.mxu0 0.0
    %1139 = vmatprep.subr.mxu0 0.0
    %1140 = vmatpush1.msra.mxu0 0.0
    %1141 = vmatprep.subr.mxu0 0.0
    %1142 = vmatpush1.msra.mxu0 0.0
    %1143 = vmatprep.subr.mxu0 0.0
    %1144 = vmatpush1.msra.mxu0 0.0
    %1145 = vmatprep.subr.mxu0 0.0
    %1146 = vmatpush1.msra.mxu0 0.0
    %1147 = vmatprep.subr.mxu0 0.0
    %1148 = vmatpush1.msra.mxu0 0.0
    %1149 = vmatprep.subr.mxu0 0.0
    %1150 = vmatpush1.msra.mxu0 0.0
    %1151 = vmatprep.subr.mxu0 0.0
    %1152 = vmatpush1.msra.mxu0 0.0
    %1153 = vmatprep.subr.mxu0 0.0
    %1154 = vmatpush1.msra.mxu0 0.0
    %1155 = vmatprep.subr.mxu0 0.0
    %1156 = vmatpush1.msra.mxu0 0.0
    %1157 = vmatprep.subr.mxu0 0.0
    %1158 = vmatpush1.msra.mxu0 0.0
    %1159 = vmatprep.subr.mxu0 0.0
    %1160 = vmatpush1.msra.mxu0 0.0
    %1161 = vmatprep.subr.mxu0 0.0
    %1162 = vmatpush1.msra.mxu0 0.0
    %1163 = vmatprep.subr.mxu0 0.0
    %1164 = vmatpush1.msra.mxu0 0.0
    %1165 = vmatprep.subr.mxu0 0.0
    %1166 = vmatpush1.msra.mxu0 0.0
    %1167 = vmatprep.subr.mxu0 0.0
    %1168 = vmatpush1.msra.mxu0 0.0
    %1169 = vmatprep.subr.mxu0 0.0
    %1170 = vmatpush1.msra.mxu0 0.0
    %1171 = vmatprep.subr.mxu0 0.0
    %1172 = vmatpush1.msra.mxu0 0.0
    %1173 = vmatprep.subr.mxu0 0.0
    %1174 = vmatpush1.msra.mxu0 0.0
    %1175 = vmatprep.subr.mxu0 0.0
    %1176 = vmatpush1.msra.mxu0 0.0
    %1177 = vmatprep.subr.mxu0 0.0
    %1178 = vmatpush1.msra.mxu0 0.0
    %1179 = vmatprep.subr.mxu0 0.0
    %1180 = vmatpush1.msra.mxu0 0.0
    %1181 = vmatprep.subr.mxu0 0.0
    %1182 = vmatpush1.msra.mxu0 0.0
    %1183 = vmatprep.subr.mxu0 0.0
    %1184 = vmatpush1.msra.mxu0 0.0
    %1185 = vmatprep.subr.mxu0 0.0
    %1186 = vmatpush1.msra.mxu0 0.0
    %1187 = vmatprep.subr.mxu0 0.0
    %1188 = vmatpush1.msra.mxu0 0.0
    %1189 = vmatprep.subr.mxu0 0.0
    %1190 = vmatpush1.msra.mxu0 0.0
    %1191 = vmatprep.subr.mxu0 0.0
    %1192 = vmatpush1.msra.mxu0 0.0
    %1193 = vmatprep.subr.mxu0 0.0
    %1194 = vmatpush1.msra.mxu0 0.0
    %1195 = vmatprep.mubr.f32.mxu0 0.0
    %1196 = vmatmul.mubr.f32.gmra.mrb[0].mxu0 %v1129
    %v1197 = vpop.f32.mrb[0].mxu0
    %v1198 = vadd.f32 0.0, %v1197
    %v1199 = vpop.f32.mrb[0].mxu0
    %1200 = vdwg.mxu0
    %1201 = vrot.lane.b32.xlu0 %v206, 104
    %v1202 = vpop.permute.xlu0 %1201
    %1203 = vrot.lane.b32.xlu0 %v206, 72
    %v1204 = vpop.permute.xlu0 %1203
    %v1205 = vsel %vm215, %v1202, 0
    %v1207 = vsel %vm215, %v1204, 0
    %1209 = vmatprep.subr.mxu0 0.0
    %1210 = vmatpush1.xpose.msra.mxu0 %v1207
    %1211 = vmatprep.subr.mxu0 0.0
    %1212 = vmatpush1.xpose.msra.mxu0 0.0
    %1213 = vmatprep.subr.mxu0 0.0
    %1214 = vmatpush1.xpose.msra.mxu0 0.0
    %1215 = vmatprep.subr.mxu0 0.0
    %1216 = vmatpush1.xpose.msra.mxu0 0.0
    %1217 = vmatprep.subr.mxu0 0.0
    %1218 = vmatpush1.xpose.msra.mxu0 0.0
    %1219 = vmatprep.subr.mxu0 0.0
    %1220 = vmatpush1.xpose.msra.mxu0 0.0
    %1221 = vmatprep.subr.mxu0 0.0
    %1222 = vmatpush1.xpose.msra.mxu0 0.0
    %1223 = vmatprep.subr.mxu0 0.0
    %1224 = vmatpush1.xpose.msra.mxu0 0.0
    %1225 = vmatprep.subr.mxu0 0.0
    %1226 = vmatpush1.xpose.msra.mxu0 0.0
    %1227 = vmatprep.subr.mxu0 0.0
    %1228 = vmatpush1.xpose.msra.mxu0 0.0
    %1229 = vmatprep.subr.mxu0 0.0
    %1230 = vmatpush1.xpose.msra.mxu0 0.0
    %1231 = vmatprep.subr.mxu0 0.0
    %1232 = vmatpush1.xpose.msra.mxu0 0.0
    %1233 = vmatprep.subr.mxu0 0.0
    %1234 = vmatpush1.xpose.msra.mxu0 0.0
    %1235 = vmatprep.subr.mxu0 0.0
    %1236 = vmatpush1.xpose.msra.mxu0 0.0
    %1237 = vmatprep.subr.mxu0 0.0
    %1238 = vmatpush1.xpose.msra.mxu0 0.0
    %1239 = vmatprep.subr.mxu0 0.0
    %1240 = vmatpush1.xpose.msra.mxu0 0.0
    %1241 = vmatprep.subr.mxu0 0.0
    %1242 = vmatpush1.xpose.msra.mxu0 0.0
    %1243 = vmatprep.subr.mxu0 0.0
    %1244 = vmatpush1.xpose.msra.mxu0 0.0
    %1245 = vmatprep.subr.mxu0 0.0
    %1246 = vmatpush1.xpose.msra.mxu0 0.0
    %1247 = vmatprep.subr.mxu0 0.0
    %1248 = vmatpush1.xpose.msra.mxu0 0.0
    %1249 = vmatprep.subr.mxu0 0.0
    %1250 = vmatpush1.xpose.msra.mxu0 0.0
    %1251 = vmatprep.subr.mxu0 0.0
    %1252 = vmatpush1.xpose.msra.mxu0 0.0
    %1253 = vmatprep.subr.mxu0 0.0
    %1254 = vmatpush1.xpose.msra.mxu0 0.0
    %1255 = vmatprep.subr.mxu0 0.0
    %1256 = vmatpush1.xpose.msra.mxu0 0.0
    %1257 = vmatprep.subr.mxu0 0.0
    %1258 = vmatpush1.xpose.msra.mxu0 0.0
    %1259 = vmatprep.subr.mxu0 0.0
    %1260 = vmatpush1.xpose.msra.mxu0 0.0
    %1261 = vmatprep.subr.mxu0 0.0
    %1262 = vmatpush1.xpose.msra.mxu0 0.0
    %1263 = vmatprep.subr.mxu0 0.0
    %1264 = vmatpush1.xpose.msra.mxu0 0.0
    %1265 = vmatprep.subr.mxu0 0.0
    %1266 = vmatpush1.xpose.msra.mxu0 0.0
    %1267 = vmatprep.subr.mxu0 0.0
    %1268 = vmatpush1.xpose.msra.mxu0 0.0
    %1269 = vmatprep.subr.mxu0 0.0
    %1270 = vmatpush1.xpose.msra.mxu0 0.0
    %1271 = vmatprep.subr.mxu0 0.0
    %1272 = vmatpush1.xpose.msra.mxu0 0.0
    %1273 = vmatprep.mubr.f32.mxu0 0.0
    %1274 = vmatmul.mubr.f32.gmra.mrb[0].mxu0 %v1205
    %v1275 = vpop.f32.mrb[0].mxu0
    %v1276 = vadd.f32 0.0, %v1275
    %v1277 = vpop.f32.mrb[0].mxu0
    %1278 = vdwg.mxu0
    %1279 = vrot.lane.b32.xlu0 %v209, 104
    %v1280 = vpop.permute.xlu0 %1279
    %1281 = vrot.lane.b32.xlu0 %v209, 72
    %v1282 = vpop.permute.xlu0 %1281
    %v1283 = vsel %vm215, %v1280, 0
    %v1285 = vsel %vm215, %v1282, 0
    %1287 = vmatprep.subr.mxu0 0.0
    %1288 = vmatpush1.xpose.msra.mxu0 %v1285
    %1289 = vmatprep.subr.mxu0 0.0
    %1290 = vmatpush1.xpose.msra.mxu0 0.0
    %1291 = vmatprep.subr.mxu0 0.0
    %1292 = vmatpush1.xpose.msra.mxu0 0.0
    %1293 = vmatprep.subr.mxu0 0.0
    %1294 = vmatpush1.xpose.msra.mxu0 0.0
    %1295 = vmatprep.subr.mxu0 0.0
    %1296 = vmatpush1.xpose.msra.mxu0 0.0
    %1297 = vmatprep.subr.mxu0 0.0
    %1298 = vmatpush1.xpose.msra.mxu0 0.0
    %1299 = vmatprep.subr.mxu0 0.0
    %1300 = vmatpush1.xpose.msra.mxu0 0.0
    %1301 = vmatprep.subr.mxu0 0.0
    %1302 = vmatpush1.xpose.msra.mxu0 0.0
    %1303 = vmatprep.subr.mxu0 0.0
    %1304 = vmatpush1.xpose.msra.mxu0 0.0
    %1305 = vmatprep.subr.mxu0 0.0
    %1306 = vmatpush1.xpose.msra.mxu0 0.0
    %1307 = vmatprep.subr.mxu0 0.0
    %1308 = vmatpush1.xpose.msra.mxu0 0.0
    %1309 = vmatprep.subr.mxu0 0.0
    %1310 = vmatpush1.xpose.msra.mxu0 0.0
    %1311 = vmatprep.subr.mxu0 0.0
    %1312 = vmatpush1.xpose.msra.mxu0 0.0
    %1313 = vmatprep.subr.mxu0 0.0
    %1314 = vmatpush1.xpose.msra.mxu0 0.0
    %1315 = vmatprep.subr.mxu0 0.0
    %1316 = vmatpush1.xpose.msra.mxu0 0.0
    %1317 = vmatprep.subr.mxu0 0.0
    %1318 = vmatpush1.xpose.msra.mxu0 0.0
    %1319 = vmatprep.subr.mxu0 0.0
    %1320 = vmatpush1.xpose.msra.mxu0 0.0
    %1321 = vmatprep.subr.mxu0 0.0
    %1322 = vmatpush1.xpose.msra.mxu0 0.0
    %1323 = vmatprep.subr.mxu0 0.0
    %1324 = vmatpush1.xpose.msra.mxu0 0.0
    %1325 = vmatprep.subr.mxu0 0.0
    %1326 = vmatpush1.xpose.msra.mxu0 0.0
    %1327 = vmatprep.subr.mxu0 0.0
    %1328 = vmatpush1.xpose.msra.mxu0 0.0
    %1329 = vmatprep.subr.mxu0 0.0
    %1330 = vmatpush1.xpose.msra.mxu0 0.0
    %1331 = vmatprep.subr.mxu0 0.0
    %1332 = vmatpush1.xpose.msra.mxu0 0.0
    %1333 = vmatprep.subr.mxu0 0.0
    %1334 = vmatpush1.xpose.msra.mxu0 0.0
    %1335 = vmatprep.subr.mxu0 0.0
    %1336 = vmatpush1.xpose.msra.mxu0 0.0
    %1337 = vmatprep.subr.mxu0 0.0
    %1338 = vmatpush1.xpose.msra.mxu0 0.0
    %1339 = vmatprep.subr.mxu0 0.0
    %1340 = vmatpush1.xpose.msra.mxu0 0.0
    %1341 = vmatprep.subr.mxu0 0.0
    %1342 = vmatpush1.xpose.msra.mxu0 0.0
    %1343 = vmatprep.subr.mxu0 0.0
    %1344 = vmatpush1.xpose.msra.mxu0 0.0
    %1345 = vmatprep.subr.mxu0 0.0
    %1346 = vmatpush1.xpose.msra.mxu0 0.0
    %1347 = vmatprep.subr.mxu0 0.0
    %1348 = vmatpush1.xpose.msra.mxu0 0.0
    %1349 = vmatprep.subr.mxu0 0.0
    %1350 = vmatpush1.xpose.msra.mxu0 0.0
    %1351 = vmatprep.mubr.f32.mxu0 0.0
    %1352 = vmatmul.mubr.f32.gmra.mrb[0].mxu0 %v1283
    %v1353 = vpop.f32.mrb[0].mxu0
    %v1354 = vadd.f32 0.0, %v1353
    %v1355 = vpop.f32.mrb[0].mxu0
    %1356 = vdwg.mxu0
    %v1357 = vsel %vm215, %v1276, -inf
    %1358 = vmax.xlane.f32.xlu0 %v1357
    %v1359 = vpop.xlane.xlu0 %1358
    %v1360 = vsel %vm215, %v1354, -inf
    %1361 = vmax.xlane.f32.xlu0 %v1360
    %v1362 = vpop.xlane.xlu0 %1361
    %v1363 = vsub.f32 %v1276, %v1359
    %v1364 = vsub.f32 %v1354, %v1362
    %v1365 = vmul.f32 %v1363, 1.442695
    %v1366 = vpow.pop %v1365
    %v1367 = vmul.f32 %v1364, 1.442695
    %v1368 = vpow.pop %v1367
    %v1369 = vsel %vm215, %v1366, 0.0
    %1370 = vadd.xlane.f32.xlu0 %v1369
    %v1371 = vpop.xlane.xlu0 %1370
    %v1372 = vsel %vm215, %v1368, 0.0
    %1373 = vadd.xlane.f32.xlu0 %v1372
    %v1374 = vpop.xlane.xlu0 %1373
    %v1375 = vrcp.pop %v1371
    %v1376 = vrcp.pop %v1374
    %v1377 = vmul.f32 %v1366, %v1375
    %v1378 = vmul.f32 %v1368, %v1376
    %1379 = vrot.lane.b32.xlu0 %v206, 40
    %v1380 = vpop.permute.xlu0 %1379
    %v1383 = vsel %vm215, %v1377, 0
    %1385 = vmatprep.subr.mxu0 0.0
    %1386 = vmatpush1.msra.mxu0 %v1380
    %1387 = vmatprep.subr.mxu0 0.0
    %1388 = vmatpush1.msra.mxu0 0.0
    %1389 = vmatprep.subr.mxu0 0.0
    %1390 = vmatpush1.msra.mxu0 0.0
    %1391 = vmatprep.subr.mxu0 0.0
    %1392 = vmatpush1.msra.mxu0 0.0
    %1393 = vmatprep.subr.mxu0 0.0
    %1394 = vmatpush1.msra.mxu0 0.0
    %1395 = vmatprep.subr.mxu0 0.0
    %1396 = vmatpush1.msra.mxu0 0.0
    %1397 = vmatprep.subr.mxu0 0.0
    %1398 = vmatpush1.msra.mxu0 0.0
    %1399 = vmatprep.subr.mxu0 0.0
    %1400 = vmatpush1.msra.mxu0 0.0
    %1401 = vmatprep.subr.mxu0 0.0
    %1402 = vmatpush1.msra.mxu0 0.0
    %1403 = vmatprep.subr.mxu0 0.0
    %1404 = vmatpush1.msra.mxu0 0.0
    %1405 = vmatprep.subr.mxu0 0.0
    %1406 = vmatpush1.msra.mxu0 0.0
    %1407 = vmatprep.subr.mxu0 0.0
    %1408 = vmatpush1.msra.mxu0 0.0
    %1409 = vmatprep.subr.mxu0 0.0
    %1410 = vmatpush1.msra.mxu0 0.0
    %1411 = vmatprep.subr.mxu0 0.0
    %1412 = vmatpush1.msra.mxu0 0.0
    %1413 = vmatprep.subr.mxu0 0.0
    %1414 = vmatpush1.msra.mxu0 0.0
    %1415 = vmatprep.subr.mxu0 0.0
    %1416 = vmatpush1.msra.mxu0 0.0
    %1417 = vmatprep.subr.mxu0 0.0
    %1418 = vmatpush1.msra.mxu0 0.0
    %1419 = vmatprep.subr.mxu0 0.0
    %1420 = vmatpush1.msra.mxu0 0.0
    %1421 = vmatprep.subr.mxu0 0.0
    %1422 = vmatpush1.msra.mxu0 0.0
    %1423 = vmatprep.subr.mxu0 0.0
    %1424 = vmatpush1.msra.mxu0 0.0
    %1425 = vmatprep.subr.mxu0 0.0
    %1426 = vmatpush1.msra.mxu0 0.0
    %1427 = vmatprep.subr.mxu0 0.0
    %1428 = vmatpush1.msra.mxu0 0.0
    %1429 = vmatprep.subr.mxu0 0.0
    %1430 = vmatpush1.msra.mxu0 0.0
    %1431 = vmatprep.subr.mxu0 0.0
    %1432 = vmatpush1.msra.mxu0 0.0
    %1433 = vmatprep.subr.mxu0 0.0
    %1434 = vmatpush1.msra.mxu0 0.0
    %1435 = vmatprep.subr.mxu0 0.0
    %1436 = vmatpush1.msra.mxu0 0.0
    %1437 = vmatprep.subr.mxu0 0.0
    %1438 = vmatpush1.msra.mxu0 0.0
    %1439 = vmatprep.subr.mxu0 0.0
    %1440 = vmatpush1.msra.mxu0 0.0
    %1441 = vmatprep.subr.mxu0 0.0
    %1442 = vmatpush1.msra.mxu0 0.0
    %1443 = vmatprep.subr.mxu0 0.0
    %1444 = vmatpush1.msra.mxu0 0.0
    %1445 = vmatprep.subr.mxu0 0.0
    %1446 = vmatpush1.msra.mxu0 0.0
    %1447 = vmatprep.subr.mxu0 0.0
    %1448 = vmatpush1.msra.mxu0 0.0
    %1449 = vmatprep.mubr.f32.mxu0 0.0
    %1450 = vmatmul.mubr.f32.gmra.mrb[0].mxu0 %v1383
    %v1451 = vpop.f32.mrb[0].mxu0
    %v1452 = vadd.f32 0.0, %v1451
    %v1453 = vpop.f32.mrb[0].mxu0
    %1454 = vdwg.mxu0
    %1455 = vrot.lane.b32.xlu0 %v209, 40
    %v1456 = vpop.permute.xlu0 %1455
    %v1459 = vsel %vm215, %v1378, 0
    %1461 = vmatprep.subr.mxu0 0.0
    %1462 = vmatpush1.msra.mxu0 %v1456
    %1463 = vmatprep.subr.mxu0 0.0
    %1464 = vmatpush1.msra.mxu0 0.0
    %1465 = vmatprep.subr.mxu0 0.0
    %1466 = vmatpush1.msra.mxu0 0.0
    %1467 = vmatprep.subr.mxu0 0.0
    %1468 = vmatpush1.msra.mxu0 0.0
    %1469 = vmatprep.subr.mxu0 0.0
    %1470 = vmatpush1.msra.mxu0 0.0
    %1471 = vmatprep.subr.mxu0 0.0
    %1472 = vmatpush1.msra.mxu0 0.0
    %1473 = vmatprep.subr.mxu0 0.0
    %1474 = vmatpush1.msra.mxu0 0.0
    %1475 = vmatprep.subr.mxu0 0.0
    %1476 = vmatpush1.msra.mxu0 0.0
    %1477 = vmatprep.subr.mxu0 0.0
    %1478 = vmatpush1.msra.mxu0 0.0
    %1479 = vmatprep.subr.mxu0 0.0
    %1480 = vmatpush1.msra.mxu0 0.0
    %1481 = vmatprep.subr.mxu0 0.0
    %1482 = vmatpush1.msra.mxu0 0.0
    %1483 = vmatprep.subr.mxu0 0.0
    %1484 = vmatpush1.msra.mxu0 0.0
    %1485 = vmatprep.subr.mxu0 0.0
    %1486 = vmatpush1.msra.mxu0 0.0
    %1487 = vmatprep.subr.mxu0 0.0
    %1488 = vmatpush1.msra.mxu0 0.0
    %1489 = vmatprep.subr.mxu0 0.0
    %1490 = vmatpush1.msra.mxu0 0.0
    %1491 = vmatprep.subr.mxu0 0.0
    %1492 = vmatpush1.msra.mxu0 0.0
    %1493 = vmatprep.subr.mxu0 0.0
    %1494 = vmatpush1.msra.mxu0 0.0
    %1495 = vmatprep.subr.mxu0 0.0
    %1496 = vmatpush1.msra.mxu0 0.0
    %1497 = vmatprep.subr.mxu0 0.0
    %1498 = vmatpush1.msra.mxu0 0.0
    %1499 = vmatprep.subr.mxu0 0.0
    %1500 = vmatpush1.msra.mxu0 0.0
    %1501 = vmatprep.subr.mxu0 0.0
    %1502 = vmatpush1.msra.mxu0 0.0
    %1503 = vmatprep.subr.mxu0 0.0
    %1504 = vmatpush1.msra.mxu0 0.0
    %1505 = vmatprep.subr.mxu0 0.0
    %1506 = vmatpush1.msra.mxu0 0.0
    %1507 = vmatprep.subr.mxu0 0.0
    %1508 = vmatpush1.msra.mxu0 0.0
    %1509 = vmatprep.subr.mxu0 0.0
    %1510 = vmatpush1.msra.mxu0 0.0
    %1511 = vmatprep.subr.mxu0 0.0
    %1512 = vmatpush1.msra.mxu0 0.0
    %1513 = vmatprep.subr.mxu0 0.0
    %1514 = vmatpush1.msra.mxu0 0.0
    %1515 = vmatprep.subr.mxu0 0.0
    %1516 = vmatpush1.msra.mxu0 0.0
    %1517 = vmatprep.subr.mxu0 0.0
    %1518 = vmatpush1.msra.mxu0 0.0
    %1519 = vmatprep.subr.mxu0 0.0
    %1520 = vmatpush1.msra.mxu0 0.0
    %1521 = vmatprep.subr.mxu0 0.0
    %1522 = vmatpush1.msra.mxu0 0.0
    %1523 = vmatprep.subr.mxu0 0.0
    %1524 = vmatpush1.msra.mxu0 0.0
    %1525 = vmatprep.mubr.f32.mxu0 0.0
    %1526 = vmatmul.mubr.f32.gmra.mrb[0].mxu0 %v1459
    %v1527 = vpop.f32.mrb[0].mxu0
    %v1528 = vadd.f32 0.0, %v1527
    %v1529 = vpop.f32.mrb[0].mxu0
    %1530 = vdwg.mxu0
    %1533 = vrot.lane.b32.xlu0 %v792, 8
    %v1534 = vpop.permute.xlu0 %1533
    %1535 = vrot.lane.b32.xlu0 %v868, 8
    %v1536 = vpop.permute.xlu0 %1535
    %1541 = vrot.lane.b32.xlu0 %v1122, 16
    %v1542 = vpop.permute.xlu0 %1541
    %1543 = vrot.lane.b32.xlu0 %v1198, 16
    %v1544 = vpop.permute.xlu0 %1543
    %1549 = vrot.lane.b32.xlu0 %v1452, 24
    %v1550 = vpop.permute.xlu0 %1549
    %1551 = vrot.lane.b32.xlu0 %v1528, 24
    %v1552 = vpop.permute.xlu0 %1551
    %v1555 = vsel %vm215, %v462, %v1534
    %v1556 = vsel %vm215, %v538, %v1536
    %vm1557 = vcmask 130048
    %v1558 = vsel %vm1557, %v1555, %v1542
    %v1559 = vsel %vm1557, %v1556, %v1544
    %vm1560 = vcmask 195584
    %v1561 = vsel %vm1560, %v1558, %v1550
    %v1562 = vsel %vm1560, %v1559, %v1552
    %v1563 = vpack.c.bf16 %v1562, %v1561
    %v1564 = vld [vmem:[%s4] sm:$0xf]
    %v1565 = vld [vmem:[%s4 + $0x4] sm:$0xf]
    %v1566 = vld [vmem:[%s4 + $0x8] sm:$0xf]
    %v1567 = vld [vmem:[%s4 + $0xc] sm:$0xf]
    %v1568 = vlaneseq
    %v1569 = vshrl.u32 %v1568, 7
    %v1570 = vsub.s32 1, %v1569
    %v1571 = vrot.slane %v34, %v1570
    %v1576 = vunpack.c.l.b16 %v1564
    %v1577 = vunpack.c.l.b16 %v1565
    %v1578 = vunpack.c.l.b16 %v1566
    %v1579 = vunpack.c.l.b16 %v1567
    %v1580 = vpack.c.b16 %v1577, %v1576
    %v1581 = vpack.c.b16 %v1579, %v1578
    %v1585 = vsel %vm167, %v1563, 0
    %1587 = vmatprep.subr.bf16.mxu0 0
    %1588 = vmatpush1.bf16.msra.mxu0 %v1580
    %1589 = vmatprep.subr.bf16.mxu0 0
    %1590 = vmatpush1.bf16.msra.mxu0 %v1581
    %1591 = vmatprep.subr.bf16.mxu0 0
    %1592 = vmatpush1.bf16.msra.mxu0 0
    %1593 = vmatprep.subr.bf16.mxu0 0
    %1594 = vmatpush1.bf16.msra.mxu0 0
    %1595 = vmatprep.subr.bf16.mxu0 0
    %1596 = vmatpush1.bf16.msra.mxu0 0
    %1597 = vmatprep.subr.bf16.mxu0 0
    %1598 = vmatpush1.bf16.msra.mxu0 0
    %1599 = vmatprep.subr.bf16.mxu0 0
    %1600 = vmatpush1.bf16.msra.mxu0 0
    %1601 = vmatprep.subr.bf16.mxu0 0
    %1602 = vmatpush1.bf16.msra.mxu0 0
    %1603 = vmatprep.subr.bf16.mxu0 0
    %1604 = vmatpush1.bf16.msra.mxu0 0
    %1605 = vmatprep.subr.bf16.mxu0 0
    %1606 = vmatpush1.bf16.msra.mxu0 0
    %1607 = vmatprep.subr.bf16.mxu0 0
    %1608 = vmatpush1.bf16.msra.mxu0 0
    %1609 = vmatprep.subr.bf16.mxu0 0
    %1610 = vmatpush1.bf16.msra.mxu0 0
    %1611 = vmatprep.subr.bf16.mxu0 0
    %1612 = vmatpush1.bf16.msra.mxu0 0
    %1613 = vmatprep.subr.bf16.mxu0 0
    %1614 = vmatpush1.bf16.msra.mxu0 0
    %1615 = vmatprep.subr.bf16.mxu0 0
    %1616 = vmatpush1.bf16.msra.mxu0 0
    %1617 = vmatprep.subr.bf16.mxu0 0
    %1618 = vmatpush1.bf16.msra.mxu0 0
    %1619 = vmatprep.mubr.bf16.mxu0 0
    %1620 = vmatmul.mubr.bf16.gmra.mrb[0].mxu0 %v1585
    %v1621 = vpop.f32.mrb[0].mxu0
    %v1622 = vadd.f32 %v1571, %v1621
    %v1623 = vpop.f32.mrb[0].mxu0
    %v1624 = vpop.f32.mrb[0].mxu0
    %v1625 = vadd.f32 %v1571, %v1624
    %v1626 = vpop.f32.mrb[0].mxu0
    %1627 = vdwg.mxu0
    %v1628 = vadd.f32 %v138, %v1622
    %v1629 = vadd.f32 %v143, %v1625
    %v1630 = vsel %vm167, %v1628, 0.0
    %1631 = vadd.xlane.f32.xlu0 %v1630
    %v1632 = vpop.xlane.xlu0 %1631
    %v1633 = vsel %vm167, %v1629, 0.0
    %1634 = vadd.xlane.f32.xlu0 %v1633
    %v1635 = vpop.xlane.xlu0 %1634
    %v1636 = vrcp.pop 32.0
    %v1637 = vmul.f32 %v1632, %v1636
    %v1638 = vmul.f32 %v1635, %v1636
    %v1639 = vsub.f32 %v1628, %v1637
    %v1640 = vsub.f32 %v1629, %v1638
    %v1641 = vmul.f32 %v1639, %v1639
    %v1642 = vmul.f32 %v1640, %v1640
    %v1643 = vsel %vm167, %v1641, 0.0
    %1644 = vadd.xlane.f32.xlu0 %v1643
    %v1645 = vpop.xlane.xlu0 %1644
    %v1646 = vsel %vm167, %v1642, 0.0
    %1647 = vadd.xlane.f32.xlu0 %v1646
    %v1648 = vpop.xlane.xlu0 %1647
    %v1649 = vmul.f32 %v1645, %v1636
    %v1650 = vmul.f32 %v1648, %v1636
    %v1651 = vadd.f32 %v1649, 1e-05
    %v1652 = vadd.f32 %v1650, 1e-05
    %v1653 = vrsqrt.pop %v1651
    %v1654 = vrsqrt.pop %v1652
    %v1655 = vmul.f32 %v1639, %v1653
    %v1656 = vmul.f32 %v1640, %v1654
    %v1657 = vlaneseq
    %v1658 = vshrl.u32 %v1657, 7
    %v1659 = vsub.s32 2, %v1658
    %v1660 = vrot.slane %v34, %v1659
    %v1661 = vmul.f32 %v1655, %v1660
    %v1662 = vmul.f32 %v1656, %v1660
    %v1663 = vlaneseq
    %v1664 = vshrl.u32 %v1663, 7
    %v1665 = vsub.s32 3, %v1664
    %v1666 = vrot.slane %v34, %v1665
    %v1667 = vadd.f32 %v1661, %v1666
    %v1668 = vadd.f32 %v1662, %v1666
    %v1669 = vpack.c.bf16 %v1668, %v1667
    %v1670 = vld [vmem:[%s5] sm:$0xf]
    %v1671 = vld [vmem:[%s5 + $0x4] sm:$0xf]
    %v1672 = vld [vmem:[%s5 + $0x8] sm:$0xf]
    %v1673 = vld [vmem:[%s5 + $0xc] sm:$0xf]
    %v1674 = vlaneseq
    %v1675 = vshrl.u32 %v1674, 7
    %v1676 = vsub.s32 4, %v1675
    %v1677 = vrot.slane %v34, %v1676
    %v1682 = vunpack.c.l.b16 %v1670
    %v1683 = vunpack.c.l.b16 %v1671
    %v1684 = vunpack.c.l.b16 %v1672
    %v1685 = vunpack.c.l.b16 %v1673
    %v1686 = vpack.c.b16 %v1683, %v1682
    %v1687 = vpack.c.b16 %v1685, %v1684
    %v1691 = vsel %vm167, %v1669, 0
    %1693 = vmatprep.subr.bf16.mxu0 0
    %1694 = vmatpush1.bf16.msra.mxu0 %v1686
    %1695 = vmatprep.subr.bf16.mxu0 0
    %1696 = vmatpush1.bf16.msra.mxu0 %v1687
    %1697 = vmatprep.subr.bf16.mxu0 0
    %1698 = vmatpush1.bf16.msra.mxu0 0
    %1699 = vmatprep.subr.bf16.mxu0 0
    %1700 = vmatpush1.bf16.msra.mxu0 0
    %1701 = vmatprep.subr.bf16.mxu0 0
    %1702 = vmatpush1.bf16.msra.mxu0 0
    %1703 = vmatprep.subr.bf16.mxu0 0
    %1704 = vmatpush1.bf16.msra.mxu0 0
    %1705 = vmatprep.subr.bf16.mxu0 0
    %1706 = vmatpush1.bf16.msra.mxu0 0
    %1707 = vmatprep.subr.bf16.mxu0 0
    %1708 = vmatpush1.bf16.msra.mxu0 0
    %1709 = vmatprep.subr.bf16.mxu0 0
    %1710 = vmatpush1.bf16.msra.mxu0 0
    %1711 = vmatprep.subr.bf16.mxu0 0
    %1712 = vmatpush1.bf16.msra.mxu0 0
    %1713 = vmatprep.subr.bf16.mxu0 0
    %1714 = vmatpush1.bf16.msra.mxu0 0
    %1715 = vmatprep.subr.bf16.mxu0 0
    %1716 = vmatpush1.bf16.msra.mxu0 0
    %1717 = vmatprep.subr.bf16.mxu0 0
    %1718 = vmatpush1.bf16.msra.mxu0 0
    %1719 = vmatprep.subr.bf16.mxu0 0
    %1720 = vmatpush1.bf16.msra.mxu0 0
    %1721 = vmatprep.subr.bf16.mxu0 0
    %1722 = vmatpush1.bf16.msra.mxu0 0
    %1723 = vmatprep.subr.bf16.mxu0 0
    %1724 = vmatpush1.bf16.msra.mxu0 0
    %1725 = vmatprep.mubr.bf16.mxu0 0
    %1726 = vmatmul.mubr.bf16.gmra.mrb[0].mxu0 %v1691
    %v1727 = vpop.f32.mrb[0].mxu0
    %v1728 = vadd.f32 %v1677, %v1727
    %v1729 = vpop.f32.mrb[0].mxu0
    %v1730 = vpop.f32.mrb[0].mxu0
    %v1731 = vadd.f32 %v1677, %v1730
    %v1732 = vpop.f32.mrb[0].mxu0
    %1733 = vdwg.mxu0
    %v1734 = vmax.f32 %v1728, 0.0
    %v1735 = vmax.f32 %v1731, 0.0
    %v1736 = vpack.c.bf16 %v1735, %v1734
    %v1737 = vld [vmem:[%s6] sm:$0xf]
    %v1738 = vld [vmem:[%s6 + $0x4] sm:$0xf]
    %v1739 = vld [vmem:[%s6 + $0x8] sm:$0xf]
    %v1740 = vld [vmem:[%s6 + $0xc] sm:$0xf]
    %v1741 = vld [vmem:[%s6 + $0x10] sm:$0xf]
    %v1742 = vld [vmem:[%s6 + $0x14] sm:$0xf]
    %v1743 = vld [vmem:[%s6 + $0x18] sm:$0xf]
    %v1744 = vld [vmem:[%s6 + $0x1c] sm:$0xf]
    %v1745 = vlaneseq
    %v1746 = vshrl.u32 %v1745, 7
    %v1747 = vsub.s32 5, %v1746
    %v1748 = vrot.slane %v34, %v1747
    %v1757 = vunpack.c.l.b16 %v1737
    %v1758 = vunpack.c.l.b16 %v1738
    %v1759 = vunpack.c.l.b16 %v1739
    %v1760 = vunpack.c.l.b16 %v1740
    %v1761 = vunpack.c.l.b16 %v1741
    %v1762 = vunpack.c.l.b16 %v1742
    %v1763 = vunpack.c.l.b16 %v1743
    %v1764 = vunpack.c.l.b16 %v1744
    %v1765 = vpack.c.b16 %v1758, %v1757
    %v1766 = vpack.c.b16 %v1760, %v1759
    %v1767 = vpack.c.b16 %v1762, %v1761
    %v1768 = vpack.c.b16 %v1764, %v1763
    %vm1773 = vcmask 523264
    %v1775 = vsel %vm1773, %v1736, 0
    %1777 = vmatprep.subr.bf16.mxu0 0
    %1778 = vmatpush1.bf16.msra.mxu0 %v1765
    %1779 = vmatprep.subr.bf16.mxu0 0
    %1780 = vmatpush1.bf16.msra.mxu0 %v1766
    %1781 = vmatprep.subr.bf16.mxu0 0
    %1782 = vmatpush1.bf16.msra.mxu0 %v1767
    %1783 = vmatprep.subr.bf16.mxu0 0
    %1784 = vmatpush1.bf16.msra.mxu0 %v1768
    %1785 = vmatprep.subr.bf16.mxu0 0
    %1786 = vmatpush1.bf16.msra.mxu0 0
    %1787 = vmatprep.subr.bf16.mxu0 0
    %1788 = vmatpush1.bf16.msra.mxu0 0
    %1789 = vmatprep.subr.bf16.mxu0 0
    %1790 = vmatpush1.bf16.msra.mxu0 0
    %1791 = vmatprep.subr.bf16.mxu0 0
    %1792 = vmatpush1.bf16.msra.mxu0 0
    %1793 = vmatprep.subr.bf16.mxu0 0
    %1794 = vmatpush1.bf16.msra.mxu0 0
    %1795 = vmatprep.subr.bf16.mxu0 0
    %1796 = vmatpush1.bf16.msra.mxu0 0
    %1797 = vmatprep.subr.bf16.mxu0 0
    %1798 = vmatpush1.bf16.msra.mxu0 0
    %1799 = vmatprep.subr.bf16.mxu0 0
    %1800 = vmatpush1.bf16.msra.mxu0 0
    %1801 = vmatprep.subr.bf16.mxu0 0
    %1802 = vmatpush1.bf16.msra.mxu0 0
    %1803 = vmatprep.subr.bf16.mxu0 0
    %1804 = vmatpush1.bf16.msra.mxu0 0
    %1805 = vmatprep.subr.bf16.mxu0 0
    %1806 = vmatpush1.bf16.msra.mxu0 0
    %1807 = vmatprep.subr.bf16.mxu0 0
    %1808 = vmatpush1.bf16.msra.mxu0 0
    %1809 = vmatprep.mubr.bf16.mxu0 0
    %1810 = vmatmul.mubr.bf16.gmra.mrb[0].mxu0 %v1775
    %v1811 = vpop.f32.mrb[0].mxu0
    %v1812 = vadd.f32 %v1748, %v1811
    %v1813 = vpop.f32.mrb[0].mxu0
    %v1814 = vpop.f32.mrb[0].mxu0
    %v1815 = vadd.f32 %v1748, %v1814
    %v1816 = vpop.f32.mrb[0].mxu0
    %1817 = vdwg.mxu0
    %v1818 = vadd.f32 %v1667, %v1812
    %v1819 = vadd.f32 %v1668, %v1815
    %v1820 = vsel %vm167, %v1818, 0.0
    %1821 = vadd.xlane.f32.xlu0 %v1820
    %v1822 = vpop.xlane.xlu0 %1821
    %v1823 = vsel %vm167, %v1819, 0.0
    %1824 = vadd.xlane.f32.xlu0 %v1823
    %v1825 = vpop.xlane.xlu0 %1824
    %v1826 = vmul.f32 %v1822, %v1636
    %v1827 = vmul.f32 %v1825, %v1636
    %v1828 = vsub.f32 %v1818, %v1826
    %v1829 = vsub.f32 %v1819, %v1827
    %v1830 = vmul.f32 %v1828, %v1828
    %v1831 = vmul.f32 %v1829, %v1829
    %v1832 = vsel %vm167, %v1830, 0.0
    %1833 = vadd.xlane.f32.xlu0 %v1832
    %v1834 = vpop.xlane.xlu0 %1833
    %v1835 = vsel %vm167, %v1831, 0.0
    %1836 = vadd.xlane.f32.xlu0 %v1835
    %v1837 = vpop.xlane.xlu0 %1836
    %v1838 = vmul.f32 %v1834, %v1636
    %v1839 = vmul.f32 %v1837, %v1636
    %v1840 = vadd.f32 %v1838, 1e-05
    %v1841 = vadd.f32 %v1839, 1e-05
    %v1842 = vrsqrt.pop %v1840
    %v1843 = vrsqrt.pop %v1841
    %v1844 = vmul.f32 %v1828, %v1842
    %v1845 = vmul.f32 %v1829, %v1843
    %v1846 = vlaneseq
    %v1847 = vshrl.u32 %v1846, 7
    %v1848 = vsub.s32 6, %v1847
    %v1849 = vrot.slane %v34, %v1848
    %v1850 = vmul.f32 %v1844, %v1849
    %v1851 = vmul.f32 %v1845, %v1849
    %v1852 = vlaneseq
    %v1853 = vshrl.u32 %v1852, 7
    %v1854 = vsub.s32 7, %v1853
    %v1855 = vrot.slane %v34, %v1854
    %v1856 = vadd.f32 %v1850, %v1855
    %v1857 = vadd.f32 %v1851, %v1855
    %v1858 = vpack.c.bf16 %v1857, %v1856
    %s1859 = scalar_lea.vmem %s3, 16
    %v1860 = vld [vmem:[%s1859] sm:$0xf]
    %v1861 = vld [vmem:[%s1859 + $0x4] sm:$0xf]
    %v1862 = vld [vmem:[%s1859 + $0x8] sm:$0xf]
    %v1863 = vld [vmem:[%s1859 + $0xc] sm:$0xf]
    %v1864 = vlaneseq
    %v1865 = vshrl.u32 %v1864, 7
    %v1866 = vsub.s32 0, %v1865
    %v1867 = vrot.slane %v35, %v1866
    %v1872 = vunpack.c.l.b16 %v1860
    %v1873 = vunpack.c.l.b16 %v1861
    %v1874 = vunpack.c.l.b16 %v1862
    %v1875 = vunpack.c.l.b16 %v1863
    %v1876 = vpack.c.b16 %v1873, %v1872
    %v1877 = vpack.c.b16 %v1875, %v1874
    %v1881 = vsel %vm167, %v1858, 0
    %1883 = vmatprep.subr.bf16.mxu0 0
    %1884 = vmatpush1.bf16.msra.mxu0 %v1876
    %1885 = vmatprep.subr.bf16.mxu0 0
    %1886 = vmatpush1.bf16.msra.mxu0 %v1877
    %1887 = vmatprep.subr.bf16.mxu0 0
    %1888 = vmatpush1.bf16.msra.mxu0 0
    %1889 = vmatprep.subr.bf16.mxu0 0
    %1890 = vmatpush1.bf16.msra.mxu0 0
    %1891 = vmatprep.subr.bf16.mxu0 0
    %1892 = vmatpush1.bf16.msra.mxu0 0
    %1893 = vmatprep.subr.bf16.mxu0 0
    %1894 = vmatpush1.bf16.msra.mxu0 0
    %1895 = vmatprep.subr.bf16.mxu0 0
    %1896 = vmatpush1.bf16.msra.mxu0 0
    %1897 = vmatprep.subr.bf16.mxu0 0
    %1898 = vmatpush1.bf16.msra.mxu0 0
    %1899 = vmatprep.subr.bf16.mxu0 0
    %1900 = vmatpush1.bf16.msra.mxu0 0
    %1901 = vmatprep.subr.bf16.mxu0 0
    %1902 = vmatpush1.bf16.msra.mxu0 0
    %1903 = vmatprep.subr.bf16.mxu0 0
    %1904 = vmatpush1.bf16.msra.mxu0 0
    %1905 = vmatprep.subr.bf16.mxu0 0
    %1906 = vmatpush1.bf16.msra.mxu0 0
    %1907 = vmatprep.subr.bf16.mxu0 0
    %1908 = vmatpush1.bf16.msra.mxu0 0
    %1909 = vmatprep.subr.bf16.mxu0 0
    %1910 = vmatpush1.bf16.msra.mxu0 0
    %1911 = vmatprep.subr.bf16.mxu0 0
    %1912 = vmatpush1.bf16.msra.mxu0 0
    %1913 = vmatprep.subr.bf16.mxu0 0
    %1914 = vmatpush1.bf16.msra.mxu0 0
    %1915 = vmatprep.mubr.bf16.mxu0 0
    %1916 = vmatmul.mubr.bf16.gmra.mrb[0].mxu0 %v1881
    %v1917 = vpop.f32.mrb[0].mxu0
    %v1918 = vadd.f32 %v1867, %v1917
    %v1919 = vpop.f32.mrb[0].mxu0
    %v1920 = vpop.f32.mrb[0].mxu0
    %v1921 = vadd.f32 %v1867, %v1920
    %v1922 = vpop.f32.mrb[0].mxu0
    %1923 = vdwg.mxu0
    %1925 = vrot.lane.b32.xlu0 %v1918, 96
    %v1926 = vpop.permute.xlu0 %1925
    %v1927 = vsel %vm215, %v1918, 0
    %v1929 = vsel %vm215, %v1926, 0
    %1931 = vmatprep.subr.mxu0 0.0
    %1932 = vmatpush1.xpose.msra.mxu0 %v1929
    %1933 = vmatprep.subr.mxu0 0.0
    %1934 = vmatpush1.xpose.msra.mxu0 0.0
    %1935 = vmatprep.subr.mxu0 0.0
    %1936 = vmatpush1.xpose.msra.mxu0 0.0
    %1937 = vmatprep.subr.mxu0 0.0
    %1938 = vmatpush1.xpose.msra.mxu0 0.0
    %1939 = vmatprep.subr.mxu0 0.0
    %1940 = vmatpush1.xpose.msra.mxu0 0.0
    %1941 = vmatprep.subr.mxu0 0.0
    %1942 = vmatpush1.xpose.msra.mxu0 0.0
    %1943 = vmatprep.subr.mxu0 0.0
    %1944 = vmatpush1.xpose.msra.mxu0 0.0
    %1945 = vmatprep.subr.mxu0 0.0
    %1946 = vmatpush1.xpose.msra.mxu0 0.0
    %1947 = vmatprep.subr.mxu0 0.0
    %1948 = vmatpush1.xpose.msra.mxu0 0.0
    %1949 = vmatprep.subr.mxu0 0.0
    %1950 = vmatpush1.xpose.msra.mxu0 0.0
    %1951 = vmatprep.subr.mxu0 0.0
    %1952 = vmatpush1.xpose.msra.mxu0 0.0
    %1953 = vmatprep.subr.mxu0 0.0
    %1954 = vmatpush1.xpose.msra.mxu0 0.0
    %1955 = vmatprep.subr.mxu0 0.0
    %1956 = vmatpush1.xpose.msra.mxu0 0.0
    %1957 = vmatprep.subr.mxu0 0.0
    %1958 = vmatpush1.xpose.msra.mxu0 0.0
    %1959 = vmatprep.subr.mxu0 0.0
    %1960 = vmatpush1.xpose.msra.mxu0 0.0
    %1961 = vmatprep.subr.mxu0 0.0
    %1962 = vmatpush1.xpose.msra.mxu0 0.0
    %1963 = vmatprep.subr.mxu0 0.0
    %1964 = vmatpush1.xpose.msra.mxu0 0.0
    %1965 = vmatprep.subr.mxu0 0.0
    %1966 = vmatpush1.xpose.msra.mxu0 0.0
    %1967 = vmatprep.subr.mxu0 0.0
    %1968 = vmatpush1.xpose.msra.mxu0 0.0
    %1969 = vmatprep.subr.mxu0 0.0
    %1970 = vmatpush1.xpose.msra.mxu0 0.0
    %1971 = vmatprep.subr.mxu0 0.0
    %1972 = vmatpush1.xpose.msra.mxu0 0.0
    %1973 = vmatprep.subr.mxu0 0.0
    %1974 = vmatpush1.xpose.msra.mxu0 0.0
    %1975 = vmatprep.subr.mxu0 0.0
    %1976 = vmatpush1.xpose.msra.mxu0 0.0
    %1977 = vmatprep.subr.mxu0 0.0
    %1978 = vmatpush1.xpose.msra.mxu0 0.0
    %1979 = vmatprep.subr.mxu0 0.0
    %1980 = vmatpush1.xpose.msra.mxu0 0.0
    %1981 = vmatprep.subr.mxu0 0.0
    %1982 = vmatpush1.xpose.msra.mxu0 0.0
    %1983 = vmatprep.subr.mxu0 0.0
    %1984 = vmatpush1.xpose.msra.mxu0 0.0
    %1985 = vmatprep.subr.mxu0 0.0
    %1986 = vmatpush1.xpose.msra.mxu0 0.0
    %1987 = vmatprep.subr.mxu0 0.0
    %1988 = vmatpush1.xpose.msra.mxu0 0.0
    %1989 = vmatprep.subr.mxu0 0.0
    %1990 = vmatpush1.xpose.msra.mxu0 0.0
    %1991 = vmatprep.subr.mxu0 0.0
    %1992 = vmatpush1.xpose.msra.mxu0 0.0
    %1993 = vmatprep.subr.mxu0 0.0
    %1994 = vmatpush1.xpose.msra.mxu0 0.0
    %1995 = vmatprep.mubr.f32.mxu0 0.0
    %1996 = vmatmul.mubr.f32.gmra.mrb[0].mxu0 %v1927
    %v1997 = vpop.f32.mrb[0].mxu0
    %v1998 = vadd.f32 0.0, %v1997
    %v1999 = vpop.f32.mrb[0].mxu0
    %2000 = vdwg.mxu0
    %2002 = vrot.lane.b32.xlu0 %v1921, 96
    %v2003 = vpop.permute.xlu0 %2002
    %v2004 = vsel %vm215, %v1921, 0
    %v2006 = vsel %vm215, %v2003, 0
    %2008 = vmatprep.subr.mxu0 0.0
    %2009 = vmatpush1.xpose.msra.mxu0 %v2006
    %2010 = vmatprep.subr.mxu0 0.0
    %2011 = vmatpush1.xpose.msra.mxu0 0.0
    %2012 = vmatprep.subr.mxu0 0.0
    %2013 = vmatpush1.xpose.msra.mxu0 0.0
    %2014 = vmatprep.subr.mxu0 0.0
    %2015 = vmatpush1.xpose.msra.mxu0 0.0
    %2016 = vmatprep.subr.mxu0 0.0
    %2017 = vmatpush1.xpose.msra.mxu0 0.0
    %2018 = vmatprep.subr.mxu0 0.0
    %2019 = vmatpush1.xpose.msra.mxu0 0.0
    %2020 = vmatprep.subr.mxu0 0.0
    %2021 = vmatpush1.xpose.msra.mxu0 0.0
    %2022 = vmatprep.subr.mxu0 0.0
    %2023 = vmatpush1.xpose.msra.mxu0 0.0
    %2024 = vmatprep.subr.mxu0 0.0
    %2025 = vmatpush1.xpose.msra.mxu0 0.0
    %2026 = vmatprep.subr.mxu0 0.0
    %2027 = vmatpush1.xpose.msra.mxu0 0.0
    %2028 = vmatprep.subr.mxu0 0.0
    %2029 = vmatpush1.xpose.msra.mxu0 0.0
    %2030 = vmatprep.subr.mxu0 0.0
    %2031 = vmatpush1.xpose.msra.mxu0 0.0
    %2032 = vmatprep.subr.mxu0 0.0
    %2033 = vmatpush1.xpose.msra.mxu0 0.0
    %2034 = vmatprep.subr.mxu0 0.0
    %2035 = vmatpush1.xpose.msra.mxu0 0.0
    %2036 = vmatprep.subr.mxu0 0.0
    %2037 = vmatpush1.xpose.msra.mxu0 0.0
    %2038 = vmatprep.subr.mxu0 0.0
    %2039 = vmatpush1.xpose.msra.mxu0 0.0
    %2040 = vmatprep.subr.mxu0 0.0
    %2041 = vmatpush1.xpose.msra.mxu0 0.0
    %2042 = vmatprep.subr.mxu0 0.0
    %2043 = vmatpush1.xpose.msra.mxu0 0.0
    %2044 = vmatprep.subr.mxu0 0.0
    %2045 = vmatpush1.xpose.msra.mxu0 0.0
    %2046 = vmatprep.subr.mxu0 0.0
    %2047 = vmatpush1.xpose.msra.mxu0 0.0
    %2048 = vmatprep.subr.mxu0 0.0
    %2049 = vmatpush1.xpose.msra.mxu0 0.0
    %2050 = vmatprep.subr.mxu0 0.0
    %2051 = vmatpush1.xpose.msra.mxu0 0.0
    %2052 = vmatprep.subr.mxu0 0.0
    %2053 = vmatpush1.xpose.msra.mxu0 0.0
    %2054 = vmatprep.subr.mxu0 0.0
    %2055 = vmatpush1.xpose.msra.mxu0 0.0
    %2056 = vmatprep.subr.mxu0 0.0
    %2057 = vmatpush1.xpose.msra.mxu0 0.0
    %2058 = vmatprep.subr.mxu0 0.0
    %2059 = vmatpush1.xpose.msra.mxu0 0.0
    %2060 = vmatprep.subr.mxu0 0.0
    %2061 = vmatpush1.xpose.msra.mxu0 0.0
    %2062 = vmatprep.subr.mxu0 0.0
    %2063 = vmatpush1.xpose.msra.mxu0 0.0
    %2064 = vmatprep.subr.mxu0 0.0
    %2065 = vmatpush1.xpose.msra.mxu0 0.0
    %2066 = vmatprep.subr.mxu0 0.0
    %2067 = vmatpush1.xpose.msra.mxu0 0.0
    %2068 = vmatprep.subr.mxu0 0.0
    %2069 = vmatpush1.xpose.msra.mxu0 0.0
    %2070 = vmatprep.subr.mxu0 0.0
    %2071 = vmatpush1.xpose.msra.mxu0 0.0
    %2072 = vmatprep.mubr.f32.mxu0 0.0
    %2073 = vmatmul.mubr.f32.gmra.mrb[0].mxu0 %v2004
    %v2074 = vpop.f32.mrb[0].mxu0
    %v2075 = vadd.f32 0.0, %v2074
    %v2076 = vpop.f32.mrb[0].mxu0
    %2077 = vdwg.mxu0
    %v2078 = vsel %vm215, %v1998, -inf
    %2079 = vmax.xlane.f32.xlu0 %v2078
    %v2080 = vpop.xlane.xlu0 %2079
    %v2081 = vsel %vm215, %v2075, -inf
    %2082 = vmax.xlane.f32.xlu0 %v2081
    %v2083 = vpop.xlane.xlu0 %2082
    %v2084 = vsub.f32 %v1998, %v2080
    %v2085 = vsub.f32 %v2075, %v2083
    %v2086 = vmul.f32 %v2084, 1.442695
    %v2087 = vpow.pop %v2086
    %v2088 = vmul.f32 %v2085, 1.442695
    %v2089 = vpow.pop %v2088
    %v2090 = vsel %vm215, %v2087, 0.0
    %2091 = vadd.xlane.f32.xlu0 %v2090
    %v2092 = vpop.xlane.xlu0 %2091
    %v2093 = vsel %vm215, %v2089, 0.0
    %2094 = vadd.xlane.f32.xlu0 %v2093
    %v2095 = vpop.xlane.xlu0 %2094
    %v2096 = vrcp.pop %v2092
    %v2097 = vrcp.pop %v2095
    %v2098 = vmul.f32 %v2087, %v2096
    %v2099 = vmul.f32 %v2089, %v2097
    %2100 = vrot.lane.b32.xlu0 %v1918, 64
    %v2101 = vpop.permute.xlu0 %2100
    %v2104 = vsel %vm215, %v2098, 0
    %2106 = vmatprep.subr.mxu0 0.0
    %2107 = vmatpush1.msra.mxu0 %v2101
    %2108 = vmatprep.subr.mxu0 0.0
    %2109 = vmatpush1.msra.mxu0 0.0
    %2110 = vmatprep.subr.mxu0 0.0
    %2111 = vmatpush1.msra.mxu0 0.0
    %2112 = vmatprep.subr.mxu0 0.0
    %2113 = vmatpush1.msra.mxu0 0.0
    %2114 = vmatprep.subr.mxu0 0.0
    %2115 = vmatpush1.msra.mxu0 0.0
    %2116 = vmatprep.subr.mxu0 0.0
    %2117 = vmatpush1.msra.mxu0 0.0
    %2118 = vmatprep.subr.mxu0 0.0
    %2119 = vmatpush1.msra.mxu0 0.0
    %2120 = vmatprep.subr.mxu0 0.0
    %2121 = vmatpush1.msra.mxu0 0.0
    %2122 = vmatprep.subr.mxu0 0.0
    %2123 = vmatpush1.msra.mxu0 0.0
    %2124 = vmatprep.subr.mxu0 0.0
    %2125 = vmatpush1.msra.mxu0 0.0
    %2126 = vmatprep.subr.mxu0 0.0
    %2127 = vmatpush1.msra.mxu0 0.0
    %2128 = vmatprep.subr.mxu0 0.0
    %2129 = vmatpush1.msra.mxu0 0.0
    %2130 = vmatprep.subr.mxu0 0.0
    %2131 = vmatpush1.msra.mxu0 0.0
    %2132 = vmatprep.subr.mxu0 0.0
    %2133 = vmatpush1.msra.mxu0 0.0
    %2134 = vmatprep.subr.mxu0 0.0
    %2135 = vmatpush1.msra.mxu0 0.0
    %2136 = vmatprep.subr.mxu0 0.0
    %2137 = vmatpush1.msra.mxu0 0.0
    %2138 = vmatprep.subr.mxu0 0.0
    %2139 = vmatpush1.msra.mxu0 0.0
    %2140 = vmatprep.subr.mxu0 0.0
    %2141 = vmatpush1.msra.mxu0 0.0
    %2142 = vmatprep.subr.mxu0 0.0
    %2143 = vmatpush1.msra.mxu0 0.0
    %2144 = vmatprep.subr.mxu0 0.0
    %2145 = vmatpush1.msra.mxu0 0.0
    %2146 = vmatprep.subr.mxu0 0.0
    %2147 = vmatpush1.msra.mxu0 0.0
    %2148 = vmatprep.subr.mxu0 0.0
    %2149 = vmatpush1.msra.mxu0 0.0
    %2150 = vmatprep.subr.mxu0 0.0
    %2151 = vmatpush1.msra.mxu0 0.0
    %2152 = vmatprep.subr.mxu0 0.0
    %2153 = vmatpush1.msra.mxu0 0.0
    %2154 = vmatprep.subr.mxu0 0.0
    %2155 = vmatpush1.msra.mxu0 0.0
    %2156 = vmatprep.subr.mxu0 0.0
    %2157 = vmatpush1.msra.mxu0 0.0
    %2158 = vmatprep.subr.mxu0 0.0
    %2159 = vmatpush1.msra.mxu0 0.0
    %2160 = vmatprep.subr.mxu0 0.0
    %2161 = vmatpush1.msra.mxu0 0.0
    %2162 = vmatprep.subr.mxu0 0.0
    %2163 = vmatpush1.msra.mxu0 0.0
    %2164 = vmatprep.subr.mxu0 0.0
    %2165 = vmatpush1.msra.mxu0 0.0
    %2166 = vmatprep.subr.mxu0 0.0
    %2167 = vmatpush1.msra.mxu0 0.0
    %2168 = vmatprep.subr.mxu0 0.0
    %2169 = vmatpush1.msra.mxu0 0.0
    %2170 = vmatprep.mubr.f32.mxu0 0.0
    %2171 = vmatmul.mubr.f32.gmra.mrb[0].mxu0 %v2104
    %v2172 = vpop.f32.mrb[0].mxu0
    %v2173 = vadd.f32 0.0, %v2172
    %v2174 = vpop.f32.mrb[0].mxu0
    %2175 = vdwg.mxu0
    %2176 = vrot.lane.b32.xlu0 %v1921, 64
    %v2177 = vpop.permute.xlu0 %2176
    %v2180 = vsel %vm215, %v2099, 0
    %2182 = vmatprep.subr.mxu0 0.0
    %2183 = vmatpush1.msra.mxu0 %v2177
    %2184 = vmatprep.subr.mxu0 0.0
    %2185 = vmatpush1.msra.mxu0 0.0
    %2186 = vmatprep.subr.mxu0 0.0
    %2187 = vmatpush1.msra.mxu0 0.0
    %2188 = vmatprep.subr.mxu0 0.0
    %2189 = vmatpush1.msra.mxu0 0.0
    %2190 = vmatprep.subr.mxu0 0.0
    %2191 = vmatpush1.msra.mxu0 0.0
    %2192 = vmatprep.subr.mxu0 0.0
    %2193 = vmatpush1.msra.mxu0 0.0
    %2194 = vmatprep.subr.mxu0 0.0
    %2195 = vmatpush1.msra.mxu0 0.0
    %2196 = vmatprep.subr.mxu0 0.0
    %2197 = vmatpush1.msra.mxu0 0.0
    %2198 = vmatprep.subr.mxu0 0.0
    %2199 = vmatpush1.msra.mxu0 0.0
    %2200 = vmatprep.subr.mxu0 0.0
    %2201 = vmatpush1.msra.mxu0 0.0
    %2202 = vmatprep.subr.mxu0 0.0
    %2203 = vmatpush1.msra.mxu0 0.0
    %2204 = vmatprep.subr.mxu0 0.0
    %2205 = vmatpush1.msra.mxu0 0.0
    %2206 = vmatprep.subr.mxu0 0.0
    %2207 = vmatpush1.msra.mxu0 0.0
    %2208 = vmatprep.subr.mxu0 0.0
    %2209 = vmatpush1.msra.mxu0 0.0
    %2210 = vmatprep.subr.mxu0 0.0
    %2211 = vmatpush1.msra.mxu0 0.0
    %2212 = vmatprep.subr.mxu0 0.0
    %2213 = vmatpush1.msra.mxu0 0.0
    %2214 = vmatprep.subr.mxu0 0.0
    %2215 = vmatpush1.msra.mxu0 0.0
    %2216 = vmatprep.subr.mxu0 0.0
    %2217 = vmatpush1.msra.mxu0 0.0
    %2218 = vmatprep.subr.mxu0 0.0
    %2219 = vmatpush1.msra.mxu0 0.0
    %2220 = vmatprep.subr.mxu0 0.0
    %2221 = vmatpush1.msra.mxu0 0.0
    %2222 = vmatprep.subr.mxu0 0.0
    %2223 = vmatpush1.msra.mxu0 0.0
    %2224 = vmatprep.subr.mxu0 0.0
    %2225 = vmatpush1.msra.mxu0 0.0
    %2226 = vmatprep.subr.mxu0 0.0
    %2227 = vmatpush1.msra.mxu0 0.0
    %2228 = vmatprep.subr.mxu0 0.0
    %2229 = vmatpush1.msra.mxu0 0.0
    %2230 = vmatprep.subr.mxu0 0.0
    %2231 = vmatpush1.msra.mxu0 0.0
    %2232 = vmatprep.subr.mxu0 0.0
    %2233 = vmatpush1.msra.mxu0 0.0
    %2234 = vmatprep.subr.mxu0 0.0
    %2235 = vmatpush1.msra.mxu0 0.0
    %2236 = vmatprep.subr.mxu0 0.0
    %2237 = vmatpush1.msra.mxu0 0.0
    %2238 = vmatprep.subr.mxu0 0.0
    %2239 = vmatpush1.msra.mxu0 0.0
    %2240 = vmatprep.subr.mxu0 0.0
    %2241 = vmatpush1.msra.mxu0 0.0
    %2242 = vmatprep.subr.mxu0 0.0
    %2243 = vmatpush1.msra.mxu0 0.0
    %2244 = vmatprep.subr.mxu0 0.0
    %2245 = vmatpush1.msra.mxu0 0.0
    %2246 = vmatprep.mubr.f32.mxu0 0.0
    %2247 = vmatmul.mubr.f32.gmra.mrb[0].mxu0 %v2180
    %v2248 = vpop.f32.mrb[0].mxu0
    %v2249 = vadd.f32 0.0, %v2248
    %v2250 = vpop.f32.mrb[0].mxu0
    %2251 = vdwg.mxu0
    %2252 = vrot.lane.b32.xlu0 %v1918, 120
    %v2253 = vpop.permute.xlu0 %2252
    %2254 = vrot.lane.b32.xlu0 %v1918, 88
    %v2255 = vpop.permute.xlu0 %2254
    %v2256 = vsel %vm215, %v2253, 0
    %v2258 = vsel %vm215, %v2255, 0
    %2260 = vmatprep.subr.mxu0 0.0
    %2261 = vmatpush1.xpose.msra.mxu0 %v2258
    %2262 = vmatprep.subr.mxu0 0.0
    %2263 = vmatpush1.xpose.msra.mxu0 0.0
    %2264 = vmatprep.subr.mxu0 0.0
    %2265 = vmatpush1.xpose.msra.mxu0 0.0
    %2266 = vmatprep.subr.mxu0 0.0
    %2267 = vmatpush1.xpose.msra.mxu0 0.0
    %2268 = vmatprep.subr.mxu0 0.0
    %2269 = vmatpush1.xpose.msra.mxu0 0.0
    %2270 = vmatprep.subr.mxu0 0.0
    %2271 = vmatpush1.xpose.msra.mxu0 0.0
    %2272 = vmatprep.subr.mxu0 0.0
    %2273 = vmatpush1.xpose.msra.mxu0 0.0
    %2274 = vmatprep.subr.mxu0 0.0
    %2275 = vmatpush1.xpose.msra.mxu0 0.0
    %2276 = vmatprep.subr.mxu0 0.0
    %2277 = vmatpush1.xpose.msra.mxu0 0.0
    %2278 = vmatprep.subr.mxu0 0.0
    %2279 = vmatpush1.xpose.msra.mxu0 0.0
    %2280 = vmatprep.subr.mxu0 0.0
    %2281 = vmatpush1.xpose.msra.mxu0 0.0
    %2282 = vmatprep.subr.mxu0 0.0
    %2283 = vmatpush1.xpose.msra.mxu0 0.0
    %2284 = vmatprep.subr.mxu0 0.0
    %2285 = vmatpush1.xpose.msra.mxu0 0.0
    %2286 = vmatprep.subr.mxu0 0.0
    %2287 = vmatpush1.xpose.msra.mxu0 0.0
    %2288 = vmatprep.subr.mxu0 0.0
    %2289 = vmatpush1.xpose.msra.mxu0 0.0
    %2290 = vmatprep.subr.mxu0 0.0
    %2291 = vmatpush1.xpose.msra.mxu0 0.0
    %2292 = vmatprep.subr.mxu0 0.0
    %2293 = vmatpush1.xpose.msra.mxu0 0.0
    %2294 = vmatprep.subr.mxu0 0.0
    %2295 = vmatpush1.xpose.msra.mxu0 0.0
    %2296 = vmatprep.subr.mxu0 0.0
    %2297 = vmatpush1.xpose.msra.mxu0 0.0
    %2298 = vmatprep.subr.mxu0 0.0
    %2299 = vmatpush1.xpose.msra.mxu0 0.0
    %2300 = vmatprep.subr.mxu0 0.0
    %2301 = vmatpush1.xpose.msra.mxu0 0.0
    %2302 = vmatprep.subr.mxu0 0.0
    %2303 = vmatpush1.xpose.msra.mxu0 0.0
    %2304 = vmatprep.subr.mxu0 0.0
    %2305 = vmatpush1.xpose.msra.mxu0 0.0
    %2306 = vmatprep.subr.mxu0 0.0
    %2307 = vmatpush1.xpose.msra.mxu0 0.0
    %2308 = vmatprep.subr.mxu0 0.0
    %2309 = vmatpush1.xpose.msra.mxu0 0.0
    %2310 = vmatprep.subr.mxu0 0.0
    %2311 = vmatpush1.xpose.msra.mxu0 0.0
    %2312 = vmatprep.subr.mxu0 0.0
    %2313 = vmatpush1.xpose.msra.mxu0 0.0
    %2314 = vmatprep.subr.mxu0 0.0
    %2315 = vmatpush1.xpose.msra.mxu0 0.0
    %2316 = vmatprep.subr.mxu0 0.0
    %2317 = vmatpush1.xpose.msra.mxu0 0.0
    %2318 = vmatprep.subr.mxu0 0.0
    %2319 = vmatpush1.xpose.msra.mxu0 0.0
    %2320 = vmatprep.subr.mxu0 0.0
    %2321 = vmatpush1.xpose.msra.mxu0 0.0
    %2322 = vmatprep.subr.mxu0 0.0
    %2323 = vmatpush1.xpose.msra.mxu0 0.0
    %2324 = vmatprep.mubr.f32.mxu0 0.0
    %2325 = vmatmul.mubr.f32.gmra.mrb[0].mxu0 %v2256
    %v2326 = vpop.f32.mrb[0].mxu0
    %v2327 = vadd.f32 0.0, %v2326
    %v2328 = vpop.f32.mrb[0].mxu0
    %2329 = vdwg.mxu0
    %2330 = vrot.lane.b32.xlu0 %v1921, 120
    %v2331 = vpop.permute.xlu0 %2330
    %2332 = vrot.lane.b32.xlu0 %v1921, 88
    %v2333 = vpop.permute.xlu0 %2332
    %v2334 = vsel %vm215, %v2331, 0
    %v2336 = vsel %vm215, %v2333, 0
    %2338 = vmatprep.subr.mxu0 0.0
    %2339 = vmatpush1.xpose.msra.mxu0 %v2336
    %2340 = vmatprep.subr.mxu0 0.0
    %2341 = vmatpush1.xpose.msra.mxu0 0.0
    %2342 = vmatprep.subr.mxu0 0.0
    %2343 = vmatpush1.xpose.msra.mxu0 0.0
    %2344 = vmatprep.subr.mxu0 0.0
    %2345 = vmatpush1.xpose.msra.mxu0 0.0
    %2346 = vmatprep.subr.mxu0 0.0
    %2347 = vmatpush1.xpose.msra.mxu0 0.0
    %2348 = vmatprep.subr.mxu0 0.0
    %2349 = vmatpush1.xpose.msra.mxu0 0.0
    %2350 = vmatprep.subr.mxu0 0.0
    %2351 = vmatpush1.xpose.msra.mxu0 0.0
    %2352 = vmatprep.subr.mxu0 0.0
    %2353 = vmatpush1.xpose.msra.mxu0 0.0
    %2354 = vmatprep.subr.mxu0 0.0
    %2355 = vmatpush1.xpose.msra.mxu0 0.0
    %2356 = vmatprep.subr.mxu0 0.0
    %2357 = vmatpush1.xpose.msra.mxu0 0.0
    %2358 = vmatprep.subr.mxu0 0.0
    %2359 = vmatpush1.xpose.msra.mxu0 0.0
    %2360 = vmatprep.subr.mxu0 0.0
    %2361 = vmatpush1.xpose.msra.mxu0 0.0
    %2362 = vmatprep.subr.mxu0 0.0
    %2363 = vmatpush1.xpose.msra.mxu0 0.0
    %2364 = vmatprep.subr.mxu0 0.0
    %2365 = vmatpush1.xpose.msra.mxu0 0.0
    %2366 = vmatprep.subr.mxu0 0.0
    %2367 = vmatpush1.xpose.msra.mxu0 0.0
    %2368 = vmatprep.subr.mxu0 0.0
    %2369 = vmatpush1.xpose.msra.mxu0 0.0
    %2370 = vmatprep.subr.mxu0 0.0
    %2371 = vmatpush1.xpose.msra.mxu0 0.0
    %2372 = vmatprep.subr.mxu0 0.0
    %2373 = vmatpush1.xpose.msra.mxu0 0.0
    %2374 = vmatprep.subr.mxu0 0.0
    %2375 = vmatpush1.xpose.msra.mxu0 0.0
    %2376 = vmatprep.subr.mxu0 0.0
    %2377 = vmatpush1.xpose.msra.mxu0 0.0
    %2378 = vmatprep.subr.mxu0 0.0
    %2379 = vmatpush1.xpose.msra.mxu0 0.0
    %2380 = vmatprep.subr.mxu0 0.0
    %2381 = vmatpush1.xpose.msra.mxu0 0.0
    %2382 = vmatprep.subr.mxu0 0.0
    %2383 = vmatpush1.xpose.msra.mxu0 0.0
    %2384 = vmatprep.subr.mxu0 0.0
    %2385 = vmatpush1.xpose.msra.mxu0 0.0
    %2386 = vmatprep.subr.mxu0 0.0
    %2387 = vmatpush1.xpose.msra.mxu0 0.0
    %2388 = vmatprep.subr.mxu0 0.0
    %2389 = vmatpush1.xpose.msra.mxu0 0.0
    %2390 = vmatprep.subr.mxu0 0.0
    %2391 = vmatpush1.xpose.msra.mxu0 0.0
    %2392 = vmatprep.subr.mxu0 0.0
    %2393 = vmatpush1.xpose.msra.mxu0 0.0
    %2394 = vmatprep.subr.mxu0 0.0
    %2395 = vmatpush1.xpose.msra.mxu0 0.0
    %2396 = vmatprep.subr.mxu0 0.0
    %2397 = vmatpush1.xpose.msra.mxu0 0.0
    %2398 = vmatprep.subr.mxu0 0.0
    %2399 = vmatpush1.xpose.msra.mxu0 0.0
    %2400 = vmatprep.subr.mxu0 0.0
    %2401 = vmatpush1.xpose.msra.mxu0 0.0
    %2402 = vmatprep.mubr.f32.mxu0 0.0
    %2403 = vmatmul.mubr.f32.gmra.mrb[0].mxu0 %v2334
    %v2404 = vpop.f32.mrb[0].mxu0
    %v2405 = vadd.f32 0.0, %v2404
    %v2406 = vpop.f32.mrb[0].mxu0
    %2407 = vdwg.mxu0
    %v2408 = vsel %vm215, %v2327, -inf
    %2409 = vmax.xlane.f32.xlu0 %v2408
    %v2410 = vpop.xlane.xlu0 %2409
    %v2411 = vsel %vm215, %v2405, -inf
    %2412 = vmax.xlane.f32.xlu0 %v2411
    %v2413 = vpop.xlane.xlu0 %2412
    %v2414 = vsub.f32 %v2327, %v2410
    %v2415 = vsub.f32 %v2405, %v2413
    %v2416 = vmul.f32 %v2414, 1.442695
    %v2417 = vpow.pop %v2416
    %v2418 = vmul.f32 %v2415, 1.442695
    %v2419 = vpow.pop %v2418
    %v2420 = vsel %vm215, %v2417, 0.0
    %2421 = vadd.xlane.f32.xlu0 %v2420
    %v2422 = vpop.xlane.xlu0 %2421
    %v2423 = vsel %vm215, %v2419, 0.0
    %2424 = vadd.xlane.f32.xlu0 %v2423
    %v2425 = vpop.xlane.xlu0 %2424
    %v2426 = vrcp.pop %v2422
    %v2427 = vrcp.pop %v2425
    %v2428 = vmul.f32 %v2417, %v2426
    %v2429 = vmul.f32 %v2419, %v2427
    %2430 = vrot.lane.b32.xlu0 %v1918, 56
    %v2431 = vpop.permute.xlu0 %2430
    %v2434 = vsel %vm215, %v2428, 0
    %2436 = vmatprep.subr.mxu0 0.0
    %2437 = vmatpush1.msra.mxu0 %v2431
    %2438 = vmatprep.subr.mxu0 0.0
    %2439 = vmatpush1.msra.mxu0 0.0
    %2440 = vmatprep.subr.mxu0 0.0
    %2441 = vmatpush1.msra.mxu0 0.0
    %2442 = vmatprep.subr.mxu0 0.0
    %2443 = vmatpush1.msra.mxu0 0.0
    %2444 = vmatprep.subr.mxu0 0.0
    %2445 = vmatpush1.msra.mxu0 0.0
    %2446 = vmatprep.subr.mxu0 0.0
    %2447 = vmatpush1.msra.mxu0 0.0
    %2448 = vmatprep.subr.mxu0 0.0
    %2449 = vmatpush1.msra.mxu0 0.0
    %2450 = vmatprep.subr.mxu0 0.0
    %2451 = vmatpush1.msra.mxu0 0.0
    %2452 = vmatprep.subr.mxu0 0.0
    %2453 = vmatpush1.msra.mxu0 0.0
    %2454 = vmatprep.subr.mxu0 0.0
    %2455 = vmatpush1.msra.mxu0 0.0
    %2456 = vmatprep.subr.mxu0 0.0
    %2457 = vmatpush1.msra.mxu0 0.0
    %2458 = vmatprep.subr.mxu0 0.0
    %2459 = vmatpush1.msra.mxu0 0.0
    %2460 = vmatprep.subr.mxu0 0.0
    %2461 = vmatpush1.msra.mxu0 0.0
    %2462 = vmatprep.subr.mxu0 0.0
    %2463 = vmatpush1.msra.mxu0 0.0
    %2464 = vmatprep.subr.mxu0 0.0
    %2465 = vmatpush1.msra.mxu0 0.0
    %2466 = vmatprep.subr.mxu0 0.0
    %2467 = vmatpush1.msra.mxu0 0.0
    %2468 = vmatprep.subr.mxu0 0.0
    %2469 = vmatpush1.msra.mxu0 0.0
    %2470 = vmatprep.subr.mxu0 0.0
    %2471 = vmatpush1.msra.mxu0 0.0
    %2472 = vmatprep.subr.mxu0 0.0
    %2473 = vmatpush1.msra.mxu0 0.0
    %2474 = vmatprep.subr.mxu0 0.0
    %2475 = vmatpush1.msra.mxu0 0.0
    %2476 = vmatprep.subr.mxu0 0.0
    %2477 = vmatpush1.msra.mxu0 0.0
    %2478 = vmatprep.subr.mxu0 0.0
    %2479 = vmatpush1.msra.mxu0 0.0
    %2480 = vmatprep.subr.mxu0 0.0
    %2481 = vmatpush1.msra.mxu0 0.0
    %2482 = vmatprep.subr.mxu0 0.0
    %2483 = vmatpush1.msra.mxu0 0.0
    %2484 = vmatprep.subr.mxu0 0.0
    %2485 = vmatpush1.msra.mxu0 0.0
    %2486 = vmatprep.subr.mxu0 0.0
    %2487 = vmatpush1.msra.mxu0 0.0
    %2488 = vmatprep.subr.mxu0 0.0
    %2489 = vmatpush1.msra.mxu0 0.0
    %2490 = vmatprep.subr.mxu0 0.0
    %2491 = vmatpush1.msra.mxu0 0.0
    %2492 = vmatprep.subr.mxu0 0.0
    %2493 = vmatpush1.msra.mxu0 0.0
    %2494 = vmatprep.subr.mxu0 0.0
    %2495 = vmatpush1.msra.mxu0 0.0
    %2496 = vmatprep.subr.mxu0 0.0
    %2497 = vmatpush1.msra.mxu0 0.0
    %2498 = vmatprep.subr.mxu0 0.0
    %2499 = vmatpush1.msra.mxu0 0.0
    %2500 = vmatprep.mubr.f32.mxu0 0.0
    %2501 = vmatmul.mubr.f32.gmra.mrb[0].mxu0 %v2434
    %v2502 = vpop.f32.mrb[0].mxu0
    %v2503 = vadd.f32 0.0, %v2502
    %v2504 = vpop.f32.mrb[0].mxu0
    %2505 = vdwg.mxu0
    %2506 = vrot.lane.b32.xlu0 %v1921, 56
    %v2507 = vpop.permute.xlu0 %2506
    %v2510 = vsel %vm215, %v2429, 0
    %2512 = vmatprep.subr.mxu0 0.0
    %2513 = vmatpush1.msra.mxu0 %v2507
    %2514 = vmatprep.subr.mxu0 0.0
    %2515 = vmatpush1.msra.mxu0 0.0
    %2516 = vmatprep.subr.mxu0 0.0
    %2517 = vmatpush1.msra.mxu0 0.0
    %2518 = vmatprep.subr.mxu0 0.0
    %2519 = vmatpush1.msra.mxu0 0.0
    %2520 = vmatprep.subr.mxu0 0.0
    %2521 = vmatpush1.msra.mxu0 0.0
    %2522 = vmatprep.subr.mxu0 0.0
    %2523 = vmatpush1.msra.mxu0 0.0
    %2524 = vmatprep.subr.mxu0 0.0
    %2525 = vmatpush1.msra.mxu0 0.0
    %2526 = vmatprep.subr.mxu0 0.0
    %2527 = vmatpush1.msra.mxu0 0.0
    %2528 = vmatprep.subr.mxu0 0.0
    %2529 = vmatpush1.msra.mxu0 0.0
    %2530 = vmatprep.subr.mxu0 0.0
    %2531 = vmatpush1.msra.mxu0 0.0
    %2532 = vmatprep.subr.mxu0 0.0
    %2533 = vmatpush1.msra.mxu0 0.0
    %2534 = vmatprep.subr.mxu0 0.0
    %2535 = vmatpush1.msra.mxu0 0.0
    %2536 = vmatprep.subr.mxu0 0.0
    %2537 = vmatpush1.msra.mxu0 0.0
    %2538 = vmatprep.subr.mxu0 0.0
    %2539 = vmatpush1.msra.mxu0 0.0
    %2540 = vmatprep.subr.mxu0 0.0
    %2541 = vmatpush1.msra.mxu0 0.0
    %2542 = vmatprep.subr.mxu0 0.0
    %2543 = vmatpush1.msra.mxu0 0.0
    %2544 = vmatprep.subr.mxu0 0.0
    %2545 = vmatpush1.msra.mxu0 0.0
    %2546 = vmatprep.subr.mxu0 0.0
    %2547 = vmatpush1.msra.mxu0 0.0
    %2548 = vmatprep.subr.mxu0 0.0
    %2549 = vmatpush1.msra.mxu0 0.0
    %2550 = vmatprep.subr.mxu0 0.0
    %2551 = vmatpush1.msra.mxu0 0.0
    %2552 = vmatprep.subr.mxu0 0.0
    %2553 = vmatpush1.msra.mxu0 0.0
    %2554 = vmatprep.subr.mxu0 0.0
    %2555 = vmatpush1.msra.mxu0 0.0
    %2556 = vmatprep.subr.mxu0 0.0
    %2557 = vmatpush1.msra.mxu0 0.0
    %2558 = vmatprep.subr.mxu0 0.0
    %2559 = vmatpush1.msra.mxu0 0.0
    %2560 = vmatprep.subr.mxu0 0.0
    %2561 = vmatpush1.msra.mxu0 0.0
    %2562 = vmatprep.subr.mxu0 0.0
    %2563 = vmatpush1.msra.mxu0 0.0
    %2564 = vmatprep.subr.mxu0 0.0
    %2565 = vmatpush1.msra.mxu0 0.0
    %2566 = vmatprep.subr.mxu0 0.0
    %2567 = vmatpush1.msra.mxu0 0.0
    %2568 = vmatprep.subr.mxu0 0.0
    %2569 = vmatpush1.msra.mxu0 0.0
    %2570 = vmatprep.subr.mxu0 0.0
    %2571 = vmatpush1.msra.mxu0 0.0
    %2572 = vmatprep.subr.mxu0 0.0
    %2573 = vmatpush1.msra.mxu0 0.0
    %2574 = vmatprep.subr.mxu0 0.0
    %2575 = vmatpush1.msra.mxu0 0.0
    %2576 = vmatprep.mubr.f32.mxu0 0.0
    %2577 = vmatmul.mubr.f32.gmra.mrb[0].mxu0 %v2510
    %v2578 = vpop.f32.mrb[0].mxu0
    %v2579 = vadd.f32 0.0, %v2578
    %v2580 = vpop.f32.mrb[0].mxu0
    %2581 = vdwg.mxu0
    %2582 = vrot.lane.b32.xlu0 %v1918, 112
    %v2583 = vpop.permute.xlu0 %2582
    %2584 = vrot.lane.b32.xlu0 %v1918, 80
    %v2585 = vpop.permute.xlu0 %2584
    %v2586 = vsel %vm215, %v2583, 0
    %v2588 = vsel %vm215, %v2585, 0
    %2590 = vmatprep.subr.mxu0 0.0
    %2591 = vmatpush1.xpose.msra.mxu0 %v2588
    %2592 = vmatprep.subr.mxu0 0.0
    %2593 = vmatpush1.xpose.msra.mxu0 0.0
    %2594 = vmatprep.subr.mxu0 0.0
    %2595 = vmatpush1.xpose.msra.mxu0 0.0
    %2596 = vmatprep.subr.mxu0 0.0
    %2597 = vmatpush1.xpose.msra.mxu0 0.0
    %2598 = vmatprep.subr.mxu0 0.0
    %2599 = vmatpush1.xpose.msra.mxu0 0.0
    %2600 = vmatprep.subr.mxu0 0.0
    %2601 = vmatpush1.xpose.msra.mxu0 0.0
    %2602 = vmatprep.subr.mxu0 0.0
    %2603 = vmatpush1.xpose.msra.mxu0 0.0
    %2604 = vmatprep.subr.mxu0 0.0
    %2605 = vmatpush1.xpose.msra.mxu0 0.0
    %2606 = vmatprep.subr.mxu0 0.0
    %2607 = vmatpush1.xpose.msra.mxu0 0.0
    %2608 = vmatprep.subr.mxu0 0.0
    %2609 = vmatpush1.xpose.msra.mxu0 0.0
    %2610 = vmatprep.subr.mxu0 0.0
    %2611 = vmatpush1.xpose.msra.mxu0 0.0
    %2612 = vmatprep.subr.mxu0 0.0
    %2613 = vmatpush1.xpose.msra.mxu0 0.0
    %2614 = vmatprep.subr.mxu0 0.0
    %2615 = vmatpush1.xpose.msra.mxu0 0.0
    %2616 = vmatprep.subr.mxu0 0.0
    %2617 = vmatpush1.xpose.msra.mxu0 0.0
    %2618 = vmatprep.subr.mxu0 0.0
    %2619 = vmatpush1.xpose.msra.mxu0 0.0
    %2620 = vmatprep.subr.mxu0 0.0
    %2621 = vmatpush1.xpose.msra.mxu0 0.0
    %2622 = vmatprep.subr.mxu0 0.0
    %2623 = vmatpush1.xpose.msra.mxu0 0.0
    %2624 = vmatprep.subr.mxu0 0.0
    %2625 = vmatpush1.xpose.msra.mxu0 0.0
    %2626 = vmatprep.subr.mxu0 0.0
    %2627 = vmatpush1.xpose.msra.mxu0 0.0
    %2628 = vmatprep.subr.mxu0 0.0
    %2629 = vmatpush1.xpose.msra.mxu0 0.0
    %2630 = vmatprep.subr.mxu0 0.0
    %2631 = vmatpush1.xpose.msra.mxu0 0.0
    %2632 = vmatprep.subr.mxu0 0.0
    %2633 = vmatpush1.xpose.msra.mxu0 0.0
    %2634 = vmatprep.subr.mxu0 0.0
    %2635 = vmatpush1.xpose.msra.mxu0 0.0
    %2636 = vmatprep.subr.mxu0 0.0
    %2637 = vmatpush1.xpose.msra.mxu0 0.0
    %2638 = vmatprep.subr.mxu0 0.0
    %2639 = vmatpush1.xpose.msra.mxu0 0.0
    %2640 = vmatprep.subr.mxu0 0.0
    %2641 = vmatpush1.xpose.msra.mxu0 0.0
    %2642 = vmatprep.subr.mxu0 0.0
    %2643 = vmatpush1.xpose.msra.mxu0 0.0
    %2644 = vmatprep.subr.mxu0 0.0
    %2645 = vmatpush1.xpose.msra.mxu0 0.0
    %2646 = vmatprep.subr.mxu0 0.0
    %2647 = vmatpush1.xpose.msra.mxu0 0.0
    %2648 = vmatprep.subr.mxu0 0.0
    %2649 = vmatpush1.xpose.msra.mxu0 0.0
    %2650 = vmatprep.subr.mxu0 0.0
    %2651 = vmatpush1.xpose.msra.mxu0 0.0
    %2652 = vmatprep.subr.mxu0 0.0
    %2653 = vmatpush1.xpose.msra.mxu0 0.0
    %2654 = vmatprep.mubr.f32.mxu0 0.0
    %2655 = vmatmul.mubr.f32.gmra.mrb[0].mxu0 %v2586
    %v2656 = vpop.f32.mrb[0].mxu0
    %v2657 = vadd.f32 0.0, %v2656
    %v2658 = vpop.f32.mrb[0].mxu0
    %2659 = vdwg.mxu0
    %2660 = vrot.lane.b32.xlu0 %v1921, 112
    %v2661 = vpop.permute.xlu0 %2660
    %2662 = vrot.lane.b32.xlu0 %v1921, 80
    %v2663 = vpop.permute.xlu0 %2662
    %v2664 = vsel %vm215, %v2661, 0
    %v2666 = vsel %vm215, %v2663, 0
    %2668 = vmatprep.subr.mxu0 0.0
    %2669 = vmatpush1.xpose.msra.mxu0 %v2666
    %2670 = vmatprep.subr.mxu0 0.0
    %2671 = vmatpush1.xpose.msra.mxu0 0.0
    %2672 = vmatprep.subr.mxu0 0.0
    %2673 = vmatpush1.xpose.msra.mxu0 0.0
    %2674 = vmatprep.subr.mxu0 0.0
    %2675 = vmatpush1.xpose.msra.mxu0 0.0
    %2676 = vmatprep.subr.mxu0 0.0
    %2677 = vmatpush1.xpose.msra.mxu0 0.0
    %2678 = vmatprep.subr.mxu0 0.0
    %2679 = vmatpush1.xpose.msra.mxu0 0.0
    %2680 = vmatprep.subr.mxu0 0.0
    %2681 = vmatpush1.xpose.msra.mxu0 0.0
    %2682 = vmatprep.subr.mxu0 0.0
    %2683 = vmatpush1.xpose.msra.mxu0 0.0
    %2684 = vmatprep.subr.mxu0 0.0
    %2685 = vmatpush1.xpose.msra.mxu0 0.0
    %2686 = vmatprep.subr.mxu0 0.0
    %2687 = vmatpush1.xpose.msra.mxu0 0.0
    %2688 = vmatprep.subr.mxu0 0.0
    %2689 = vmatpush1.xpose.msra.mxu0 0.0
    %2690 = vmatprep.subr.mxu0 0.0
    %2691 = vmatpush1.xpose.msra.mxu0 0.0
    %2692 = vmatprep.subr.mxu0 0.0
    %2693 = vmatpush1.xpose.msra.mxu0 0.0
    %2694 = vmatprep.subr.mxu0 0.0
    %2695 = vmatpush1.xpose.msra.mxu0 0.0
    %2696 = vmatprep.subr.mxu0 0.0
    %2697 = vmatpush1.xpose.msra.mxu0 0.0
    %2698 = vmatprep.subr.mxu0 0.0
    %2699 = vmatpush1.xpose.msra.mxu0 0.0
    %2700 = vmatprep.subr.mxu0 0.0
    %2701 = vmatpush1.xpose.msra.mxu0 0.0
    %2702 = vmatprep.subr.mxu0 0.0
    %2703 = vmatpush1.xpose.msra.mxu0 0.0
    %2704 = vmatprep.subr.mxu0 0.0
    %2705 = vmatpush1.xpose.msra.mxu0 0.0
    %2706 = vmatprep.subr.mxu0 0.0
    %2707 = vmatpush1.xpose.msra.mxu0 0.0
    %2708 = vmatprep.subr.mxu0 0.0
    %2709 = vmatpush1.xpose.msra.mxu0 0.0
    %2710 = vmatprep.subr.mxu0 0.0
    %2711 = vmatpush1.xpose.msra.mxu0 0.0
    %2712 = vmatprep.subr.mxu0 0.0
    %2713 = vmatpush1.xpose.msra.mxu0 0.0
    %2714 = vmatprep.subr.mxu0 0.0
    %2715 = vmatpush1.xpose.msra.mxu0 0.0
    %2716 = vmatprep.subr.mxu0 0.0
    %2717 = vmatpush1.xpose.msra.mxu0 0.0
    %2718 = vmatprep.subr.mxu0 0.0
    %2719 = vmatpush1.xpose.msra.mxu0 0.0
    %2720 = vmatprep.subr.mxu0 0.0
    %2721 = vmatpush1.xpose.msra.mxu0 0.0
    %2722 = vmatprep.subr.mxu0 0.0
    %2723 = vmatpush1.xpose.msra.mxu0 0.0
    %2724 = vmatprep.subr.mxu0 0.0
    %2725 = vmatpush1.xpose.msra.mxu0 0.0
    %2726 = vmatprep.subr.mxu0 0.0
    %2727 = vmatpush1.xpose.msra.mxu0 0.0
    %2728 = vmatprep.subr.mxu0 0.0
    %2729 = vmatpush1.xpose.msra.mxu0 0.0
    %2730 = vmatprep.subr.mxu0 0.0
    %2731 = vmatpush1.xpose.msra.mxu0 0.0
    %2732 = vmatprep.mubr.f32.mxu0 0.0
    %2733 = vmatmul.mubr.f32.gmra.mrb[0].mxu0 %v2664
    %v2734 = vpop.f32.mrb[0].mxu0
    %v2735 = vadd.f32 0.0, %v2734
    %v2736 = vpop.f32.mrb[0].mxu0
    %2737 = vdwg.mxu0
    %v2738 = vsel %vm215, %v2657, -inf
    %2739 = vmax.xlane.f32.xlu0 %v2738
    %v2740 = vpop.xlane.xlu0 %2739
    %v2741 = vsel %vm215, %v2735, -inf
    %2742 = vmax.xlane.f32.xlu0 %v2741
    %v2743 = vpop.xlane.xlu0 %2742
    %v2744 = vsub.f32 %v2657, %v2740
    %v2745 = vsub.f32 %v2735, %v2743
    %v2746 = vmul.f32 %v2744, 1.442695
    %v2747 = vpow.pop %v2746
    %v2748 = vmul.f32 %v2745, 1.442695
    %v2749 = vpow.pop %v2748
    %v2750 = vsel %vm215, %v2747, 0.0
    %2751 = vadd.xlane.f32.xlu0 %v2750
    %v2752 = vpop.xlane.xlu0 %2751
    %v2753 = vsel %vm215, %v2749, 0.0
    %2754 = vadd.xlane.f32.xlu0 %v2753
    %v2755 = vpop.xlane.xlu0 %2754
    %v2756 = vrcp.pop %v2752
    %v2757 = vrcp.pop %v2755
    %v2758 = vmul.f32 %v2747, %v2756
    %v2759 = vmul.f32 %v2749, %v2757
    %2760 = vrot.lane.b32.xlu0 %v1918, 48
    %v2761 = vpop.permute.xlu0 %2760
    %v2764 = vsel %vm215, %v2758, 0
    %2766 = vmatprep.subr.mxu0 0.0
    %2767 = vmatpush1.msra.mxu0 %v2761
    %2768 = vmatprep.subr.mxu0 0.0
    %2769 = vmatpush1.msra.mxu0 0.0
    %2770 = vmatprep.subr.mxu0 0.0
    %2771 = vmatpush1.msra.mxu0 0.0
    %2772 = vmatprep.subr.mxu0 0.0
    %2773 = vmatpush1.msra.mxu0 0.0
    %2774 = vmatprep.subr.mxu0 0.0
    %2775 = vmatpush1.msra.mxu0 0.0
    %2776 = vmatprep.subr.mxu0 0.0
    %2777 = vmatpush1.msra.mxu0 0.0
    %2778 = vmatprep.subr.mxu0 0.0
    %2779 = vmatpush1.msra.mxu0 0.0
    %2780 = vmatprep.subr.mxu0 0.0
    %2781 = vmatpush1.msra.mxu0 0.0
    %2782 = vmatprep.subr.mxu0 0.0
    %2783 = vmatpush1.msra.mxu0 0.0
    %2784 = vmatprep.subr.mxu0 0.0
    %2785 = vmatpush1.msra.mxu0 0.0
    %2786 = vmatprep.subr.mxu0 0.0
    %2787 = vmatpush1.msra.mxu0 0.0
    %2788 = vmatprep.subr.mxu0 0.0
    %2789 = vmatpush1.msra.mxu0 0.0
    %2790 = vmatprep.subr.mxu0 0.0
    %2791 = vmatpush1.msra.mxu0 0.0
    %2792 = vmatprep.subr.mxu0 0.0
    %2793 = vmatpush1.msra.mxu0 0.0
    %2794 = vmatprep.subr.mxu0 0.0
    %2795 = vmatpush1.msra.mxu0 0.0
    %2796 = vmatprep.subr.mxu0 0.0
    %2797 = vmatpush1.msra.mxu0 0.0
    %2798 = vmatprep.subr.mxu0 0.0
    %2799 = vmatpush1.msra.mxu0 0.0
    %2800 = vmatprep.subr.mxu0 0.0
    %2801 = vmatpush1.msra.mxu0 0.0
    %2802 = vmatprep.subr.mxu0 0.0
    %2803 = vmatpush1.msra.mxu0 0.0
    %2804 = vmatprep.subr.mxu0 0.0
    %2805 = vmatpush1.msra.mxu0 0.0
    %2806 = vmatprep.subr.mxu0 0.0
    %2807 = vmatpush1.msra.mxu0 0.0
    %2808 = vmatprep.subr.mxu0 0.0
    %2809 = vmatpush1.msra.mxu0 0.0
    %2810 = vmatprep.subr.mxu0 0.0
    %2811 = vmatpush1.msra.mxu0 0.0
    %2812 = vmatprep.subr.mxu0 0.0
    %2813 = vmatpush1.msra.mxu0 0.0
    %2814 = vmatprep.subr.mxu0 0.0
    %2815 = vmatpush1.msra.mxu0 0.0
    %2816 = vmatprep.subr.mxu0 0.0
    %2817 = vmatpush1.msra.mxu0 0.0
    %2818 = vmatprep.subr.mxu0 0.0
    %2819 = vmatpush1.msra.mxu0 0.0
    %2820 = vmatprep.subr.mxu0 0.0
    %2821 = vmatpush1.msra.mxu0 0.0
    %2822 = vmatprep.subr.mxu0 0.0
    %2823 = vmatpush1.msra.mxu0 0.0
    %2824 = vmatprep.subr.mxu0 0.0
    %2825 = vmatpush1.msra.mxu0 0.0
    %2826 = vmatprep.subr.mxu0 0.0
    %2827 = vmatpush1.msra.mxu0 0.0
    %2828 = vmatprep.subr.mxu0 0.0
    %2829 = vmatpush1.msra.mxu0 0.0
    %2830 = vmatprep.mubr.f32.mxu0 0.0
    %2831 = vmatmul.mubr.f32.gmra.mrb[0].mxu0 %v2764
    %v2832 = vpop.f32.mrb[0].mxu0
    %v2833 = vadd.f32 0.0, %v2832
    %v2834 = vpop.f32.mrb[0].mxu0
    %2835 = vdwg.mxu0
    %2836 = vrot.lane.b32.xlu0 %v1921, 48
    %v2837 = vpop.permute.xlu0 %2836
    %v2840 = vsel %vm215, %v2759, 0
    %2842 = vmatprep.subr.mxu0 0.0
    %2843 = vmatpush1.msra.mxu0 %v2837
    %2844 = vmatprep.subr.mxu0 0.0
    %2845 = vmatpush1.msra.mxu0 0.0
    %2846 = vmatprep.subr.mxu0 0.0
    %2847 = vmatpush1.msra.mxu0 0.0
    %2848 = vmatprep.subr.mxu0 0.0
    %2849 = vmatpush1.msra.mxu0 0.0
    %2850 = vmatprep.subr.mxu0 0.0
    %2851 = vmatpush1.msra.mxu0 0.0
    %2852 = vmatprep.subr.mxu0 0.0
    %2853 = vmatpush1.msra.mxu0 0.0
    %2854 = vmatprep.subr.mxu0 0.0
    %2855 = vmatpush1.msra.mxu0 0.0
    %2856 = vmatprep.subr.mxu0 0.0
    %2857 = vmatpush1.msra.mxu0 0.0
    %2858 = vmatprep.subr.mxu0 0.0
    %2859 = vmatpush1.msra.mxu0 0.0
    %2860 = vmatprep.subr.mxu0 0.0
    %2861 = vmatpush1.msra.mxu0 0.0
    %2862 = vmatprep.subr.mxu0 0.0
    %2863 = vmatpush1.msra.mxu0 0.0
    %2864 = vmatprep.subr.mxu0 0.0
    %2865 = vmatpush1.msra.mxu0 0.0
    %2866 = vmatprep.subr.mxu0 0.0
    %2867 = vmatpush1.msra.mxu0 0.0
    %2868 = vmatprep.subr.mxu0 0.0
    %2869 = vmatpush1.msra.mxu0 0.0
    %2870 = vmatprep.subr.mxu0 0.0
    %2871 = vmatpush1.msra.mxu0 0.0
    %2872 = vmatprep.subr.mxu0 0.0
    %2873 = vmatpush1.msra.mxu0 0.0
    %2874 = vmatprep.subr.mxu0 0.0
    %2875 = vmatpush1.msra.mxu0 0.0
    %2876 = vmatprep.subr.mxu0 0.0
    %2877 = vmatpush1.msra.mxu0 0.0
    %2878 = vmatprep.subr.mxu0 0.0
    %2879 = vmatpush1.msra.mxu0 0.0
    %2880 = vmatprep.subr.mxu0 0.0
    %2881 = vmatpush1.msra.mxu0 0.0
    %2882 = vmatprep.subr.mxu0 0.0
    %2883 = vmatpush1.msra.mxu0 0.0
    %2884 = vmatprep.subr.mxu0 0.0
    %2885 = vmatpush1.msra.mxu0 0.0
    %2886 = vmatprep.subr.mxu0 0.0
    %2887 = vmatpush1.msra.mxu0 0.0
    %2888 = vmatprep.subr.mxu0 0.0
    %2889 = vmatpush1.msra.mxu0 0.0
    %2890 = vmatprep.subr.mxu0 0.0
    %2891 = vmatpush1.msra.mxu0 0.0
    %2892 = vmatprep.subr.mxu0 0.0
    %2893 = vmatpush1.msra.mxu0 0.0
    %2894 = vmatprep.subr.mxu0 0.0
    %2895 = vmatpush1.msra.mxu0 0.0
    %2896 = vmatprep.subr.mxu0 0.0
    %2897 = vmatpush1.msra.mxu0 0.0
    %2898 = vmatprep.subr.mxu0 0.0
    %2899 = vmatpush1.msra.mxu0 0.0
    %2900 = vmatprep.subr.mxu0 0.0
    %2901 = vmatpush1.msra.mxu0 0.0
    %2902 = vmatprep.subr.mxu0 0.0
    %2903 = vmatpush1.msra.mxu0 0.0
    %2904 = vmatprep.subr.mxu0 0.0
    %2905 = vmatpush1.msra.mxu0 0.0
    %2906 = vmatprep.mubr.f32.mxu0 0.0
    %2907 = vmatmul.mubr.f32.gmra.mrb[0].mxu0 %v2840
    %v2908 = vpop.f32.mrb[0].mxu0
    %v2909 = vadd.f32 0.0, %v2908
    %v2910 = vpop.f32.mrb[0].mxu0
    %2911 = vdwg.mxu0
    %2912 = vrot.lane.b32.xlu0 %v1918, 104
    %v2913 = vpop.permute.xlu0 %2912
    %2914 = vrot.lane.b32.xlu0 %v1918, 72
    %v2915 = vpop.permute.xlu0 %2914
    %v2916 = vsel %vm215, %v2913, 0
    %v2918 = vsel %vm215, %v2915, 0
    %2920 = vmatprep.subr.mxu0 0.0
    %2921 = vmatpush1.xpose.msra.mxu0 %v2918
    %2922 = vmatprep.subr.mxu0 0.0
    %2923 = vmatpush1.xpose.msra.mxu0 0.0
    %2924 = vmatprep.subr.mxu0 0.0
    %2925 = vmatpush1.xpose.msra.mxu0 0.0
    %2926 = vmatprep.subr.mxu0 0.0
    %2927 = vmatpush1.xpose.msra.mxu0 0.0
    %2928 = vmatprep.subr.mxu0 0.0
    %2929 = vmatpush1.xpose.msra.mxu0 0.0
    %2930 = vmatprep.subr.mxu0 0.0
    %2931 = vmatpush1.xpose.msra.mxu0 0.0
    %2932 = vmatprep.subr.mxu0 0.0
    %2933 = vmatpush1.xpose.msra.mxu0 0.0
    %2934 = vmatprep.subr.mxu0 0.0
    %2935 = vmatpush1.xpose.msra.mxu0 0.0
    %2936 = vmatprep.subr.mxu0 0.0
    %2937 = vmatpush1.xpose.msra.mxu0 0.0
    %2938 = vmatprep.subr.mxu0 0.0
    %2939 = vmatpush1.xpose.msra.mxu0 0.0
    %2940 = vmatprep.subr.mxu0 0.0
    %2941 = vmatpush1.xpose.msra.mxu0 0.0
    %2942 = vmatprep.subr.mxu0 0.0
    %2943 = vmatpush1.xpose.msra.mxu0 0.0
    %2944 = vmatprep.subr.mxu0 0.0
    %2945 = vmatpush1.xpose.msra.mxu0 0.0
    %2946 = vmatprep.subr.mxu0 0.0
    %2947 = vmatpush1.xpose.msra.mxu0 0.0
    %2948 = vmatprep.subr.mxu0 0.0
    %2949 = vmatpush1.xpose.msra.mxu0 0.0
    %2950 = vmatprep.subr.mxu0 0.0
    %2951 = vmatpush1.xpose.msra.mxu0 0.0
    %2952 = vmatprep.subr.mxu0 0.0
    %2953 = vmatpush1.xpose.msra.mxu0 0.0
    %2954 = vmatprep.subr.mxu0 0.0
    %2955 = vmatpush1.xpose.msra.mxu0 0.0
    %2956 = vmatprep.subr.mxu0 0.0
    %2957 = vmatpush1.xpose.msra.mxu0 0.0
    %2958 = vmatprep.subr.mxu0 0.0
    %2959 = vmatpush1.xpose.msra.mxu0 0.0
    %2960 = vmatprep.subr.mxu0 0.0
    %2961 = vmatpush1.xpose.msra.mxu0 0.0
    %2962 = vmatprep.subr.mxu0 0.0
    %2963 = vmatpush1.xpose.msra.mxu0 0.0
    %2964 = vmatprep.subr.mxu0 0.0
    %2965 = vmatpush1.xpose.msra.mxu0 0.0
    %2966 = vmatprep.subr.mxu0 0.0
    %2967 = vmatpush1.xpose.msra.mxu0 0.0
    %2968 = vmatprep.subr.mxu0 0.0
    %2969 = vmatpush1.xpose.msra.mxu0 0.0
    %2970 = vmatprep.subr.mxu0 0.0
    %2971 = vmatpush1.xpose.msra.mxu0 0.0
    %2972 = vmatprep.subr.mxu0 0.0
    %2973 = vmatpush1.xpose.msra.mxu0 0.0
    %2974 = vmatprep.subr.mxu0 0.0
    %2975 = vmatpush1.xpose.msra.mxu0 0.0
    %2976 = vmatprep.subr.mxu0 0.0
    %2977 = vmatpush1.xpose.msra.mxu0 0.0
    %2978 = vmatprep.subr.mxu0 0.0
    %2979 = vmatpush1.xpose.msra.mxu0 0.0
    %2980 = vmatprep.subr.mxu0 0.0
    %2981 = vmatpush1.xpose.msra.mxu0 0.0
    %2982 = vmatprep.subr.mxu0 0.0
    %2983 = vmatpush1.xpose.msra.mxu0 0.0
    %2984 = vmatprep.mubr.f32.mxu0 0.0
    %2985 = vmatmul.mubr.f32.gmra.mrb[0].mxu0 %v2916
    %v2986 = vpop.f32.mrb[0].mxu0
    %v2987 = vadd.f32 0.0, %v2986
    %v2988 = vpop.f32.mrb[0].mxu0
    %2989 = vdwg.mxu0
    %2990 = vrot.lane.b32.xlu0 %v1921, 104
    %v2991 = vpop.permute.xlu0 %2990
    %2992 = vrot.lane.b32.xlu0 %v1921, 72
    %v2993 = vpop.permute.xlu0 %2992
    %v2994 = vsel %vm215, %v2991, 0
    %v2996 = vsel %vm215, %v2993, 0
    %2998 = vmatprep.subr.mxu0 0.0
    %2999 = vmatpush1.xpose.msra.mxu0 %v2996
    %3000 = vmatprep.subr.mxu0 0.0
    %3001 = vmatpush1.xpose.msra.mxu0 0.0
    %3002 = vmatprep.subr.mxu0 0.0
    %3003 = vmatpush1.xpose.msra.mxu0 0.0
    %3004 = vmatprep.subr.mxu0 0.0
    %3005 = vmatpush1.xpose.msra.mxu0 0.0
    %3006 = vmatprep.subr.mxu0 0.0
    %3007 = vmatpush1.xpose.msra.mxu0 0.0
    %3008 = vmatprep.subr.mxu0 0.0
    %3009 = vmatpush1.xpose.msra.mxu0 0.0
    %3010 = vmatprep.subr.mxu0 0.0
    %3011 = vmatpush1.xpose.msra.mxu0 0.0
    %3012 = vmatprep.subr.mxu0 0.0
    %3013 = vmatpush1.xpose.msra.mxu0 0.0
    %3014 = vmatprep.subr.mxu0 0.0
    %3015 = vmatpush1.xpose.msra.mxu0 0.0
    %3016 = vmatprep.subr.mxu0 0.0
    %3017 = vmatpush1.xpose.msra.mxu0 0.0
    %3018 = vmatprep.subr.mxu0 0.0
    %3019 = vmatpush1.xpose.msra.mxu0 0.0
    %3020 = vmatprep.subr.mxu0 0.0
    %3021 = vmatpush1.xpose.msra.mxu0 0.0
    %3022 = vmatprep.subr.mxu0 0.0
    %3023 = vmatpush1.xpose.msra.mxu0 0.0
    %3024 = vmatprep.subr.mxu0 0.0
    %3025 = vmatpush1.xpose.msra.mxu0 0.0
    %3026 = vmatprep.subr.mxu0 0.0
    %3027 = vmatpush1.xpose.msra.mxu0 0.0
    %3028 = vmatprep.subr.mxu0 0.0
    %3029 = vmatpush1.xpose.msra.mxu0 0.0
    %3030 = vmatprep.subr.mxu0 0.0
    %3031 = vmatpush1.xpose.msra.mxu0 0.0
    %3032 = vmatprep.subr.mxu0 0.0
    %3033 = vmatpush1.xpose.msra.mxu0 0.0
    %3034 = vmatprep.subr.mxu0 0.0
    %3035 = vmatpush1.xpose.msra.mxu0 0.0
    %3036 = vmatprep.subr.mxu0 0.0
    %3037 = vmatpush1.xpose.msra.mxu0 0.0
    %3038 = vmatprep.subr.mxu0 0.0
    %3039 = vmatpush1.xpose.msra.mxu0 0.0
    %3040 = vmatprep.subr.mxu0 0.0
    %3041 = vmatpush1.xpose.msra.mxu0 0.0
    %3042 = vmatprep.subr.mxu0 0.0
    %3043 = vmatpush1.xpose.msra.mxu0 0.0
    %3044 = vmatprep.subr.mxu0 0.0
    %3045 = vmatpush1.xpose.msra.mxu0 0.0
    %3046 = vmatprep.subr.mxu0 0.0
    %3047 = vmatpush1.xpose.msra.mxu0 0.0
    %3048 = vmatprep.subr.mxu0 0.0
    %3049 = vmatpush1.xpose.msra.mxu0 0.0
    %3050 = vmatprep.subr.mxu0 0.0
    %3051 = vmatpush1.xpose.msra.mxu0 0.0
    %3052 = vmatprep.subr.mxu0 0.0
    %3053 = vmatpush1.xpose.msra.mxu0 0.0
    %3054 = vmatprep.subr.mxu0 0.0
    %3055 = vmatpush1.xpose.msra.mxu0 0.0
    %3056 = vmatprep.subr.mxu0 0.0
    %3057 = vmatpush1.xpose.msra.mxu0 0.0
    %3058 = vmatprep.subr.mxu0 0.0
    %3059 = vmatpush1.xpose.msra.mxu0 0.0
    %3060 = vmatprep.subr.mxu0 0.0
    %3061 = vmatpush1.xpose.msra.mxu0 0.0
    %3062 = vmatprep.mubr.f32.mxu0 0.0
    %3063 = vmatmul.mubr.f32.gmra.mrb[0].mxu0 %v2994
    %v3064 = vpop.f32.mrb[0].mxu0
    %v3065 = vadd.f32 0.0, %v3064
    %v3066 = vpop.f32.mrb[0].mxu0
    %3067 = vdwg.mxu0
    %v3068 = vsel %vm215, %v2987, -inf
    %3069 = vmax.xlane.f32.xlu0 %v3068
    %v3070 = vpop.xlane.xlu0 %3069
    %v3071 = vsel %vm215, %v3065, -inf
    %3072 = vmax.xlane.f32.xlu0 %v3071
    %v3073 = vpop.xlane.xlu0 %3072
    %v3074 = vsub.f32 %v2987, %v3070
    %v3075 = vsub.f32 %v3065, %v3073
    %v3076 = vmul.f32 %v3074, 1.442695
    %v3077 = vpow.pop %v3076
    %v3078 = vmul.f32 %v3075, 1.442695
    %v3079 = vpow.pop %v3078
    %v3080 = vsel %vm215, %v3077, 0.0
    %3081 = vadd.xlane.f32.xlu0 %v3080
    %v3082 = vpop.xlane.xlu0 %3081
    %v3083 = vsel %vm215, %v3079, 0.0
    %3084 = vadd.xlane.f32.xlu0 %v3083
    %v3085 = vpop.xlane.xlu0 %3084
    %v3086 = vrcp.pop %v3082
    %v3087 = vrcp.pop %v3085
    %v3088 = vmul.f32 %v3077, %v3086
    %v3089 = vmul.f32 %v3079, %v3087
    %3090 = vrot.lane.b32.xlu0 %v1918, 40
    %v3091 = vpop.permute.xlu0 %3090
    %v3094 = vsel %vm215, %v3088, 0
    %3096 = vmatprep.subr.mxu0 0.0
    %3097 = vmatpush1.msra.mxu0 %v3091
    %3098 = vmatprep.subr.mxu0 0.0
    %3099 = vmatpush1.msra.mxu0 0.0
    %3100 = vmatprep.subr.mxu0 0.0
    %3101 = vmatpush1.msra.mxu0 0.0
    %3102 = vmatprep.subr.mxu0 0.0
    %3103 = vmatpush1.msra.mxu0 0.0
    %3104 = vmatprep.subr.mxu0 0.0
    %3105 = vmatpush1.msra.mxu0 0.0
    %3106 = vmatprep.subr.mxu0 0.0
    %3107 = vmatpush1.msra.mxu0 0.0
    %3108 = vmatprep.subr.mxu0 0.0
    %3109 = vmatpush1.msra.mxu0 0.0
    %3110 = vmatprep.subr.mxu0 0.0
    %3111 = vmatpush1.msra.mxu0 0.0
    %3112 = vmatprep.subr.mxu0 0.0
    %3113 = vmatpush1.msra.mxu0 0.0
    %3114 = vmatprep.subr.mxu0 0.0
    %3115 = vmatpush1.msra.mxu0 0.0
    %3116 = vmatprep.subr.mxu0 0.0
    %3117 = vmatpush1.msra.mxu0 0.0
    %3118 = vmatprep.subr.mxu0 0.0
    %3119 = vmatpush1.msra.mxu0 0.0
    %3120 = vmatprep.subr.mxu0 0.0
    %3121 = vmatpush1.msra.mxu0 0.0
    %3122 = vmatprep.subr.mxu0 0.0
    %3123 = vmatpush1.msra.mxu0 0.0
    %3124 = vmatprep.subr.mxu0 0.0
    %3125 = vmatpush1.msra.mxu0 0.0
    %3126 = vmatprep.subr.mxu0 0.0
    %3127 = vmatpush1.msra.mxu0 0.0
    %3128 = vmatprep.subr.mxu0 0.0
    %3129 = vmatpush1.msra.mxu0 0.0
    %3130 = vmatprep.subr.mxu0 0.0
    %3131 = vmatpush1.msra.mxu0 0.0
    %3132 = vmatprep.subr.mxu0 0.0
    %3133 = vmatpush1.msra.mxu0 0.0
    %3134 = vmatprep.subr.mxu0 0.0
    %3135 = vmatpush1.msra.mxu0 0.0
    %3136 = vmatprep.subr.mxu0 0.0
    %3137 = vmatpush1.msra.mxu0 0.0
    %3138 = vmatprep.subr.mxu0 0.0
    %3139 = vmatpush1.msra.mxu0 0.0
    %3140 = vmatprep.subr.mxu0 0.0
    %3141 = vmatpush1.msra.mxu0 0.0
    %3142 = vmatprep.subr.mxu0 0.0
    %3143 = vmatpush1.msra.mxu0 0.0
    %3144 = vmatprep.subr.mxu0 0.0
    %3145 = vmatpush1.msra.mxu0 0.0
    %3146 = vmatprep.subr.mxu0 0.0
    %3147 = vmatpush1.msra.mxu0 0.0
    %3148 = vmatprep.subr.mxu0 0.0
    %3149 = vmatpush1.msra.mxu0 0.0
    %3150 = vmatprep.subr.mxu0 0.0
    %3151 = vmatpush1.msra.mxu0 0.0
    %3152 = vmatprep.subr.mxu0 0.0
    %3153 = vmatpush1.msra.mxu0 0.0
    %3154 = vmatprep.subr.mxu0 0.0
    %3155 = vmatpush1.msra.mxu0 0.0
    %3156 = vmatprep.subr.mxu0 0.0
    %3157 = vmatpush1.msra.mxu0 0.0
    %3158 = vmatprep.subr.mxu0 0.0
    %3159 = vmatpush1.msra.mxu0 0.0
    %3160 = vmatprep.mubr.f32.mxu0 0.0
    %3161 = vmatmul.mubr.f32.gmra.mrb[0].mxu0 %v3094
    %v3162 = vpop.f32.mrb[0].mxu0
    %v3163 = vadd.f32 0.0, %v3162
    %v3164 = vpop.f32.mrb[0].mxu0
    %3165 = vdwg.mxu0
    %3166 = vrot.lane.b32.xlu0 %v1921, 40
    %v3167 = vpop.permute.xlu0 %3166
    %v3170 = vsel %vm215, %v3089, 0
    %3172 = vmatprep.subr.mxu0 0.0
    %3173 = vmatpush1.msra.mxu0 %v3167
    %3174 = vmatprep.subr.mxu0 0.0
    %3175 = vmatpush1.msra.mxu0 0.0
    %3176 = vmatprep.subr.mxu0 0.0
    %3177 = vmatpush1.msra.mxu0 0.0
    %3178 = vmatprep.subr.mxu0 0.0
    %3179 = vmatpush1.msra.mxu0 0.0
    %3180 = vmatprep.subr.mxu0 0.0
    %3181 = vmatpush1.msra.mxu0 0.0
    %3182 = vmatprep.subr.mxu0 0.0
    %3183 = vmatpush1.msra.mxu0 0.0
    %3184 = vmatprep.subr.mxu0 0.0
    %3185 = vmatpush1.msra.mxu0 0.0
    %3186 = vmatprep.subr.mxu0 0.0
    %3187 = vmatpush1.msra.mxu0 0.0
    %3188 = vmatprep.subr.mxu0 0.0
    %3189 = vmatpush1.msra.mxu0 0.0
    %3190 = vmatprep.subr.mxu0 0.0
    %3191 = vmatpush1.msra.mxu0 0.0
    %3192 = vmatprep.subr.mxu0 0.0
    %3193 = vmatpush1.msra.mxu0 0.0
    %3194 = vmatprep.subr.mxu0 0.0
    %3195 = vmatpush1.msra.mxu0 0.0
    %3196 = vmatprep.subr.mxu0 0.0
    %3197 = vmatpush1.msra.mxu0 0.0
    %3198 = vmatprep.subr.mxu0 0.0
    %3199 = vmatpush1.msra.mxu0 0.0
    %3200 = vmatprep.subr.mxu0 0.0
    %3201 = vmatpush1.msra.mxu0 0.0
    %3202 = vmatprep.subr.mxu0 0.0
    %3203 = vmatpush1.msra.mxu0 0.0
    %3204 = vmatprep.subr.mxu0 0.0
    %3205 = vmatpush1.msra.mxu0 0.0
    %3206 = vmatprep.subr.mxu0 0.0
    %3207 = vmatpush1.msra.mxu0 0.0
    %3208 = vmatprep.subr.mxu0 0.0
    %3209 = vmatpush1.msra.mxu0 0.0
    %3210 = vmatprep.subr.mxu0 0.0
    %3211 = vmatpush1.msra.mxu0 0.0
    %3212 = vmatprep.subr.mxu0 0.0
    %3213 = vmatpush1.msra.mxu0 0.0
    %3214 = vmatprep.subr.mxu0 0.0
    %3215 = vmatpush1.msra.mxu0 0.0
    %3216 = vmatprep.subr.mxu0 0.0
    %3217 = vmatpush1.msra.mxu0 0.0
    %3218 = vmatprep.subr.mxu0 0.0
    %3219 = vmatpush1.msra.mxu0 0.0
    %3220 = vmatprep.subr.mxu0 0.0
    %3221 = vmatpush1.msra.mxu0 0.0
    %3222 = vmatprep.subr.mxu0 0.0
    %3223 = vmatpush1.msra.mxu0 0.0
    %3224 = vmatprep.subr.mxu0 0.0
    %3225 = vmatpush1.msra.mxu0 0.0
    %3226 = vmatprep.subr.mxu0 0.0
    %3227 = vmatpush1.msra.mxu0 0.0
    %3228 = vmatprep.subr.mxu0 0.0
    %3229 = vmatpush1.msra.mxu0 0.0
    %3230 = vmatprep.subr.mxu0 0.0
    %3231 = vmatpush1.msra.mxu0 0.0
    %3232 = vmatprep.subr.mxu0 0.0
    %3233 = vmatpush1.msra.mxu0 0.0
    %3234 = vmatprep.subr.mxu0 0.0
    %3235 = vmatpush1.msra.mxu0 0.0
    %3236 = vmatprep.mubr.f32.mxu0 0.0
    %3237 = vmatmul.mubr.f32.gmra.mrb[0].mxu0 %v3170
    %v3238 = vpop.f32.mrb[0].mxu0
    %v3239 = vadd.f32 0.0, %v3238
    %v3240 = vpop.f32.mrb[0].mxu0
    %3241 = vdwg.mxu0
    %3244 = vrot.lane.b32.xlu0 %v2503, 8
    %v3245 = vpop.permute.xlu0 %3244
    %3246 = vrot.lane.b32.xlu0 %v2579, 8
    %v3247 = vpop.permute.xlu0 %3246
    %3252 = vrot.lane.b32.xlu0 %v2833, 16
    %v3253 = vpop.permute.xlu0 %3252
    %3254 = vrot.lane.b32.xlu0 %v2909, 16
    %v3255 = vpop.permute.xlu0 %3254
    %3260 = vrot.lane.b32.xlu0 %v3163, 24
    %v3261 = vpop.permute.xlu0 %3260
    %3262 = vrot.lane.b32.xlu0 %v3239, 24
    %v3263 = vpop.permute.xlu0 %3262
    %v3266 = vsel %vm215, %v2173, %v3245
    %v3267 = vsel %vm215, %v2249, %v3247
    %v3268 = vsel %vm1557, %v3266, %v3253
    %v3269 = vsel %vm1557, %v3267, %v3255
    %v3270 = vsel %vm1560, %v3268, %v3261
    %v3271 = vsel %vm1560, %v3269, %v3263
    %v3272 = vpack.c.bf16 %v3271, %v3270
    %s3273 = scalar_lea.vmem %s4, 16
    %v3274 = vld [vmem:[%s3273] sm:$0xf]
    %v3275 = vld [vmem:[%s3273 + $0x4] sm:$0xf]
    %v3276 = vld [vmem:[%s3273 + $0x8] sm:$0xf]
    %v3277 = vld [vmem:[%s3273 + $0xc] sm:$0xf]
    %v3278 = vlaneseq
    %v3279 = vshrl.u32 %v3278, 7
    %v3280 = vsub.s32 1, %v3279
    %v3281 = vrot.slane %v35, %v3280
    %v3286 = vunpack.c.l.b16 %v3274
    %v3287 = vunpack.c.l.b16 %v3275
    %v3288 = vunpack.c.l.b16 %v3276
    %v3289 = vunpack.c.l.b16 %v3277
    %v3290 = vpack.c.b16 %v3287, %v3286
    %v3291 = vpack.c.b16 %v3289, %v3288
    %v3295 = vsel %vm167, %v3272, 0
    %3297 = vmatprep.subr.bf16.mxu0 0
    %3298 = vmatpush1.bf16.msra.mxu0 %v3290
    %3299 = vmatprep.subr.bf16.mxu0 0
    %3300 = vmatpush1.bf16.msra.mxu0 %v3291
    %3301 = vmatprep.subr.bf16.mxu0 0
    %3302 = vmatpush1.bf16.msra.mxu0 0
    %3303 = vmatprep.subr.bf16.mxu0 0
    %3304 = vmatpush1.bf16.msra.mxu0 0
    %3305 = vmatprep.subr.bf16.mxu0 0
    %3306 = vmatpush1.bf16.msra.mxu0 0
    %3307 = vmatprep.subr.bf16.mxu0 0
    %3308 = vmatpush1.bf16.msra.mxu0 0
    %3309 = vmatprep.subr.bf16.mxu0 0
    %3310 = vmatpush1.bf16.msra.mxu0 0
    %3311 = vmatprep.subr.bf16.mxu0 0
    %3312 = vmatpush1.bf16.msra.mxu0 0
    %3313 = vmatprep.subr.bf16.mxu0 0
    %3314 = vmatpush1.bf16.msra.mxu0 0
    %3315 = vmatprep.subr.bf16.mxu0 0
    %3316 = vmatpush1.bf16.msra.mxu0 0
    %3317 = vmatprep.subr.bf16.mxu0 0
    %3318 = vmatpush1.bf16.msra.mxu0 0
    %3319 = vmatprep.subr.bf16.mxu0 0
    %3320 = vmatpush1.bf16.msra.mxu0 0
    %3321 = vmatprep.subr.bf16.mxu0 0
    %3322 = vmatpush1.bf16.msra.mxu0 0
    %3323 = vmatprep.subr.bf16.mxu0 0
    %3324 = vmatpush1.bf16.msra.mxu0 0
    %3325 = vmatprep.subr.bf16.mxu0 0
    %3326 = vmatpush1.bf16.msra.mxu0 0
    %3327 = vmatprep.subr.bf16.mxu0 0
    %3328 = vmatpush1.bf16.msra.mxu0 0
    %3329 = vmatprep.mubr.bf16.mxu0 0
    %3330 = vmatmul.mubr.bf16.gmra.mrb[0].mxu0 %v3295
    %v3331 = vpop.f32.mrb[0].mxu0
    %v3332 = vadd.f32 %v3281, %v3331
    %v3333 = vpop.f32.mrb[0].mxu0
    %v3334 = vpop.f32.mrb[0].mxu0
    %v3335 = vadd.f32 %v3281, %v3334
    %v3336 = vpop.f32.mrb[0].mxu0
    %3337 = vdwg.mxu0
    %v3338 = vadd.f32 %v1856, %v3332
    %v3339 = vadd.f32 %v1857, %v3335
    %v3340 = vsel %vm167, %v3338, 0.0
    %3341 = vadd.xlane.f32.xlu0 %v3340
    %v3342 = vpop.xlane.xlu0 %3341
    %v3343 = vsel %vm167, %v3339, 0.0
    %3344 = vadd.xlane.f32.xlu0 %v3343
    %v3345 = vpop.xlane.xlu0 %3344
    %v3346 = vmul.f32 %v3342, %v1636
    %v3347 = vmul.f32 %v3345, %v1636
    %v3348 = vsub.f32 %v3338, %v3346
    %v3349 = vsub.f32 %v3339, %v3347
    %v3350 = vmul.f32 %v3348, %v3348
    %v3351 = vmul.f32 %v3349, %v3349
    %v3352 = vsel %vm167, %v3350, 0.0
    %3353 = vadd.xlane.f32.xlu0 %v3352
    %v3354 = vpop.xlane.xlu0 %3353
    %v3355 = vsel %vm167, %v3351, 0.0
    %3356 = vadd.xlane.f32.xlu0 %v3355
    %v3357 = vpop.xlane.xlu0 %3356
    %v3358 = vmul.f32 %v3354, %v1636
    %v3359 = vmul.f32 %v3357, %v1636
    %v3360 = vadd.f32 %v3358, 1e-05
    %v3361 = vadd.f32 %v3359, 1e-05
    %v3362 = vrsqrt.pop %v3360
    %v3363 = vrsqrt.pop %v3361
    %v3364 = vmul.f32 %v3348, %v3362
    %v3365 = vmul.f32 %v3349, %v3363
    %v3366 = vlaneseq
    %v3367 = vshrl.u32 %v3366, 7
    %v3368 = vsub.s32 2, %v3367
    %v3369 = vrot.slane %v35, %v3368
    %v3370 = vmul.f32 %v3364, %v3369
    %v3371 = vmul.f32 %v3365, %v3369
    %v3372 = vlaneseq
    %v3373 = vshrl.u32 %v3372, 7
    %v3374 = vsub.s32 3, %v3373
    %v3375 = vrot.slane %v35, %v3374
    %v3376 = vadd.f32 %v3370, %v3375
    %v3377 = vadd.f32 %v3371, %v3375
    %v3378 = vpack.c.bf16 %v3377, %v3376
    %s3379 = scalar_lea.vmem %s5, 16
    %v3380 = vld [vmem:[%s3379] sm:$0xf]
    %v3381 = vld [vmem:[%s3379 + $0x4] sm:$0xf]
    %v3382 = vld [vmem:[%s3379 + $0x8] sm:$0xf]
    %v3383 = vld [vmem:[%s3379 + $0xc] sm:$0xf]
    %v3384 = vlaneseq
    %v3385 = vshrl.u32 %v3384, 7
    %v3386 = vsub.s32 4, %v3385
    %v3387 = vrot.slane %v35, %v3386
    %v3392 = vunpack.c.l.b16 %v3380
    %v3393 = vunpack.c.l.b16 %v3381
    %v3394 = vunpack.c.l.b16 %v3382
    %v3395 = vunpack.c.l.b16 %v3383
    %v3396 = vpack.c.b16 %v3393, %v3392
    %v3397 = vpack.c.b16 %v3395, %v3394
    %v3401 = vsel %vm167, %v3378, 0
    %3403 = vmatprep.subr.bf16.mxu0 0
    %3404 = vmatpush1.bf16.msra.mxu0 %v3396
    %3405 = vmatprep.subr.bf16.mxu0 0
    %3406 = vmatpush1.bf16.msra.mxu0 %v3397
    %3407 = vmatprep.subr.bf16.mxu0 0
    %3408 = vmatpush1.bf16.msra.mxu0 0
    %3409 = vmatprep.subr.bf16.mxu0 0
    %3410 = vmatpush1.bf16.msra.mxu0 0
    %3411 = vmatprep.subr.bf16.mxu0 0
    %3412 = vmatpush1.bf16.msra.mxu0 0
    %3413 = vmatprep.subr.bf16.mxu0 0
    %3414 = vmatpush1.bf16.msra.mxu0 0
    %3415 = vmatprep.subr.bf16.mxu0 0
    %3416 = vmatpush1.bf16.msra.mxu0 0
    %3417 = vmatprep.subr.bf16.mxu0 0
    %3418 = vmatpush1.bf16.msra.mxu0 0
    %3419 = vmatprep.subr.bf16.mxu0 0
    %3420 = vmatpush1.bf16.msra.mxu0 0
    %3421 = vmatprep.subr.bf16.mxu0 0
    %3422 = vmatpush1.bf16.msra.mxu0 0
    %3423 = vmatprep.subr.bf16.mxu0 0
    %3424 = vmatpush1.bf16.msra.mxu0 0
    %3425 = vmatprep.subr.bf16.mxu0 0
    %3426 = vmatpush1.bf16.msra.mxu0 0
    %3427 = vmatprep.subr.bf16.mxu0 0
    %3428 = vmatpush1.bf16.msra.mxu0 0
    %3429 = vmatprep.subr.bf16.mxu0 0
    %3430 = vmatpush1.bf16.msra.mxu0 0
    %3431 = vmatprep.subr.bf16.mxu0 0
    %3432 = vmatpush1.bf16.msra.mxu0 0
    %3433 = vmatprep.subr.bf16.mxu0 0
    %3434 = vmatpush1.bf16.msra.mxu0 0
    %3435 = vmatprep.mubr.bf16.mxu0 0
    %3436 = vmatmul.mubr.bf16.gmra.mrb[0].mxu0 %v3401
    %v3437 = vpop.f32.mrb[0].mxu0
    %v3438 = vadd.f32 %v3387, %v3437
    %v3439 = vpop.f32.mrb[0].mxu0
    %v3440 = vpop.f32.mrb[0].mxu0
    %v3441 = vadd.f32 %v3387, %v3440
    %v3442 = vpop.f32.mrb[0].mxu0
    %3443 = vdwg.mxu0
    %v3444 = vmax.f32 %v3438, 0.0
    %v3445 = vmax.f32 %v3441, 0.0
    %v3446 = vpack.c.bf16 %v3445, %v3444
    %s3447 = scalar_lea.vmem %s6, 32
    %v3448 = vld [vmem:[%s3447] sm:$0xf]
    %v3449 = vld [vmem:[%s3447 + $0x4] sm:$0xf]
    %v3450 = vld [vmem:[%s3447 + $0x8] sm:$0xf]
    %v3451 = vld [vmem:[%s3447 + $0xc] sm:$0xf]
    %v3452 = vld [vmem:[%s3447 + $0x10] sm:$0xf]
    %v3453 = vld [vmem:[%s3447 + $0x14] sm:$0xf]
    %v3454 = vld [vmem:[%s3447 + $0x18] sm:$0xf]
    %v3455 = vld [vmem:[%s3447 + $0x1c] sm:$0xf]
    %v3456 = vlaneseq
    %v3457 = vshrl.u32 %v3456, 7
    %v3458 = vsub.s32 5, %v3457
    %v3459 = vrot.slane %v35, %v3458
    %v3468 = vunpack.c.l.b16 %v3448
    %v3469 = vunpack.c.l.b16 %v3449
    %v3470 = vunpack.c.l.b16 %v3450
    %v3471 = vunpack.c.l.b16 %v3451
    %v3472 = vunpack.c.l.b16 %v3452
    %v3473 = vunpack.c.l.b16 %v3453
    %v3474 = vunpack.c.l.b16 %v3454
    %v3475 = vunpack.c.l.b16 %v3455
    %v3476 = vpack.c.b16 %v3469, %v3468
    %v3477 = vpack.c.b16 %v3471, %v3470
    %v3478 = vpack.c.b16 %v3473, %v3472
    %v3479 = vpack.c.b16 %v3475, %v3474
    %v3485 = vsel %vm1773, %v3446, 0
    %3487 = vmatprep.subr.bf16.mxu0 0
    %3488 = vmatpush1.bf16.msra.mxu0 %v3476
    %3489 = vmatprep.subr.bf16.mxu0 0
    %3490 = vmatpush1.bf16.msra.mxu0 %v3477
    %3491 = vmatprep.subr.bf16.mxu0 0
    %3492 = vmatpush1.bf16.msra.mxu0 %v3478
    %3493 = vmatprep.subr.bf16.mxu0 0
    %3494 = vmatpush1.bf16.msra.mxu0 %v3479
    %3495 = vmatprep.subr.bf16.mxu0 0
    %3496 = vmatpush1.bf16.msra.mxu0 0
    %3497 = vmatprep.subr.bf16.mxu0 0
    %3498 = vmatpush1.bf16.msra.mxu0 0
    %3499 = vmatprep.subr.bf16.mxu0 0
    %3500 = vmatpush1.bf16.msra.mxu0 0
    %3501 = vmatprep.subr.bf16.mxu0 0
    %3502 = vmatpush1.bf16.msra.mxu0 0
    %3503 = vmatprep.subr.bf16.mxu0 0
    %3504 = vmatpush1.bf16.msra.mxu0 0
    %3505 = vmatprep.subr.bf16.mxu0 0
    %3506 = vmatpush1.bf16.msra.mxu0 0
    %3507 = vmatprep.subr.bf16.mxu0 0
    %3508 = vmatpush1.bf16.msra.mxu0 0
    %3509 = vmatprep.subr.bf16.mxu0 0
    %3510 = vmatpush1.bf16.msra.mxu0 0
    %3511 = vmatprep.subr.bf16.mxu0 0
    %3512 = vmatpush1.bf16.msra.mxu0 0
    %3513 = vmatprep.subr.bf16.mxu0 0
    %3514 = vmatpush1.bf16.msra.mxu0 0
    %3515 = vmatprep.subr.bf16.mxu0 0
    %3516 = vmatpush1.bf16.msra.mxu0 0
    %3517 = vmatprep.subr.bf16.mxu0 0
    %3518 = vmatpush1.bf16.msra.mxu0 0
    %3519 = vmatprep.mubr.bf16.mxu0 0
    %3520 = vmatmul.mubr.bf16.gmra.mrb[0].mxu0 %v3485
    %v3521 = vpop.f32.mrb[0].mxu0
    %v3522 = vadd.f32 %v3459, %v3521
    %v3523 = vpop.f32.mrb[0].mxu0
    %v3524 = vpop.f32.mrb[0].mxu0
    %v3525 = vadd.f32 %v3459, %v3524
    %v3526 = vpop.f32.mrb[0].mxu0
    %3527 = vdwg.mxu0
    %v3528 = vadd.f32 %v3376, %v3522
    %v3529 = vadd.f32 %v3377, %v3525
    %v3530 = vsel %vm167, %v3528, 0.0
    %3531 = vadd.xlane.f32.xlu0 %v3530
    %v3532 = vpop.xlane.xlu0 %3531
    %v3533 = vsel %vm167, %v3529, 0.0
    %3534 = vadd.xlane.f32.xlu0 %v3533
    %v3535 = vpop.xlane.xlu0 %3534
    %v3536 = vmul.f32 %v3532, %v1636
    %v3537 = vmul.f32 %v3535, %v1636
    %v3538 = vsub.f32 %v3528, %v3536
    %v3539 = vsub.f32 %v3529, %v3537
    %v3540 = vmul.f32 %v3538, %v3538
    %v3541 = vmul.f32 %v3539, %v3539
    %v3542 = vsel %vm167, %v3540, 0.0
    %3543 = vadd.xlane.f32.xlu0 %v3542
    %v3544 = vpop.xlane.xlu0 %3543
    %v3545 = vsel %vm167, %v3541, 0.0
    %3546 = vadd.xlane.f32.xlu0 %v3545
    %v3547 = vpop.xlane.xlu0 %3546
    %v3548 = vmul.f32 %v3544, %v1636
    %v3549 = vmul.f32 %v3547, %v1636
    %v3550 = vadd.f32 %v3548, 1e-05
    %v3551 = vadd.f32 %v3549, 1e-05
    %v3552 = vrsqrt.pop %v3550
    %v3553 = vrsqrt.pop %v3551
    %v3554 = vmul.f32 %v3538, %v3552
    %v3555 = vmul.f32 %v3539, %v3553
    %v3556 = vlaneseq
    %v3557 = vshrl.u32 %v3556, 7
    %v3558 = vsub.s32 6, %v3557
    %v3559 = vrot.slane %v35, %v3558
    %v3560 = vmul.f32 %v3554, %v3559
    %v3561 = vmul.f32 %v3555, %v3559
    %v3562 = vlaneseq
    %v3563 = vshrl.u32 %v3562, 7
    %v3564 = vsub.s32 7, %v3563
    %v3565 = vrot.slane %v35, %v3564
    %v3566 = vadd.f32 %v3560, %v3565
    %v3567 = vadd.f32 %v3561, %v3565
    %v3568 = vsel %vm167, %v3566, 0.0
    %v3569 = vrot.slane %v3568, 4
    %v3570 = vadd.f32 %v3568, %v3569
    %v3571 = vrot.slane %v3570, 2
    %v3572 = vadd.f32 %v3570, %v3571
    %v3573 = vrot.slane %v3572, 1
    %v3574 = vadd.f32 %v3572, %v3573
    %v3575 = vsel %vm167, %v3567, 0.0
    %v3576 = vrot.slane %v3575, 4
    %v3577 = vadd.f32 %v3575, %v3576
    %v3578 = vrot.slane %v3577, 2
    %v3579 = vadd.f32 %v3577, %v3578
    %v3580 = vrot.slane %v3579, 1
    %v3581 = vadd.f32 %v3579, %v3580
    %v3582 = vrcp.pop 8.0
    %v3583 = vmul.f32 %v3574, %v3582
    %v3584 = vmul.f32 %v3581, %v3582
    %v3585 = vpack.c.bf16 %v3583, %v3583
    %v3586 = vpack.c.bf16 %v3584, %v3584
    %v3587 = vld [vmem:[%s8] sm:$0xf]
    %v3588 = vld [vmem:[%s8 + $0x4] sm:$0xf]
    %v3589 = vld [vmem:[%s8 + $0x8] sm:$0xf]
    %v3590 = vld [vmem:[%s8 + $0xc] sm:$0xf]
    %v3591 = vlaneseq
    %v3592 = vshrl.u32 %v3591, 7
    %v3593 = vsub.s32 0, %v3592
    %v3594 = vrot.slane %v36, %v3593
    %v3597 = vunpack.c.l.b16 %v3585
    %v3598 = vunpack.c.l.b16 %v3586
    %vm3599 = vcmask 1041409
    %v3600 = vsel %vm3599, %v3598, %v3597
    %v3601 = vpack.c.b16 %v3600, %v3600
    %v3606 = vunpack.c.l.b16 %v3587
    %v3607 = vunpack.c.l.b16 %v3588
    %v3608 = vunpack.c.l.b16 %v3589
    %v3609 = vunpack.c.l.b16 %v3590
    %v3610 = vpack.c.b16 %v3607, %v3606
    %v3611 = vpack.c.b16 %v3609, %v3608
    %v3615 = vsel %vm167, %v3601, 0
    %3617 = vmatprep.subr.bf16.mxu0 0
    %3618 = vmatpush1.bf16.msra.mxu0 %v3610
    %3619 = vmatprep.subr.bf16.mxu0 0
    %3620 = vmatpush1.bf16.msra.mxu0 %v3611
    %3621 = vmatprep.subr.bf16.mxu0 0
    %3622 = vmatpush1.bf16.msra.mxu0 0
    %3623 = vmatprep.subr.bf16.mxu0 0
    %3624 = vmatpush1.bf16.msra.mxu0 0
    %3625 = vmatprep.subr.bf16.mxu0 0
    %3626 = vmatpush1.bf16.msra.mxu0 0
    %3627 = vmatprep.subr.bf16.mxu0 0
    %3628 = vmatpush1.bf16.msra.mxu0 0
    %3629 = vmatprep.subr.bf16.mxu0 0
    %3630 = vmatpush1.bf16.msra.mxu0 0
    %3631 = vmatprep.subr.bf16.mxu0 0
    %3632 = vmatpush1.bf16.msra.mxu0 0
    %3633 = vmatprep.subr.bf16.mxu0 0
    %3634 = vmatpush1.bf16.msra.mxu0 0
    %3635 = vmatprep.subr.bf16.mxu0 0
    %3636 = vmatpush1.bf16.msra.mxu0 0
    %3637 = vmatprep.subr.bf16.mxu0 0
    %3638 = vmatpush1.bf16.msra.mxu0 0
    %3639 = vmatprep.subr.bf16.mxu0 0
    %3640 = vmatpush1.bf16.msra.mxu0 0
    %3641 = vmatprep.subr.bf16.mxu0 0
    %3642 = vmatpush1.bf16.msra.mxu0 0
    %3643 = vmatprep.subr.bf16.mxu0 0
    %3644 = vmatpush1.bf16.msra.mxu0 0
    %3645 = vmatprep.subr.bf16.mxu0 0
    %3646 = vmatpush1.bf16.msra.mxu0 0
    %3647 = vmatprep.subr.bf16.mxu0 0
    %3648 = vmatpush1.bf16.msra.mxu0 0
    %3649 = vmatprep.mubr.bf16.mxu0 0
    %3650 = vmatmul.mubr.bf16.gmra.mrb[0].mxu0 %v3615
    %v3651 = vpop.f32.mrb[0].mxu0
    %v3652 = vadd.f32 %v3594, %v3651
    %v3653 = vpop.f32.mrb[0].mxu0
    %v3654 = vpop.f32.mrb[0].mxu0
    %v3655 = vpop.f32.mrb[0].mxu0
    %3656 = vdwg.mxu0
    %3657 = vst [vmem:[#allocation2] sm:$0x3] %v3652
    // Predicated region
    $region38: #{transformer_expert_forward.1} parent=1 // pred_check
      _
    $region39: #{transformer_expert_forward.1} parent=1 // pred_check_branch
      %3659 = sbr.rel (0) target = $region41
    $region40: #{transformer_expert_forward.1} parent=1 // pred_region
      %s3661 = ssub.s32 32, 32
      %3662 = vsyncadd [#allocation3], %s3661
      %s3664 = sshll.u32 [#allocation2], 4
      %s3665 = int_to_ptr.vmem [resolvable:$true] %s3664
      %3667 = dma.vmem_to_hbm [thread:$0]  %s3665, 32, %s9, [#allocation3]
    $region41: #{transformer_expert_forward.1} parent=1 // pred_fallthru
      _
    // Predicated region
    $region42: #{transformer_expert_forward.1} parent=1 // pred_check
      _
    $region43: #{transformer_expert_forward.1} parent=1 // pred_check_branch
      %3669 = sbr.rel (0) target = $region45
    $region44: #{transformer_expert_forward.1} parent=1 // pred_region
      %3670 = dma.done [#allocation3], 32
    $region45: #{transformer_expert_forward.1} parent=1 // pred_fallthru
      _
    %3671 = vsyncpa [#allocation3], 1

</llo_original>
